<compile_context>
chip_gen: v7x
topology: tpu7x:2x2x1
jax: 0.10.0
libtpu: 0.0.40
codegen_flags: <defaults>
</compile_context>

<pallas_src>
import math

import jax
import jax.numpy as jnp
from jax.experimental import pallas as pl
from jax.experimental.pallas import tpu as pltpu


def _round_up(n, m):
    return ((n + m - 1) // m) * m


def _vmem_cap_bytes():
    """Per-generation ceiling for vmem_limit_bytes (leave compiler headroom)."""
    kind = ""
    try:
        kind = jax.devices()[0].device_kind.lower()
    except Exception:
        pass
    if "v7" in kind:
        return 56 * 1024 * 1024       # v7x: 64 MiB/TC physical
    if "v5" in kind or "v6" in kind:
        return 100 * 1024 * 1024      # v5e/v6e: 128 MiB physical
    return 48 * 1024 * 1024           # unknown chip: conservative


def _ae_kernel(x_ref, y_ref, w1x_ref, w1y_ref, b1_ref, w2_ref, b2_ref, o_ref):
    # x, y : (TB, d)      w1x, w1y : (d, nb_pad)   b1 : (1, nb_pad)  (f32)
    # w2   : (nb_pad, d)  b2 : (1, d)  (f32)       o  : (TB, d)
    w_dt = w1x_ref.dtype
    # Cast activations to the weight dtype so bf16 weights use the native bf16
    # MXU path (f32 x bf16 would promote to the slow multi-pass f32 path).
    # No-op for f32 weights; accumulation stays f32 via preferred_element_type.
    xa = x_ref[...].astype(w_dt)
    ya = y_ref[...].astype(w_dt)
    # First layer: h = [x | y] @ W1 + b1, expressed without the concat.
    h = (jnp.dot(xa, w1x_ref[...], preferred_element_type=jnp.float32)
         + jnp.dot(ya, w1y_ref[...], preferred_element_type=jnp.float32)
         + b1_ref[...])
    # Precision choice: with bf16 weights the layer-1 output (incl. f32 bias
    # add) is truncated to bf16 before the second MXU pass; f32 weights keep f32.
    h = h.astype(w_dt)
    o = jnp.dot(h, w2_ref[...], preferred_element_type=jnp.float32) + b2_ref[...]
    o_ref[...] = o.astype(o_ref.dtype)


def prepare_params(w1, b1, w2, b2, *, weight_dtype=None):
    """One-time weight preparation (hoisted out of the forward pass).

    w1: (2d, nb), b1: (nb,), w2: (nb, d), b2: (d,) -- stored (in, out), i.e.
    the transpose of PyTorch's nn.Linear .weight.
    Splits W1 (so the (B, 2d) concat never materializes), zero-pads the
    bottleneck to a multiple of 128 lanes, and optionally casts the weights to
    a narrow storage dtype (e.g. jnp.bfloat16) to halve weight HBM traffic.
    """
    d = w2.shape[1]
    nb = w1.shape[1]
    assert w1.shape[0] == 2 * d and w2.shape[0] == nb
    assert b1.shape == (nb,) and b2.shape == (d,)

    nb_pad = _round_up(nb, 128)
    w1x, w1y = w1[:d], w1[d:]
    if nb_pad != nb:
        pad = nb_pad - nb
        w1x = jnp.pad(w1x, ((0, 0), (0, pad)))
        w1y = jnp.pad(w1y, ((0, 0), (0, pad)))
        b1 = jnp.pad(b1, (0, pad))
        w2 = jnp.pad(w2, ((0, pad), (0, 0)))   # zero rows -> output unchanged
    if weight_dtype is not None:
        w1x = w1x.astype(weight_dtype)
        w1y = w1y.astype(weight_dtype)
        w2 = w2.astype(weight_dtype)
    return {
        "w1x": w1x,
        "w1y": w1y,
        "b1": b1.reshape(1, nb_pad).astype(jnp.float32),
        "w2": w2,
        "b2": b2.reshape(1, d).astype(jnp.float32),
        "d": int(d),
        "nb_pad": int(nb_pad),
    }


def linear_ae_m_forward(x, y, params, *, block_b=512):
    """Fused  o = ([flat(x) | flat(y)] @ W1 + b1) @ W2 + b2  reshaped to x.shape.

    x, y: (B, ...) with prod(x.shape[1:]) == d.  Output dtype follows x.dtype,
    so passing bf16 activations gives bf16 I/O (the mem-bound fast path).
    `params` comes from `prepare_params`.
    """
    B = x.shape[0]
    d = params["d"]
    nb_pad = params["nb_pad"]
    assert y.shape[0] == B and x.shape[1:] == y.shape[1:]
    assert math.prod(x.shape[1:]) == d

    x_flat = x.reshape(B, d)
    y_flat = y.reshape(B, d)
    w1x, w1y, b1 = params["w1x"], params["w1y"], params["b1"]
    w2, b2 = params["w2"], params["b2"]

    # --- batch tiling (no wrapper-side padding; Pallas masks the ragged tile) ---
    sub = 8 if x_flat.dtype.itemsize >= 4 else 16     # sublane granularity
    if B > block_b:
        tb = block_b                                   # plenty of tiles
    else:
        # Small/medium batch: aim for >=2 tiles so v7x's second TensorCore gets
        # work; never below the sublane granularity.  If B can't be split, use
        # one full-extent block (no OOB reads at all).
        half = _round_up(pl.cdiv(B, 2), sub)
        tb = half if half < B else B
    grid_b = pl.cdiv(B, tb)

    act_isz = x_flat.dtype.itemsize
    w_isz = w2.dtype.itemsize
    # VMEM: x/y/o tiles double-buffered, weights/biases single-buffered
    # (Buffered(1)), plus the f32 h and o intermediates the compiler needs.
    vmem_est = (2 * 2 * tb * d * act_isz               # x, y tiles (2 buffers each)
                + 2 * tb * d * act_isz                 # o tile (2 buffers)
                + (2 * d * nb_pad + nb_pad * d) * w_isz
                + (nb_pad + d) * 4                     # biases (f32)
                + tb * nb_pad * 4                      # f32 h intermediate
                + tb * d * 4)                          # f32 o staging
    vmem_limit = int(min(_vmem_cap_bytes(),
                         max(32 * 1024 * 1024, int(1.25 * vmem_est))))

    flops = 6 * B * d * nb_pad                 # two (B,d)@(d,nb) + one (B,nb)@(nb,d)
    bytes_accessed = (3 * B * d * act_isz      # x, y in; o out
                      + (2 * d * nb_pad + nb_pad * d) * w_isz
                      + (nb_pad + d) * 4)

    # TODO(synk): when single-buffered weights (3*d*nb_pad*w_isz) exceed ~40 MiB
    # (v7x), add a second "arbitrary" grid axis over nb_pad chunks with an f32
    # VMEM accumulator for o (pl.when init on chunk 0, store on the last chunk),
    # keeping the B axis outermost and "parallel".

    def run(weight_pipeline_mode):
        def resident(shape):
            # Grid-constant blocks: single-buffer when supported.
            if weight_pipeline_mode is None:
                return pl.BlockSpec(shape, lambda i: (0, 0))
            return pl.BlockSpec(shape, lambda i: (0, 0),
                                pipeline_mode=weight_pipeline_mode)

        return pl.pallas_call(
            _ae_kernel,
            out_shape=jax.ShapeDtypeStruct((B, d), x.dtype),
            grid_spec=pltpu.PrefetchScalarGridSpec(
                num_scalar_prefetch=0,
                grid=(grid_b,),
                in_specs=[
                    pl.BlockSpec((tb, d), lambda i: (i, 0)),   # x tile
                    pl.BlockSpec((tb, d), lambda i: (i, 0)),   # y tile
                    resident((d, nb_pad)),                      # W1[:d]  (resident)
                    resident((d, nb_pad)),                      # W1[d:]  (resident)
                    resident((1, nb_pad)),                      # b1      (resident)
                    resident((nb_pad, d)),                      # W2      (resident)
                    resident((1, d)),                           # b2      (resident)
                ],
                out_specs=pl.BlockSpec((tb, d), lambda i: (i, 0)),  # lane-dense slab
            ),
            compiler_params=pltpu.CompilerParams(
                dimension_semantics=("parallel",),   # independent B-tiles (v7x 2 TCs)
                vmem_limit_bytes=vmem_limit,
            ),
            cost_estimate=pl.CostEstimate(
                flops=flops, transcendentals=0, bytes_accessed=bytes_accessed),
        )(x_flat, y_flat, w1x, w1y, b1, w2, b2)

    try:
        out = run(pl.Buffered(1))   # single-buffered grid-constant weights
    except Exception:
        out = run(None)             # fallback: Pallas without pipeline_mode support

    return out.reshape(x.shape)


def init_params(key, d, n_bottleneck, dtype=jnp.float32):
    """Deterministic init mimicking nn.Linear (uniform +/- 1/sqrt(fan_in)).

    Weights are stored transposed ((in, out)) relative to PyTorch so the kernel
    can use activations @ W directly.
    """
    k1, k2, k3, k4 = jax.random.split(key, 4)
    bound1 = 1.0 / jnp.sqrt(2.0 * d)
    bound2 = 1.0 / jnp.sqrt(float(n_bottleneck))
    w1 = jax.random.uniform(k1, (2 * d, n_bottleneck), dtype,
                            minval=-bound1, maxval=bound1)
    b1 = jax.random.uniform(k2, (n_bottleneck,), dtype,
                            minval=-bound1, maxval=bound1)
    w2 = jax.random.uniform(k3, (n_bottleneck, d), dtype,
                            minval=-bound2, maxval=bound2)
    b2 = jax.random.uniform(k4, (d,), dtype,
                            minval=-bound2, maxval=bound2)
    return w1, b1, w2, b2


if __name__ == "__main__":
    key = jax.random.PRNGKey(0)
    kx, ky, kp = jax.random.split(key, 3)

    # Small shapes: x is NCHW (2, 4, 16, 16) -> d = 4*16*16 = 1024
    B, C, H, W = 2, 4, 16, 16
    d = C * H * W
    n_bottleneck = 32

    x = jax.random.normal(kx, (B, C, H, W), jnp.float32)
    y = jax.random.normal(ky, (B, C, H, W), jnp.float32)
    w1, b1, w2, b2 = init_params(kp, d, n_bottleneck)

    params = prepare_params(w1, b1, w2, b2)       # one-time weight prep
    out = linear_ae_m_forward(x, y, params)
    out = jax.block_until_ready(out)

    # Pure-JAX reference check (same math, concat path, outside Pallas).
    z = jnp.concatenate([x.reshape(B, -1), y.reshape(B, -1)], axis=1)
    ref = ((z @ w1 + b1) @ w2 + b2).reshape(x.shape)
    assert out.shape == x.shape
    assert jnp.allclose(out, ref, atol=1e-4, rtol=1e-4)

    print("KERNEL_OK")
</pallas_src>

<mosaic_0001>
module attributes {stable_mosaic.version = 11 : i64} {
  func.func @_ae_kernel(%arg0: i32, %arg1: memref<2x1024xf32, #tpu.memory_space<vmem>>, %arg2: memref<2x1024xf32, #tpu.memory_space<vmem>>, %arg3: memref<1024x128xf32, #tpu.memory_space<vmem>>, %arg4: memref<1024x128xf32, #tpu.memory_space<vmem>>, %arg5: memref<1x128xf32, #tpu.memory_space<vmem>>, %arg6: memref<128x1024xf32, #tpu.memory_space<vmem>>, %arg7: memref<1x1024xf32, #tpu.memory_space<vmem>>, %arg8: memref<2x1024xf32, #tpu.memory_space<vmem>>) attributes {dimension_semantics = [#tpu.dimension_semantics<parallel>], iteration_bounds = array<i64: 1>, scalar_prefetch = 0 : i64, scratch_operands = 0 : i64, tpu.core_type = #tpu.core_type<tc>, window_params = [{transform_indices = @transform_0, window_bounds = array<i64: 2, 1024>}, {transform_indices = @transform_1, window_bounds = array<i64: 2, 1024>}, {pipeline_mode = #tpu.pipeline_mode<synchronous>, transform_indices = @transform_2, window_bounds = array<i64: 1024, 128>}, {pipeline_mode = #tpu.pipeline_mode<synchronous>, transform_indices = @transform_3, window_bounds = array<i64: 1024, 128>}, {pipeline_mode = #tpu.pipeline_mode<synchronous>, transform_indices = @transform_4, window_bounds = array<i64: 1, 128>}, {pipeline_mode = #tpu.pipeline_mode<synchronous>, transform_indices = @transform_5, window_bounds = array<i64: 128, 1024>}, {pipeline_mode = #tpu.pipeline_mode<synchronous>, transform_indices = @transform_6, window_bounds = array<i64: 1, 1024>}, {transform_indices = @transform_7, window_bounds = array<i64: 2, 1024>}]} {
    %c0 = arith.constant 0 : index
    %c0_0 = arith.constant 0 : index
    %0 = vector.load %arg1[%c0, %c0_0] : memref<2x1024xf32, #tpu.memory_space<vmem>>, vector<2x1024xf32>
    %c0_1 = arith.constant 0 : index
    %c0_2 = arith.constant 0 : index
    %1 = vector.load %arg2[%c0_1, %c0_2] : memref<2x1024xf32, #tpu.memory_space<vmem>>, vector<2x1024xf32>
    %c0_3 = arith.constant 0 : index
    %c0_4 = arith.constant 0 : index
    %2 = vector.load %arg3[%c0_3, %c0_4] : memref<1024x128xf32, #tpu.memory_space<vmem>>, vector<1024x128xf32>
    %cst = arith.constant dense<0.000000e+00> : vector<2x128xf32>
    %3 = tpu.matmul %0, %2, %cst {dimension_numbers = #tpu.dot_dimension_numbers<[1], [0], [0], [1], [0, 0, 1, 1], [], []>} : vector<2x1024xf32>, vector<1024x128xf32>, vector<2x128xf32> -> vector<2x128xf32>
    %c0_5 = arith.constant 0 : index
    %c0_6 = arith.constant 0 : index
    %4 = vector.load %arg4[%c0_5, %c0_6] : memref<1024x128xf32, #tpu.memory_space<vmem>>, vector<1024x128xf32>
    %cst_7 = arith.constant dense<0.000000e+00> : vector<2x128xf32>
    %5 = tpu.matmul %1, %4, %cst_7 {dimension_numbers = #tpu.dot_dimension_numbers<[1], [0], [0], [1], [0, 0, 1, 1], [], []>} : vector<2x1024xf32>, vector<1024x128xf32>, vector<2x128xf32> -> vector<2x128xf32>
    %6 = arith.addf %3, %5 : vector<2x128xf32>
    %c0_8 = arith.constant 0 : index
    %c0_9 = arith.constant 0 : index
    %7 = vector.load %arg5[%c0_8, %c0_9] : memref<1x128xf32, #tpu.memory_space<vmem>>, vector<1x128xf32>
    %8 = vector.broadcast %7 : vector<1x128xf32> to vector<2x128xf32>
    %9 = arith.addf %6, %8 : vector<2x128xf32>
    %c0_10 = arith.constant 0 : index
    %c0_11 = arith.constant 0 : index
    %10 = vector.load %arg6[%c0_10, %c0_11] : memref<128x1024xf32, #tpu.memory_space<vmem>>, vector<128x1024xf32>
    %cst_12 = arith.constant dense<0.000000e+00> : vector<2x1024xf32>
    %11 = tpu.matmul %9, %10, %cst_12 {dimension_numbers = #tpu.dot_dimension_numbers<[1], [0], [0], [1], [0, 0, 1, 1], [], []>} : vector<2x128xf32>, vector<128x1024xf32>, vector<2x1024xf32> -> vector<2x1024xf32>
    %c0_13 = arith.constant 0 : index
    %c0_14 = arith.constant 0 : index
    %12 = vector.load %arg7[%c0_13, %c0_14] : memref<1x1024xf32, #tpu.memory_space<vmem>>, vector<1x1024xf32>
    %13 = vector.broadcast %12 : vector<1x1024xf32> to vector<2x1024xf32>
    %14 = arith.addf %11, %13 : vector<2x1024xf32>
    %c0_15 = arith.constant 0 : index
    %c0_16 = arith.constant 0 : index
    %15 = vector.load %arg8[%c0_15, %c0_16] : memref<2x1024xf32, #tpu.memory_space<vmem>>, vector<2x1024xf32>
    tpu.vector_store %arg8[%c0_15, %c0_16], %14 {strides = array<i32>} : memref<2x1024xf32, #tpu.memory_space<vmem>>, vector<2x1024xf32>,
    return
  }
  func.func @transform_0(%arg0: i32) -> (i32, i32) {
    %c0_i32 = arith.constant 0 : i32
    %c0_i32_0 = arith.constant 0 : i32
    return %arg0, %c0_i32 : i32, i32
  }
  func.func @transform_1(%arg0: i32) -> (i32, i32) {
    %c0_i32 = arith.constant 0 : i32
    %c0_i32_0 = arith.constant 0 : i32
    return %arg0, %c0_i32 : i32, i32
  }
  func.func @transform_2(%arg0: i32) -> (i32, i32) {
    %c0_i32 = arith.constant 0 : i32
    %c0_i32_0 = arith.constant 0 : i32
    %c0_i32_1 = arith.constant 0 : i32
    return %c0_i32, %c0_i32_0 : i32, i32
  }
  func.func @transform_3(%arg0: i32) -> (i32, i32) {
    %c0_i32 = arith.constant 0 : i32
    %c0_i32_0 = arith.constant 0 : i32
    %c0_i32_1 = arith.constant 0 : i32
    return %c0_i32, %c0_i32_0 : i32, i32
  }
  func.func @transform_4(%arg0: i32) -> (i32, i32) {
    %c0_i32 = arith.constant 0 : i32
    %c0_i32_0 = arith.constant 0 : i32
    %c0_i32_1 = arith.constant 0 : i32
    return %c0_i32, %c0_i32_0 : i32, i32
  }
  func.func @transform_5(%arg0: i32) -> (i32, i32) {
    %c0_i32 = arith.constant 0 : i32
    %c0_i32_0 = arith.constant 0 : i32
    %c0_i32_1 = arith.constant 0 : i32
    return %c0_i32, %c0_i32_0 : i32, i32
  }
  func.func @transform_6(%arg0: i32) -> (i32, i32) {
    %c0_i32 = arith.constant 0 : i32
    %c0_i32_0 = arith.constant 0 : i32
    %c0_i32_1 = arith.constant 0 : i32
    return %c0_i32, %c0_i32_0 : i32, i32
  }
  func.func @transform_7(%arg0: i32) -> (i32, i32) {
    %c0_i32 = arith.constant 0 : i32
    %c0_i32_0 = arith.constant 0 : i32
    return %arg0, %c0_i32 : i32, i32
  }
}

module attributes {stable_mosaic.version = 11 : i64} {
  func.func @_ae_kernel(%arg0: i32, %arg1: memref<2x1024xf32, #tpu.memory_space<vmem>>, %arg2: memref<2x1024xf32, #tpu.memory_space<vmem>>, %arg3: memref<1024x128xf32, #tpu.memory_space<vmem>>, %arg4: memref<1024x128xf32, #tpu.memory_space<vmem>>, %arg5: memref<1x128xf32, #tpu.memory_space<vmem>>, %arg6: memref<128x1024xf32, #tpu.memory_space<vmem>>, %arg7: memref<1x1024xf32, #tpu.memory_space<vmem>>, %arg8: memref<2x1024xf32, #tpu.memory_space<vmem>>) attributes {dimension_semantics = [#tpu.dimension_semantics<parallel>], iteration_bounds = array<i64: 1>, scalar_prefetch = 0 : i64, scratch_operands = 0 : i64, tpu.core_type = #tpu.core_type<tc>, window_params = [{transform_indices = @transform_0, window_bounds = array<i64: 2, 1024>}, {transform_indices = @transform_1, window_bounds = array<i64: 2, 1024>}, {pipeline_mode = #tpu.pipeline_mode<synchronous>, transform_indices = @transform_2, window_bounds = array<i64: 1024, 128>}, {pipeline_mode = #tpu.pipeline_mode<synchronous>, transform_indices = @transform_3, window_bounds = array<i64: 1024, 128>}, {pipeline_mode = #tpu.pipeline_mode<synchronous>, transform_indices = @transform_4, window_bounds = array<i64: 1, 128>}, {pipeline_mode = #tpu.pipeline_mode<synchronous>, transform_indices = @transform_5, window_bounds = array<i64: 128, 1024>}, {pipeline_mode = #tpu.pipeline_mode<synchronous>, transform_indices = @transform_6, window_bounds = array<i64: 1, 1024>}, {transform_indices = @transform_7, window_bounds = array<i64: 2, 1024>}]} {
    %c0 = arith.constant 0 : index
    %c0_0 = arith.constant 0 : index
    %0 = vector.load %arg1[%c0, %c0_0] : memref<2x1024xf32, #tpu.memory_space<vmem>>, vector<2x1024xf32>
    %c0_1 = arith.constant 0 : index
    %c0_2 = arith.constant 0 : index
    %1 = vector.load %arg2[%c0_1, %c0_2] : memref<2x1024xf32, #tpu.memory_space<vmem>>, vector<2x1024xf32>
    %c0_3 = arith.constant 0 : index
    %c0_4 = arith.constant 0 : index
    %2 = vector.load %arg3[%c0_3, %c0_4] : memref<1024x128xf32, #tpu.memory_space<vmem>>, vector<1024x128xf32>
    %cst = arith.constant dense<0.000000e+00> : vector<2x128xf32>
    %3 = tpu.matmul %0, %2, %cst {dimension_numbers = #tpu.dot_dimension_numbers<[1], [0], [0], [1], [0, 0, 1, 1], [], []>} : vector<2x1024xf32>, vector<1024x128xf32>, vector<2x128xf32> -> vector<2x128xf32>
    %c0_5 = arith.constant 0 : index
    %c0_6 = arith.constant 0 : index
    %4 = vector.load %arg4[%c0_5, %c0_6] : memref<1024x128xf32, #tpu.memory_space<vmem>>, vector<1024x128xf32>
    %cst_7 = arith.constant dense<0.000000e+00> : vector<2x128xf32>
    %5 = tpu.matmul %1, %4, %cst_7 {dimension_numbers = #tpu.dot_dimension_numbers<[1], [0], [0], [1], [0, 0, 1, 1], [], []>} : vector<2x1024xf32>, vector<1024x128xf32>, vector<2x128xf32> -> vector<2x128xf32>
    %6 = arith.addf %3, %5 : vector<2x128xf32>
    %c0_8 = arith.constant 0 : index
    %c0_9 = arith.constant 0 : index
    %7 = vector.load %arg5[%c0_8, %c0_9] : memref<1x128xf32, #tpu.memory_space<vmem>>, vector<1x128xf32>
    %8 = vector.broadcast %7 : vector<1x128xf32> to vector<2x128xf32>
    %9 = arith.addf %6, %8 : vector<2x128xf32>
    %c0_10 = arith.constant 0 : index
    %c0_11 = arith.constant 0 : index
    %10 = vector.load %arg6[%c0_10, %c0_11] : memref<128x1024xf32, #tpu.memory_space<vmem>>, vector<128x1024xf32>
    %cst_12 = arith.constant dense<0.000000e+00> : vector<2x1024xf32>
    %11 = tpu.matmul %9, %10, %cst_12 {dimension_numbers = #tpu.dot_dimension_numbers<[1], [0], [0], [1], [0, 0, 1, 1], [], []>} : vector<2x128xf32>, vector<128x1024xf32>, vector<2x1024xf32> -> vector<2x1024xf32>
    %c0_13 = arith.constant 0 : index
    %c0_14 = arith.constant 0 : index
    %12 = vector.load %arg7[%c0_13, %c0_14] : memref<1x1024xf32, #tpu.memory_space<vmem>>, vector<1x1024xf32>
    %13 = vector.broadcast %12 : vector<1x1024xf32> to vector<2x1024xf32>
    %14 = arith.addf %11, %13 : vector<2x1024xf32>
    %c0_15 = arith.constant 0 : index
    %c0_16 = arith.constant 0 : index
    %15 = vector.load %arg8[%c0_15, %c0_16] : memref<2x1024xf32, #tpu.memory_space<vmem>>, vector<2x1024xf32>
    tpu.vector_store %arg8[%c0_15, %c0_16], %14 {strides = array<i32>} : memref<2x1024xf32, #tpu.memory_space<vmem>>, vector<2x1024xf32>,
    return
  }
  func.func @transform_0(%arg0: i32) -> (i32, i32) {
    %c0_i32 = arith.constant 0 : i32
    %c0_i32_0 = arith.constant 0 : i32
    return %arg0, %c0_i32 : i32, i32
  }
  func.func @transform_1(%arg0: i32) -> (i32, i32) {
    %c0_i32 = arith.constant 0 : i32
    %c0_i32_0 = arith.constant 0 : i32
    return %arg0, %c0_i32 : i32, i32
  }
  func.func @transform_2(%arg0: i32) -> (i32, i32) {
    %c0_i32 = arith.constant 0 : i32
    %c0_i32_0 = arith.constant 0 : i32
    %c0_i32_1 = arith.constant 0 : i32
    return %c0_i32, %c0_i32_0 : i32, i32
  }
  func.func @transform_3(%arg0: i32) -> (i32, i32) {
    %c0_i32 = arith.constant 0 : i32
    %c0_i32_0 = arith.constant 0 : i32
    %c0_i32_1 = arith.constant 0 : i32
    return %c0_i32, %c0_i32_0 : i32, i32
  }
  func.func @transform_4(%arg0: i32) -> (i32, i32) {
    %c0_i32 = arith.constant 0 : i32
    %c0_i32_0 = arith.constant 0 : i32
    %c0_i32_1 = arith.constant 0 : i32
    return %c0_i32, %c0_i32_0 : i32, i32
  }
  func.func @transform_5(%arg0: i32) -> (i32, i32) {
    %c0_i32 = arith.constant 0 : i32
    %c0_i32_0 = arith.constant 0 : i32
    %c0_i32_1 = arith.constant 0 : i32
    return %c0_i32, %c0_i32_0 : i32, i32
  }
  func.func @transform_6(%arg0: i32) -> (i32, i32) {
    %c0_i32 = arith.constant 0 : i32
    %c0_i32_0 = arith.constant 0 : i32
    %c0_i32_1 = arith.constant 0 : i32
    return %c0_i32, %c0_i32_0 : i32, i32
  }
  func.func @transform_7(%arg0: i32) -> (i32, i32) {
    %c0_i32 = arith.constant 0 : i32
    %c0_i32_0 = arith.constant 0 : i32
    return %arg0, %c0_i32 : i32, i32
  }
}

</mosaic_0001>

<llo_original>
// kernel: tpu_custom_call.1
$region0: #{tpu_custom_call.1}
  #allocation0 [shape = 'u32[]', space=smem, size = 0x4, offset = 0x4, fixed_abs, tag = 'smem constant byte address 0x4 - core index']
  #allocation1 [shape = 'u32[144,128]{1,0:T(1,128)}', space=vmem, size = 0x12000, scoped, tag = 'internal scratch']
  %s0 = inlined_call_operand.hbm [shape: f32[2,1024], index: 0, kind: input, shape index: {}]
  %s1 = inlined_call_operand.hbm [shape: f32[2,1024], index: 1, kind: input, shape index: {}]
  %s2 = inlined_call_operand.hbm [shape: f32[1024,128], index: 2, kind: input, shape index: {}]
  %s3 = inlined_call_operand.hbm [shape: f32[1024,128], index: 3, kind: input, shape index: {}]
  %s4 = inlined_call_operand.vmem [shape: f32[1,128], index: 4, kind: input, shape index: {}]
  %s5 = inlined_call_operand.hbm [shape: f32[128,1024], index: 5, kind: input, shape index: {}]
  %s6 = inlined_call_operand.vmem [shape: f32[1,1024], index: 6, kind: input, shape index: {}]
  %s7 = inlined_call_operand.hbm [shape: f32[2,1024], index: 7, kind: output, shape index: {}]
  %s8 = sld [smem:[#allocation0]]
  $region58: #{tpu_custom_call.1} parent=0
    _
  %s10 = ssub.s32 1, %s8
  %s11 = scalar_select 0, %s10, %s8
  $region1: #{tpu_custom_call.1} parent=0
    #allocation2 [shape = 'u8[8192]{0}', space=vmem, size = 0x2000, scoped, tag = 'input window, operand 0, single buffered']
    #allocation3 [shape = 's32[1]{0}', space=sflag, size = 0x4, scoped, tag = 'scoped memory for tpu_custom_call.1']
    #allocation4 [shape = 's32[1]{0}', space=sflag, size = 0x4, scoped, tag = 'scoped memory for tpu_custom_call.1']
    #allocation5 [shape = 'u8[8192]{0}', space=vmem, size = 0x2000, scoped, tag = 'input window, operand 1, single buffered']
    #allocation6 [shape = 's32[1]{0}', space=sflag, size = 0x4, scoped, tag = 'scoped memory for tpu_custom_call.1']
    #allocation7 [shape = 'u8[524288]{0}', space=vmem, size = 0x80000, scoped, tag = 'input window, operand 2, single buffered']
    #allocation8 [shape = 'u8[524288]{0}', space=vmem, size = 0x80000, scoped, tag = 'input window, operand 3, single buffered']
    #allocation9 [shape = 's32[1]{0}', space=sflag, size = 0x4, scoped, tag = 'scoped memory for tpu_custom_call.1']
    #allocation10 [shape = 'u8[524288]{0}', space=vmem, size = 0x80000, scoped, tag = 'input window, operand 5, single buffered']
    #allocation11 [shape = 'u8[8192]{0}', space=vmem, size = 0x2000, scoped, tag = 'output window, operand 0, single buffered']
    %12 = vsyncpa [#allocation3], 0
    %13 = vsyncpa [#allocation6], 0
    %14 = vsyncpa [#allocation9], 0
    %15 = vsyncpa [#allocation4], 0
    // Predicated region
    $region2: #{tpu_custom_call.1} parent=1 // pred_check
      _
    $region3: #{tpu_custom_call.1} parent=1 // pred_check_branch
      %17 = sbr.rel (0) target = $region5
    $region4: #{tpu_custom_call.1} parent=1 // pred_region
      %s19 = ssub.s32 256, 256
      %20 = vsyncadd [#allocation3], %s19
      %s22 = sshll.u32 [#allocation2], 4
      %s23 = int_to_ptr.vmem [resolvable:$true] %s22
      %25 = dma.hbm_to_vmem [thread:$0]  %s0, 256, %s23, [#allocation3]
    $region5: #{tpu_custom_call.1} parent=1 // pred_fallthru
      _
    // Predicated region
    $region6: #{tpu_custom_call.1} parent=1 // pred_check
      _
    $region7: #{tpu_custom_call.1} parent=1 // pred_check_branch
      %27 = sbr.rel (0) target = $region9
    $region8: #{tpu_custom_call.1} parent=1 // pred_region
      %s29 = ssub.s32 256, 256
      %30 = vsyncadd [#allocation6], %s29
      %s32 = sshll.u32 [#allocation5], 4
      %s33 = int_to_ptr.vmem [resolvable:$true] %s32
      %35 = dma.hbm_to_vmem [thread:$0]  %s1, 256, %s33, [#allocation6]
    $region9: #{tpu_custom_call.1} parent=1 // pred_fallthru
      _
    // Predicated region
    $region10: #{tpu_custom_call.1} parent=1 // pred_check
      _
    $region11: #{tpu_custom_call.1} parent=1 // pred_check_branch
      %37 = sbr.rel (0) target = $region13
    $region12: #{tpu_custom_call.1} parent=1 // pred_region
      %s39 = ssub.s32 16384, 16384
      %40 = vsyncadd [#allocation6], %s39
      %s41 = sshll.u32 [#allocation7], 4
      %s42 = int_to_ptr.vmem [resolvable:$true] %s41
      %47 = dma.hbm_to_vmem [thread:$0]  %s2, 16384, %s42, [#allocation6], 128, 128, 8
    $region13: #{tpu_custom_call.1} parent=1 // pred_fallthru
      _
    // Predicated region
    $region14: #{tpu_custom_call.1} parent=1 // pred_check
      _
    $region15: #{tpu_custom_call.1} parent=1 // pred_check_branch
      %49 = sbr.rel (0) target = $region17
    $region16: #{tpu_custom_call.1} parent=1 // pred_region
      %s51 = ssub.s32 16384, 16384
      %52 = vsyncadd [#allocation9], %s51
      %s53 = sshll.u32 [#allocation8], 4
      %s54 = int_to_ptr.vmem [resolvable:$true] %s53
      %59 = dma.hbm_to_vmem [thread:$0]  %s3, 16384, %s54, [#allocation9], 128, 128, 8
    $region17: #{tpu_custom_call.1} parent=1 // pred_fallthru
      _
    // Predicated region
    $region18: #{tpu_custom_call.1} parent=1 // pred_check
      _
    $region19: #{tpu_custom_call.1} parent=1 // pred_check_branch
      %61 = sbr.rel (0) target = $region21
    $region20: #{tpu_custom_call.1} parent=1 // pred_region
      _
    $region21: #{tpu_custom_call.1} parent=1 // pred_fallthru
      _
    // Predicated region
    $region22: #{tpu_custom_call.1} parent=1 // pred_check
      _
    $region23: #{tpu_custom_call.1} parent=1 // pred_check_branch
      %63 = sbr.rel (0) target = $region25
    $region24: #{tpu_custom_call.1} parent=1 // pred_region
      %s65 = ssub.s32 16384, 16384
      %66 = vsyncadd [#allocation9], %s65
      %s67 = sshll.u32 [#allocation10], 4
      %s68 = int_to_ptr.vmem [resolvable:$true] %s67
      %73 = dma.hbm_to_vmem [thread:$0]  %s5, 16384, %s68, [#allocation9], 1024, 1024, 64
    $region25: #{tpu_custom_call.1} parent=1 // pred_fallthru
      _
    // Predicated region
    $region26: #{tpu_custom_call.1} parent=1 // pred_check
      _
    $region27: #{tpu_custom_call.1} parent=1 // pred_check_branch
      %75 = sbr.rel (0) target = $region29
    $region28: #{tpu_custom_call.1} parent=1 // pred_region
      _
    $region29: #{tpu_custom_call.1} parent=1 // pred_fallthru
      _
    // Predicated region
    $region30: #{tpu_custom_call.1} parent=1 // pred_check
      _
    $region31: #{tpu_custom_call.1} parent=1 // pred_check_branch
      %77 = sbr.rel (0) target = $region33
    $region32: #{tpu_custom_call.1} parent=1 // pred_region
      %78 = dma.done [#allocation3], 256
    $region33: #{tpu_custom_call.1} parent=1 // pred_fallthru
      _
    // Predicated region
    $region34: #{tpu_custom_call.1} parent=1 // pred_check
      _
    $region35: #{tpu_custom_call.1} parent=1 // pred_check_branch
      %80 = sbr.rel (0) target = $region37
    $region36: #{tpu_custom_call.1} parent=1 // pred_region
      %81 = dma.done [#allocation6], 256
    $region37: #{tpu_custom_call.1} parent=1 // pred_fallthru
      _
    // Predicated region
    $region38: #{tpu_custom_call.1} parent=1 // pred_check
      _
    $region39: #{tpu_custom_call.1} parent=1 // pred_check_branch
      %83 = sbr.rel (0) target = $region41
    $region40: #{tpu_custom_call.1} parent=1 // pred_region
      %84 = dma.done [#allocation6], 16384
    $region41: #{tpu_custom_call.1} parent=1 // pred_fallthru
      _
    // Predicated region
    $region42: #{tpu_custom_call.1} parent=1 // pred_check
      _
    $region43: #{tpu_custom_call.1} parent=1 // pred_check_branch
      %86 = sbr.rel (0) target = $region45
    $region44: #{tpu_custom_call.1} parent=1 // pred_region
      %87 = dma.done [#allocation9], 16384
    $region45: #{tpu_custom_call.1} parent=1 // pred_fallthru
      _
    // Predicated region
    $region46: #{tpu_custom_call.1} parent=1 // pred_check
      _
    $region47: #{tpu_custom_call.1} parent=1 // pred_check_branch
      %89 = sbr.rel (0) target = $region49
    $region48: #{tpu_custom_call.1} parent=1 // pred_region
      %90 = dma.done [#allocation9], 16384
    $region49: #{tpu_custom_call.1} parent=1 // pred_fallthru
      _
    %v91 = vld [vmem:[#allocation2] sm:$0xff]
    %v92 = vld [vmem:[#allocation2 + $0x8] sm:$0xff]
    %v93 = vld [vmem:[#allocation5] sm:$0xff]
    %v94 = vld [vmem:[#allocation5 + $0x8] sm:$0xff]
    %v95 = vld [vmem:[#allocation7] sm:$0xff]
    %v96 = vld [vmem:[#allocation7 + $0x8] sm:$0xff]
    %v97 = vld [vmem:[#allocation7 + $0x10] sm:$0xff]
    %v98 = vld [vmem:[#allocation7 + $0x18] sm:$0xff]
    %v99 = vld [vmem:[#allocation7 + $0x20] sm:$0xff]
    %v100 = vld [vmem:[#allocation7 + $0x28] sm:$0xff]
    %v101 = vld [vmem:[#allocation7 + $0x30] sm:$0xff]
    %v102 = vld [vmem:[#allocation7 + $0x38] sm:$0xff]
    %v103 = vld [vmem:[#allocation7 + $0x40] sm:$0xff]
    %v104 = vld [vmem:[#allocation7 + $0x48] sm:$0xff]
    %v105 = vld [vmem:[#allocation7 + $0x50] sm:$0xff]
    %v106 = vld [vmem:[#allocation7 + $0x58] sm:$0xff]
    %v107 = vld [vmem:[#allocation7 + $0x60] sm:$0xff]
    %v108 = vld [vmem:[#allocation7 + $0x68] sm:$0xff]
    %v109 = vld [vmem:[#allocation7 + $0x70] sm:$0xff]
    %v110 = vld [vmem:[#allocation7 + $0x78] sm:$0xff]
    %v111 = vld [vmem:[#allocation7 + $0x80] sm:$0xff]
    %v112 = vld [vmem:[#allocation7 + $0x88] sm:$0xff]
    %v113 = vld [vmem:[#allocation7 + $0x90] sm:$0xff]
    %v114 = vld [vmem:[#allocation7 + $0x98] sm:$0xff]
    %v115 = vld [vmem:[#allocation7 + $0xa0] sm:$0xff]
    %v116 = vld [vmem:[#allocation7 + $0xa8] sm:$0xff]
    %v117 = vld [vmem:[#allocation7 + $0xb0] sm:$0xff]
    %v118 = vld [vmem:[#allocation7 + $0xb8] sm:$0xff]
    %v119 = vld [vmem:[#allocation7 + $0xc0] sm:$0xff]
    %v120 = vld [vmem:[#allocation7 + $0xc8] sm:$0xff]
    %v121 = vld [vmem:[#allocation7 + $0xd0] sm:$0xff]
    %v122 = vld [vmem:[#allocation7 + $0xd8] sm:$0xff]
    %v123 = vld [vmem:[#allocation7 + $0xe0] sm:$0xff]
    %v124 = vld [vmem:[#allocation7 + $0xe8] sm:$0xff]
    %v125 = vld [vmem:[#allocation7 + $0xf0] sm:$0xff]
    %v126 = vld [vmem:[#allocation7 + $0xf8] sm:$0xff]
    %v127 = vld [vmem:[#allocation7 + $0x100] sm:$0xff]
    %v128 = vld [vmem:[#allocation7 + $0x108] sm:$0xff]
    %v129 = vld [vmem:[#allocation7 + $0x110] sm:$0xff]
    %v130 = vld [vmem:[#allocation7 + $0x118] sm:$0xff]
    %v131 = vld [vmem:[#allocation7 + $0x120] sm:$0xff]
    %v132 = vld [vmem:[#allocation7 + $0x128] sm:$0xff]
    %v133 = vld [vmem:[#allocation7 + $0x130] sm:$0xff]
    %v134 = vld [vmem:[#allocation7 + $0x138] sm:$0xff]
    %v135 = vld [vmem:[#allocation7 + $0x140] sm:$0xff]
    %v136 = vld [vmem:[#allocation7 + $0x148] sm:$0xff]
    %v137 = vld [vmem:[#allocation7 + $0x150] sm:$0xff]
    %v138 = vld [vmem:[#allocation7 + $0x158] sm:$0xff]
    %v139 = vld [vmem:[#allocation7 + $0x160] sm:$0xff]
    %v140 = vld [vmem:[#allocation7 + $0x168] sm:$0xff]
    %v141 = vld [vmem:[#allocation7 + $0x170] sm:$0xff]
    %v142 = vld [vmem:[#allocation7 + $0x178] sm:$0xff]
    %v143 = vld [vmem:[#allocation7 + $0x180] sm:$0xff]
    %v144 = vld [vmem:[#allocation7 + $0x188] sm:$0xff]
    %v145 = vld [vmem:[#allocation7 + $0x190] sm:$0xff]
    %v146 = vld [vmem:[#allocation7 + $0x198] sm:$0xff]
    %v147 = vld [vmem:[#allocation7 + $0x1a0] sm:$0xff]
    %v148 = vld [vmem:[#allocation7 + $0x1a8] sm:$0xff]
    %v149 = vld [vmem:[#allocation7 + $0x1b0] sm:$0xff]
    %v150 = vld [vmem:[#allocation7 + $0x1b8] sm:$0xff]
    %v151 = vld [vmem:[#allocation7 + $0x1c0] sm:$0xff]
    %v152 = vld [vmem:[#allocation7 + $0x1c8] sm:$0xff]
    %v153 = vld [vmem:[#allocation7 + $0x1d0] sm:$0xff]
    %v154 = vld [vmem:[#allocation7 + $0x1d8] sm:$0xff]
    %v155 = vld [vmem:[#allocation7 + $0x1e0] sm:$0xff]
    %v156 = vld [vmem:[#allocation7 + $0x1e8] sm:$0xff]
    %v157 = vld [vmem:[#allocation7 + $0x1f0] sm:$0xff]
    %v158 = vld [vmem:[#allocation7 + $0x1f8] sm:$0xff]
    %v159 = vld [vmem:[#allocation7 + $0x200] sm:$0xff]
    %v160 = vld [vmem:[#allocation7 + $0x208] sm:$0xff]
    %v161 = vld [vmem:[#allocation7 + $0x210] sm:$0xff]
    %v162 = vld [vmem:[#allocation7 + $0x218] sm:$0xff]
    %v163 = vld [vmem:[#allocation7 + $0x220] sm:$0xff]
    %v164 = vld [vmem:[#allocation7 + $0x228] sm:$0xff]
    %v165 = vld [vmem:[#allocation7 + $0x230] sm:$0xff]
    %v166 = vld [vmem:[#allocation7 + $0x238] sm:$0xff]
    %v167 = vld [vmem:[#allocation7 + $0x240] sm:$0xff]
    %v168 = vld [vmem:[#allocation7 + $0x248] sm:$0xff]
    %v169 = vld [vmem:[#allocation7 + $0x250] sm:$0xff]
    %v170 = vld [vmem:[#allocation7 + $0x258] sm:$0xff]
    %v171 = vld [vmem:[#allocation7 + $0x260] sm:$0xff]
    %v172 = vld [vmem:[#allocation7 + $0x268] sm:$0xff]
    %v173 = vld [vmem:[#allocation7 + $0x270] sm:$0xff]
    %v174 = vld [vmem:[#allocation7 + $0x278] sm:$0xff]
    %v175 = vld [vmem:[#allocation7 + $0x280] sm:$0xff]
    %v176 = vld [vmem:[#allocation7 + $0x288] sm:$0xff]
    %v177 = vld [vmem:[#allocation7 + $0x290] sm:$0xff]
    %v178 = vld [vmem:[#allocation7 + $0x298] sm:$0xff]
    %v179 = vld [vmem:[#allocation7 + $0x2a0] sm:$0xff]
    %v180 = vld [vmem:[#allocation7 + $0x2a8] sm:$0xff]
    %v181 = vld [vmem:[#allocation7 + $0x2b0] sm:$0xff]
    %v182 = vld [vmem:[#allocation7 + $0x2b8] sm:$0xff]
    %v183 = vld [vmem:[#allocation7 + $0x2c0] sm:$0xff]
    %v184 = vld [vmem:[#allocation7 + $0x2c8] sm:$0xff]
    %v185 = vld [vmem:[#allocation7 + $0x2d0] sm:$0xff]
    %v186 = vld [vmem:[#allocation7 + $0x2d8] sm:$0xff]
    %v187 = vld [vmem:[#allocation7 + $0x2e0] sm:$0xff]
    %v188 = vld [vmem:[#allocation7 + $0x2e8] sm:$0xff]
    %v189 = vld [vmem:[#allocation7 + $0x2f0] sm:$0xff]
    %v190 = vld [vmem:[#allocation7 + $0x2f8] sm:$0xff]
    %v191 = vld [vmem:[#allocation7 + $0x300] sm:$0xff]
    %v192 = vld [vmem:[#allocation7 + $0x308] sm:$0xff]
    %v193 = vld [vmem:[#allocation7 + $0x310] sm:$0xff]
    %v194 = vld [vmem:[#allocation7 + $0x318] sm:$0xff]
    %v195 = vld [vmem:[#allocation7 + $0x320] sm:$0xff]
    %v196 = vld [vmem:[#allocation7 + $0x328] sm:$0xff]
    %v197 = vld [vmem:[#allocation7 + $0x330] sm:$0xff]
    %v198 = vld [vmem:[#allocation7 + $0x338] sm:$0xff]
    %v199 = vld [vmem:[#allocation7 + $0x340] sm:$0xff]
    %v200 = vld [vmem:[#allocation7 + $0x348] sm:$0xff]
    %v201 = vld [vmem:[#allocation7 + $0x350] sm:$0xff]
    %v202 = vld [vmem:[#allocation7 + $0x358] sm:$0xff]
    %v203 = vld [vmem:[#allocation7 + $0x360] sm:$0xff]
    %v204 = vld [vmem:[#allocation7 + $0x368] sm:$0xff]
    %v205 = vld [vmem:[#allocation7 + $0x370] sm:$0xff]
    %v206 = vld [vmem:[#allocation7 + $0x378] sm:$0xff]
    %v207 = vld [vmem:[#allocation7 + $0x380] sm:$0xff]
    %v208 = vld [vmem:[#allocation7 + $0x388] sm:$0xff]
    %v209 = vld [vmem:[#allocation7 + $0x390] sm:$0xff]
    %v210 = vld [vmem:[#allocation7 + $0x398] sm:$0xff]
    %v211 = vld [vmem:[#allocation7 + $0x3a0] sm:$0xff]
    %v212 = vld [vmem:[#allocation7 + $0x3a8] sm:$0xff]
    %v213 = vld [vmem:[#allocation7 + $0x3b0] sm:$0xff]
    %v214 = vld [vmem:[#allocation7 + $0x3b8] sm:$0xff]
    %v215 = vld [vmem:[#allocation7 + $0x3c0] sm:$0xff]
    %v216 = vld [vmem:[#allocation7 + $0x3c8] sm:$0xff]
    %v217 = vld [vmem:[#allocation7 + $0x3d0] sm:$0xff]
    %v218 = vld [vmem:[#allocation7 + $0x3d8] sm:$0xff]
    %v219 = vld [vmem:[#allocation7 + $0x3e0] sm:$0xff]
    %v220 = vld [vmem:[#allocation7 + $0x3e8] sm:$0xff]
    %v221 = vld [vmem:[#allocation7 + $0x3f0] sm:$0xff]
    %v222 = vld [vmem:[#allocation7 + $0x3f8] sm:$0xff]
    %v223 = vld [vmem:[#allocation8] sm:$0xff]
    %v224 = vld [vmem:[#allocation8 + $0x8] sm:$0xff]
    %v225 = vld [vmem:[#allocation8 + $0x10] sm:$0xff]
    %v226 = vld [vmem:[#allocation8 + $0x18] sm:$0xff]
    %v227 = vld [vmem:[#allocation8 + $0x20] sm:$0xff]
    %v228 = vld [vmem:[#allocation8 + $0x28] sm:$0xff]
    %v229 = vld [vmem:[#allocation8 + $0x30] sm:$0xff]
    %v230 = vld [vmem:[#allocation8 + $0x38] sm:$0xff]
    %v231 = vld [vmem:[#allocation8 + $0x40] sm:$0xff]
    %v232 = vld [vmem:[#allocation8 + $0x48] sm:$0xff]
    %v233 = vld [vmem:[#allocation8 + $0x50] sm:$0xff]
    %v234 = vld [vmem:[#allocation8 + $0x58] sm:$0xff]
    %v235 = vld [vmem:[#allocation8 + $0x60] sm:$0xff]
    %v236 = vld [vmem:[#allocation8 + $0x68] sm:$0xff]
    %v237 = vld [vmem:[#allocation8 + $0x70] sm:$0xff]
    %v238 = vld [vmem:[#allocation8 + $0x78] sm:$0xff]
    %v239 = vld [vmem:[#allocation8 + $0x80] sm:$0xff]
    %v240 = vld [vmem:[#allocation8 + $0x88] sm:$0xff]
    %v241 = vld [vmem:[#allocation8 + $0x90] sm:$0xff]
    %v242 = vld [vmem:[#allocation8 + $0x98] sm:$0xff]
    %v243 = vld [vmem:[#allocation8 + $0xa0] sm:$0xff]
    %v244 = vld [vmem:[#allocation8 + $0xa8] sm:$0xff]
    %v245 = vld [vmem:[#allocation8 + $0xb0] sm:$0xff]
    %v246 = vld [vmem:[#allocation8 + $0xb8] sm:$0xff]
    %v247 = vld [vmem:[#allocation8 + $0xc0] sm:$0xff]
    %v248 = vld [vmem:[#allocation8 + $0xc8] sm:$0xff]
    %v249 = vld [vmem:[#allocation8 + $0xd0] sm:$0xff]
    %v250 = vld [vmem:[#allocation8 + $0xd8] sm:$0xff]
    %v251 = vld [vmem:[#allocation8 + $0xe0] sm:$0xff]
    %v252 = vld [vmem:[#allocation8 + $0xe8] sm:$0xff]
    %v253 = vld [vmem:[#allocation8 + $0xf0] sm:$0xff]
    %v254 = vld [vmem:[#allocation8 + $0xf8] sm:$0xff]
    %v255 = vld [vmem:[#allocation8 + $0x100] sm:$0xff]
    %v256 = vld [vmem:[#allocation8 + $0x108] sm:$0xff]
    %v257 = vld [vmem:[#allocation8 + $0x110] sm:$0xff]
    %v258 = vld [vmem:[#allocation8 + $0x118] sm:$0xff]
    %v259 = vld [vmem:[#allocation8 + $0x120] sm:$0xff]
    %v260 = vld [vmem:[#allocation8 + $0x128] sm:$0xff]
    %v261 = vld [vmem:[#allocation8 + $0x130] sm:$0xff]
    %v262 = vld [vmem:[#allocation8 + $0x138] sm:$0xff]
    %v263 = vld [vmem:[#allocation8 + $0x140] sm:$0xff]
    %v264 = vld [vmem:[#allocation8 + $0x148] sm:$0xff]
    %v265 = vld [vmem:[#allocation8 + $0x150] sm:$0xff]
    %v266 = vld [vmem:[#allocation8 + $0x158] sm:$0xff]
    %v267 = vld [vmem:[#allocation8 + $0x160] sm:$0xff]
    %v268 = vld [vmem:[#allocation8 + $0x168] sm:$0xff]
    %v269 = vld [vmem:[#allocation8 + $0x170] sm:$0xff]
    %v270 = vld [vmem:[#allocation8 + $0x178] sm:$0xff]
    %v271 = vld [vmem:[#allocation8 + $0x180] sm:$0xff]
    %v272 = vld [vmem:[#allocation8 + $0x188] sm:$0xff]
    %v273 = vld [vmem:[#allocation8 + $0x190] sm:$0xff]
    %v274 = vld [vmem:[#allocation8 + $0x198] sm:$0xff]
    %v275 = vld [vmem:[#allocation8 + $0x1a0] sm:$0xff]
    %v276 = vld [vmem:[#allocation8 + $0x1a8] sm:$0xff]
    %v277 = vld [vmem:[#allocation8 + $0x1b0] sm:$0xff]
    %v278 = vld [vmem:[#allocation8 + $0x1b8] sm:$0xff]
    %v279 = vld [vmem:[#allocation8 + $0x1c0] sm:$0xff]
    %v280 = vld [vmem:[#allocation8 + $0x1c8] sm:$0xff]
    %v281 = vld [vmem:[#allocation8 + $0x1d0] sm:$0xff]
    %v282 = vld [vmem:[#allocation8 + $0x1d8] sm:$0xff]
    %v283 = vld [vmem:[#allocation8 + $0x1e0] sm:$0xff]
    %v284 = vld [vmem:[#allocation8 + $0x1e8] sm:$0xff]
    %v285 = vld [vmem:[#allocation8 + $0x1f0] sm:$0xff]
    %v286 = vld [vmem:[#allocation8 + $0x1f8] sm:$0xff]
    %v287 = vld [vmem:[#allocation8 + $0x200] sm:$0xff]
    %v288 = vld [vmem:[#allocation8 + $0x208] sm:$0xff]
    %v289 = vld [vmem:[#allocation8 + $0x210] sm:$0xff]
    %v290 = vld [vmem:[#allocation8 + $0x218] sm:$0xff]
    %v291 = vld [vmem:[#allocation8 + $0x220] sm:$0xff]
    %v292 = vld [vmem:[#allocation8 + $0x228] sm:$0xff]
    %v293 = vld [vmem:[#allocation8 + $0x230] sm:$0xff]
    %v294 = vld [vmem:[#allocation8 + $0x238] sm:$0xff]
    %v295 = vld [vmem:[#allocation8 + $0x240] sm:$0xff]
    %v296 = vld [vmem:[#allocation8 + $0x248] sm:$0xff]
    %v297 = vld [vmem:[#allocation8 + $0x250] sm:$0xff]
    %v298 = vld [vmem:[#allocation8 + $0x258] sm:$0xff]
    %v299 = vld [vmem:[#allocation8 + $0x260] sm:$0xff]
    %v300 = vld [vmem:[#allocation8 + $0x268] sm:$0xff]
    %v301 = vld [vmem:[#allocation8 + $0x270] sm:$0xff]
    %v302 = vld [vmem:[#allocation8 + $0x278] sm:$0xff]
    %v303 = vld [vmem:[#allocation8 + $0x280] sm:$0xff]
    %v304 = vld [vmem:[#allocation8 + $0x288] sm:$0xff]
    %v305 = vld [vmem:[#allocation8 + $0x290] sm:$0xff]
    %v306 = vld [vmem:[#allocation8 + $0x298] sm:$0xff]
    %v307 = vld [vmem:[#allocation8 + $0x2a0] sm:$0xff]
    %v308 = vld [vmem:[#allocation8 + $0x2a8] sm:$0xff]
    %v309 = vld [vmem:[#allocation8 + $0x2b0] sm:$0xff]
    %v310 = vld [vmem:[#allocation8 + $0x2b8] sm:$0xff]
    %v311 = vld [vmem:[#allocation8 + $0x2c0] sm:$0xff]
    %v312 = vld [vmem:[#allocation8 + $0x2c8] sm:$0xff]
    %v313 = vld [vmem:[#allocation8 + $0x2d0] sm:$0xff]
    %v314 = vld [vmem:[#allocation8 + $0x2d8] sm:$0xff]
    %v315 = vld [vmem:[#allocation8 + $0x2e0] sm:$0xff]
    %v316 = vld [vmem:[#allocation8 + $0x2e8] sm:$0xff]
    %v317 = vld [vmem:[#allocation8 + $0x2f0] sm:$0xff]
    %v318 = vld [vmem:[#allocation8 + $0x2f8] sm:$0xff]
    %v319 = vld [vmem:[#allocation8 + $0x300] sm:$0xff]
    %v320 = vld [vmem:[#allocation8 + $0x308] sm:$0xff]
    %v321 = vld [vmem:[#allocation8 + $0x310] sm:$0xff]
    %v322 = vld [vmem:[#allocation8 + $0x318] sm:$0xff]
    %v323 = vld [vmem:[#allocation8 + $0x320] sm:$0xff]
    %v324 = vld [vmem:[#allocation8 + $0x328] sm:$0xff]
    %v325 = vld [vmem:[#allocation8 + $0x330] sm:$0xff]
    %v326 = vld [vmem:[#allocation8 + $0x338] sm:$0xff]
    %v327 = vld [vmem:[#allocation8 + $0x340] sm:$0xff]
    %v328 = vld [vmem:[#allocation8 + $0x348] sm:$0xff]
    %v329 = vld [vmem:[#allocation8 + $0x350] sm:$0xff]
    %v330 = vld [vmem:[#allocation8 + $0x358] sm:$0xff]
    %v331 = vld [vmem:[#allocation8 + $0x360] sm:$0xff]
    %v332 = vld [vmem:[#allocation8 + $0x368] sm:$0xff]
    %v333 = vld [vmem:[#allocation8 + $0x370] sm:$0xff]
    %v334 = vld [vmem:[#allocation8 + $0x378] sm:$0xff]
    %v335 = vld [vmem:[#allocation8 + $0x380] sm:$0xff]
    %v336 = vld [vmem:[#allocation8 + $0x388] sm:$0xff]
    %v337 = vld [vmem:[#allocation8 + $0x390] sm:$0xff]
    %v338 = vld [vmem:[#allocation8 + $0x398] sm:$0xff]
    %v339 = vld [vmem:[#allocation8 + $0x3a0] sm:$0xff]
    %v340 = vld [vmem:[#allocation8 + $0x3a8] sm:$0xff]
    %v341 = vld [vmem:[#allocation8 + $0x3b0] sm:$0xff]
    %v342 = vld [vmem:[#allocation8 + $0x3b8] sm:$0xff]
    %v343 = vld [vmem:[#allocation8 + $0x3c0] sm:$0xff]
    %v344 = vld [vmem:[#allocation8 + $0x3c8] sm:$0xff]
    %v345 = vld [vmem:[#allocation8 + $0x3d0] sm:$0xff]
    %v346 = vld [vmem:[#allocation8 + $0x3d8] sm:$0xff]
    %v347 = vld [vmem:[#allocation8 + $0x3e0] sm:$0xff]
    %v348 = vld [vmem:[#allocation8 + $0x3e8] sm:$0xff]
    %v349 = vld [vmem:[#allocation8 + $0x3f0] sm:$0xff]
    %v350 = vld [vmem:[#allocation8 + $0x3f8] sm:$0xff]
    %v353 = vcombine.high %v93, %v93
    %v355 = vunpack.c.l.s4 1983009808
    %v356 = vunpack.c.0.s8 %v355
    %v357 = vlaneseq
    %v358 = vshrl.u32 %v357, 7
    %v359 = vsub.s32 %v356, %v358
    %v360 = vrot.slane %v93, %v359
    %v362 = vunpack.c.l.s4 1983009808
    %v363 = vunpack.c.0.s8 %v362
    %v364 = vlaneseq
    %v365 = vshrl.u32 %v364, 7
    %v366 = vsub.s32 %v363, %v365
    %v367 = vrot.slane %v353, %v366
    %v368 = vcombine.high %v360, %v360
    %v369 = vcombine.high %v367, %v367
    %v370 = vcombine.high %v94, %v94
    %v372 = vunpack.c.l.s4 1983009808
    %v373 = vunpack.c.0.s8 %v372
    %v374 = vlaneseq
    %v375 = vshrl.u32 %v374, 7
    %v376 = vsub.s32 %v373, %v375
    %v377 = vrot.slane %v94, %v376
    %v379 = vunpack.c.l.s4 1983009808
    %v380 = vunpack.c.0.s8 %v379
    %v381 = vlaneseq
    %v382 = vshrl.u32 %v381, 7
    %v383 = vsub.s32 %v380, %v382
    %v384 = vrot.slane %v370, %v383
    %v385 = vcombine.high %v377, %v377
    %v386 = vcombine.high %v384, %v384
    %395 = vmatprep.subr.mxu0 0.0
    %396 = vmatpush1.msra.mxu0 %v223
    %397 = vmatprep.subr.mxu0 0.0
    %398 = vmatpush1.msra.mxu0 %v224
    %399 = vmatprep.subr.mxu0 0.0
    %400 = vmatpush1.msra.mxu0 %v225
    %401 = vmatprep.subr.mxu0 0.0
    %402 = vmatpush1.msra.mxu0 %v226
    %403 = vmatprep.subr.mxu0 0.0
    %404 = vmatpush1.msra.mxu0 %v227
    %405 = vmatprep.subr.mxu0 0.0
    %406 = vmatpush1.msra.mxu0 %v228
    %407 = vmatprep.subr.mxu0 0.0
    %408 = vmatpush1.msra.mxu0 %v229
    %409 = vmatprep.subr.mxu0 0.0
    %410 = vmatpush1.msra.mxu0 %v230
    %411 = vmatprep.subr.mxu0 0.0
    %412 = vmatpush1.msra.mxu0 %v231
    %413 = vmatprep.subr.mxu0 0.0
    %414 = vmatpush1.msra.mxu0 %v232
    %415 = vmatprep.subr.mxu0 0.0
    %416 = vmatpush1.msra.mxu0 %v233
    %417 = vmatprep.subr.mxu0 0.0
    %418 = vmatpush1.msra.mxu0 %v234
    %419 = vmatprep.subr.mxu0 0.0
    %420 = vmatpush1.msra.mxu0 %v235
    %421 = vmatprep.subr.mxu0 0.0
    %422 = vmatpush1.msra.mxu0 %v236
    %423 = vmatprep.subr.mxu0 0.0
    %424 = vmatpush1.msra.mxu0 %v237
    %425 = vmatprep.subr.mxu0 0.0
    %426 = vmatpush1.msra.mxu0 %v238
    %427 = vmatprep.subr.mxu0 0.0
    %428 = vmatpush1.msra.mxu0 %v239
    %429 = vmatprep.subr.mxu0 0.0
    %430 = vmatpush1.msra.mxu0 %v240
    %431 = vmatprep.subr.mxu0 0.0
    %432 = vmatpush1.msra.mxu0 %v241
    %433 = vmatprep.subr.mxu0 0.0
    %434 = vmatpush1.msra.mxu0 %v242
    %435 = vmatprep.subr.mxu0 0.0
    %436 = vmatpush1.msra.mxu0 %v243
    %437 = vmatprep.subr.mxu0 0.0
    %438 = vmatpush1.msra.mxu0 %v244
    %439 = vmatprep.subr.mxu0 0.0
    %440 = vmatpush1.msra.mxu0 %v245
    %441 = vmatprep.subr.mxu0 0.0
    %442 = vmatpush1.msra.mxu0 %v246
    %443 = vmatprep.subr.mxu0 0.0
    %444 = vmatpush1.msra.mxu0 %v247
    %445 = vmatprep.subr.mxu0 0.0
    %446 = vmatpush1.msra.mxu0 %v248
    %447 = vmatprep.subr.mxu0 0.0
    %448 = vmatpush1.msra.mxu0 %v249
    %449 = vmatprep.subr.mxu0 0.0
    %450 = vmatpush1.msra.mxu0 %v250
    %451 = vmatprep.subr.mxu0 0.0
    %452 = vmatpush1.msra.mxu0 %v251
    %453 = vmatprep.subr.mxu0 0.0
    %454 = vmatpush1.msra.mxu0 %v252
    %455 = vmatprep.subr.mxu0 0.0
    %456 = vmatpush1.msra.mxu0 %v253
    %457 = vmatprep.subr.mxu0 0.0
    %458 = vmatpush1.msra.mxu0 %v254
    %459 = vmatprep.mubr.f32.mxu0 %v368
    %460 = vmatmul.mubr.f32.gmra.mrb[0].mxu0 %v360
    %v461 = vpop.f32.mrb[0].mxu0
    %v462 = vadd.f32 0.0, %v461
    %v463 = vpop.f32.mrb[0].mxu0
    %464 = vdwg.mxu0
    %465 = vmatprep.subr.mxu0 0.0
    %466 = vmatpush1.msra.mxu0 %v255
    %467 = vmatprep.subr.mxu0 0.0
    %468 = vmatpush1.msra.mxu0 %v256
    %469 = vmatprep.subr.mxu0 0.0
    %470 = vmatpush1.msra.mxu0 %v257
    %471 = vmatprep.subr.mxu0 0.0
    %472 = vmatpush1.msra.mxu0 %v258
    %473 = vmatprep.subr.mxu0 0.0
    %474 = vmatpush1.msra.mxu0 %v259
    %475 = vmatprep.subr.mxu0 0.0
    %476 = vmatpush1.msra.mxu0 %v260
    %477 = vmatprep.subr.mxu0 0.0
    %478 = vmatpush1.msra.mxu0 %v261
    %479 = vmatprep.subr.mxu0 0.0
    %480 = vmatpush1.msra.mxu0 %v262
    %481 = vmatprep.subr.mxu0 0.0
    %482 = vmatpush1.msra.mxu0 %v263
    %483 = vmatprep.subr.mxu0 0.0
    %484 = vmatpush1.msra.mxu0 %v264
    %485 = vmatprep.subr.mxu0 0.0
    %486 = vmatpush1.msra.mxu0 %v265
    %487 = vmatprep.subr.mxu0 0.0
    %488 = vmatpush1.msra.mxu0 %v266
    %489 = vmatprep.subr.mxu0 0.0
    %490 = vmatpush1.msra.mxu0 %v267
    %491 = vmatprep.subr.mxu0 0.0
    %492 = vmatpush1.msra.mxu0 %v268
    %493 = vmatprep.subr.mxu0 0.0
    %494 = vmatpush1.msra.mxu0 %v269
    %495 = vmatprep.subr.mxu0 0.0
    %496 = vmatpush1.msra.mxu0 %v270
    %497 = vmatprep.subr.mxu0 0.0
    %498 = vmatpush1.msra.mxu0 %v271
    %499 = vmatprep.subr.mxu0 0.0
    %500 = vmatpush1.msra.mxu0 %v272
    %501 = vmatprep.subr.mxu0 0.0
    %502 = vmatpush1.msra.mxu0 %v273
    %503 = vmatprep.subr.mxu0 0.0
    %504 = vmatpush1.msra.mxu0 %v274
    %505 = vmatprep.subr.mxu0 0.0
    %506 = vmatpush1.msra.mxu0 %v275
    %507 = vmatprep.subr.mxu0 0.0
    %508 = vmatpush1.msra.mxu0 %v276
    %509 = vmatprep.subr.mxu0 0.0
    %510 = vmatpush1.msra.mxu0 %v277
    %511 = vmatprep.subr.mxu0 0.0
    %512 = vmatpush1.msra.mxu0 %v278
    %513 = vmatprep.subr.mxu0 0.0
    %514 = vmatpush1.msra.mxu0 %v279
    %515 = vmatprep.subr.mxu0 0.0
    %516 = vmatpush1.msra.mxu0 %v280
    %517 = vmatprep.subr.mxu0 0.0
    %518 = vmatpush1.msra.mxu0 %v281
    %519 = vmatprep.subr.mxu0 0.0
    %520 = vmatpush1.msra.mxu0 %v282
    %521 = vmatprep.subr.mxu0 0.0
    %522 = vmatpush1.msra.mxu0 %v283
    %523 = vmatprep.subr.mxu0 0.0
    %524 = vmatpush1.msra.mxu0 %v284
    %525 = vmatprep.subr.mxu0 0.0
    %526 = vmatpush1.msra.mxu0 %v285
    %527 = vmatprep.subr.mxu0 0.0
    %528 = vmatpush1.msra.mxu0 %v286
    %529 = vmatprep.mubr.f32.mxu0 %v369
    %530 = vmatmul.mubr.f32.gmra.mrb[0].mxu0 %v367
    %v531 = vpop.f32.mrb[0].mxu0
    %v532 = vadd.f32 %v462, %v531
    %v533 = vpop.f32.mrb[0].mxu0
    %534 = vdwg.mxu0
    %535 = vmatprep.subr.mxu0 0.0
    %536 = vmatpush1.msra.mxu0 %v287
    %537 = vmatprep.subr.mxu0 0.0
    %538 = vmatpush1.msra.mxu0 %v288
    %539 = vmatprep.subr.mxu0 0.0
    %540 = vmatpush1.msra.mxu0 %v289
    %541 = vmatprep.subr.mxu0 0.0
    %542 = vmatpush1.msra.mxu0 %v290
    %543 = vmatprep.subr.mxu0 0.0
    %544 = vmatpush1.msra.mxu0 %v291
    %545 = vmatprep.subr.mxu0 0.0
    %546 = vmatpush1.msra.mxu0 %v292
    %547 = vmatprep.subr.mxu0 0.0
    %548 = vmatpush1.msra.mxu0 %v293
    %549 = vmatprep.subr.mxu0 0.0
    %550 = vmatpush1.msra.mxu0 %v294
    %551 = vmatprep.subr.mxu0 0.0
    %552 = vmatpush1.msra.mxu0 %v295
    %553 = vmatprep.subr.mxu0 0.0
    %554 = vmatpush1.msra.mxu0 %v296
    %555 = vmatprep.subr.mxu0 0.0
    %556 = vmatpush1.msra.mxu0 %v297
    %557 = vmatprep.subr.mxu0 0.0
    %558 = vmatpush1.msra.mxu0 %v298
    %559 = vmatprep.subr.mxu0 0.0
    %560 = vmatpush1.msra.mxu0 %v299
    %561 = vmatprep.subr.mxu0 0.0
    %562 = vmatpush1.msra.mxu0 %v300
    %563 = vmatprep.subr.mxu0 0.0
    %564 = vmatpush1.msra.mxu0 %v301
    %565 = vmatprep.subr.mxu0 0.0
    %566 = vmatpush1.msra.mxu0 %v302
    %567 = vmatprep.subr.mxu0 0.0
    %568 = vmatpush1.msra.mxu0 %v303
    %569 = vmatprep.subr.mxu0 0.0
    %570 = vmatpush1.msra.mxu0 %v304
    %571 = vmatprep.subr.mxu0 0.0
    %572 = vmatpush1.msra.mxu0 %v305
    %573 = vmatprep.subr.mxu0 0.0
    %574 = vmatpush1.msra.mxu0 %v306
    %575 = vmatprep.subr.mxu0 0.0
    %576 = vmatpush1.msra.mxu0 %v307
    %577 = vmatprep.subr.mxu0 0.0
    %578 = vmatpush1.msra.mxu0 %v308
    %579 = vmatprep.subr.mxu0 0.0
    %580 = vmatpush1.msra.mxu0 %v309
    %581 = vmatprep.subr.mxu0 0.0
    %582 = vmatpush1.msra.mxu0 %v310
    %583 = vmatprep.subr.mxu0 0.0
    %584 = vmatpush1.msra.mxu0 %v311
    %585 = vmatprep.subr.mxu0 0.0
    %586 = vmatpush1.msra.mxu0 %v312
    %587 = vmatprep.subr.mxu0 0.0
    %588 = vmatpush1.msra.mxu0 %v313
    %589 = vmatprep.subr.mxu0 0.0
    %590 = vmatpush1.msra.mxu0 %v314
    %591 = vmatprep.subr.mxu0 0.0
    %592 = vmatpush1.msra.mxu0 %v315
    %593 = vmatprep.subr.mxu0 0.0
    %594 = vmatpush1.msra.mxu0 %v316
    %595 = vmatprep.subr.mxu0 0.0
    %596 = vmatpush1.msra.mxu0 %v317
    %597 = vmatprep.subr.mxu0 0.0
    %598 = vmatpush1.msra.mxu0 %v318
    %599 = vmatprep.mubr.f32.mxu0 %v385
    %600 = vmatmul.mubr.f32.gmra.mrb[0].mxu0 %v377
    %v601 = vpop.f32.mrb[0].mxu0
    %v602 = vadd.f32 %v532, %v601
    %v603 = vpop.f32.mrb[0].mxu0
    %604 = vdwg.mxu0
    %605 = vmatprep.subr.mxu0 0.0
    %606 = vmatpush1.msra.mxu0 %v319
    %607 = vmatprep.subr.mxu0 0.0
    %608 = vmatpush1.msra.mxu0 %v320
    %609 = vmatprep.subr.mxu0 0.0
    %610 = vmatpush1.msra.mxu0 %v321
    %611 = vmatprep.subr.mxu0 0.0
    %612 = vmatpush1.msra.mxu0 %v322
    %613 = vmatprep.subr.mxu0 0.0
    %614 = vmatpush1.msra.mxu0 %v323
    %615 = vmatprep.subr.mxu0 0.0
    %616 = vmatpush1.msra.mxu0 %v324
    %617 = vmatprep.subr.mxu0 0.0
    %618 = vmatpush1.msra.mxu0 %v325
    %619 = vmatprep.subr.mxu0 0.0
    %620 = vmatpush1.msra.mxu0 %v326
    %621 = vmatprep.subr.mxu0 0.0
    %622 = vmatpush1.msra.mxu0 %v327
    %623 = vmatprep.subr.mxu0 0.0
    %624 = vmatpush1.msra.mxu0 %v328
    %625 = vmatprep.subr.mxu0 0.0
    %626 = vmatpush1.msra.mxu0 %v329
    %627 = vmatprep.subr.mxu0 0.0
    %628 = vmatpush1.msra.mxu0 %v330
    %629 = vmatprep.subr.mxu0 0.0
    %630 = vmatpush1.msra.mxu0 %v331
    %631 = vmatprep.subr.mxu0 0.0
    %632 = vmatpush1.msra.mxu0 %v332
    %633 = vmatprep.subr.mxu0 0.0
    %634 = vmatpush1.msra.mxu0 %v333
    %635 = vmatprep.subr.mxu0 0.0
    %636 = vmatpush1.msra.mxu0 %v334
    %637 = vmatprep.subr.mxu0 0.0
    %638 = vmatpush1.msra.mxu0 %v335
    %639 = vmatprep.subr.mxu0 0.0
    %640 = vmatpush1.msra.mxu0 %v336
    %641 = vmatprep.subr.mxu0 0.0
    %642 = vmatpush1.msra.mxu0 %v337
    %643 = vmatprep.subr.mxu0 0.0
    %644 = vmatpush1.msra.mxu0 %v338
    %645 = vmatprep.subr.mxu0 0.0
    %646 = vmatpush1.msra.mxu0 %v339
    %647 = vmatprep.subr.mxu0 0.0
    %648 = vmatpush1.msra.mxu0 %v340
    %649 = vmatprep.subr.mxu0 0.0
    %650 = vmatpush1.msra.mxu0 %v341
    %651 = vmatprep.subr.mxu0 0.0
    %652 = vmatpush1.msra.mxu0 %v342
    %653 = vmatprep.subr.mxu0 0.0
    %654 = vmatpush1.msra.mxu0 %v343
    %655 = vmatprep.subr.mxu0 0.0
    %656 = vmatpush1.msra.mxu0 %v344
    %657 = vmatprep.subr.mxu0 0.0
    %658 = vmatpush1.msra.mxu0 %v345
    %659 = vmatprep.subr.mxu0 0.0
    %660 = vmatpush1.msra.mxu0 %v346
    %661 = vmatprep.subr.mxu0 0.0
    %662 = vmatpush1.msra.mxu0 %v347
    %663 = vmatprep.subr.mxu0 0.0
    %664 = vmatpush1.msra.mxu0 %v348
    %665 = vmatprep.subr.mxu0 0.0
    %666 = vmatpush1.msra.mxu0 %v349
    %667 = vmatprep.subr.mxu0 0.0
    %668 = vmatpush1.msra.mxu0 %v350
    %669 = vmatprep.mubr.f32.mxu0 %v386
    %670 = vmatmul.mubr.f32.gmra.mrb[0].mxu0 %v384
    %v671 = vpop.f32.mrb[0].mxu0
    %v672 = vadd.f32 %v602, %v671
    %v673 = vpop.f32.mrb[0].mxu0
    %674 = vdwg.mxu0
    %v677 = vcombine.high %v91, %v91
    %v679 = vunpack.c.l.s4 1983009808
    %v680 = vunpack.c.0.s8 %v679
    %v681 = vlaneseq
    %v682 = vshrl.u32 %v681, 7
    %v683 = vsub.s32 %v680, %v682
    %v684 = vrot.slane %v91, %v683
    %v686 = vunpack.c.l.s4 1983009808
    %v687 = vunpack.c.0.s8 %v686
    %v688 = vlaneseq
    %v689 = vshrl.u32 %v688, 7
    %v690 = vsub.s32 %v687, %v689
    %v691 = vrot.slane %v677, %v690
    %v692 = vcombine.high %v684, %v684
    %v693 = vcombine.high %v691, %v691
    %v694 = vcombine.high %v92, %v92
    %v696 = vunpack.c.l.s4 1983009808
    %v697 = vunpack.c.0.s8 %v696
    %v698 = vlaneseq
    %v699 = vshrl.u32 %v698, 7
    %v700 = vsub.s32 %v697, %v699
    %v701 = vrot.slane %v92, %v700
    %v703 = vunpack.c.l.s4 1983009808
    %v704 = vunpack.c.0.s8 %v703
    %v705 = vlaneseq
    %v706 = vshrl.u32 %v705, 7
    %v707 = vsub.s32 %v704, %v706
    %v708 = vrot.slane %v694, %v707
    %v709 = vcombine.high %v701, %v701
    %v710 = vcombine.high %v708, %v708
    %719 = vmatprep.subr.mxu0 0.0
    %720 = vmatpush1.msra.mxu0 %v95
    %721 = vmatprep.subr.mxu0 0.0
    %722 = vmatpush1.msra.mxu0 %v96
    %723 = vmatprep.subr.mxu0 0.0
    %724 = vmatpush1.msra.mxu0 %v97
    %725 = vmatprep.subr.mxu0 0.0
    %726 = vmatpush1.msra.mxu0 %v98
    %727 = vmatprep.subr.mxu0 0.0
    %728 = vmatpush1.msra.mxu0 %v99
    %729 = vmatprep.subr.mxu0 0.0
    %730 = vmatpush1.msra.mxu0 %v100
    %731 = vmatprep.subr.mxu0 0.0
    %732 = vmatpush1.msra.mxu0 %v101
    %733 = vmatprep.subr.mxu0 0.0
    %734 = vmatpush1.msra.mxu0 %v102
    %735 = vmatprep.subr.mxu0 0.0
    %736 = vmatpush1.msra.mxu0 %v103
    %737 = vmatprep.subr.mxu0 0.0
    %738 = vmatpush1.msra.mxu0 %v104
    %739 = vmatprep.subr.mxu0 0.0
    %740 = vmatpush1.msra.mxu0 %v105
    %741 = vmatprep.subr.mxu0 0.0
    %742 = vmatpush1.msra.mxu0 %v106
    %743 = vmatprep.subr.mxu0 0.0
    %744 = vmatpush1.msra.mxu0 %v107
    %745 = vmatprep.subr.mxu0 0.0
    %746 = vmatpush1.msra.mxu0 %v108
    %747 = vmatprep.subr.mxu0 0.0
    %748 = vmatpush1.msra.mxu0 %v109
    %749 = vmatprep.subr.mxu0 0.0
    %750 = vmatpush1.msra.mxu0 %v110
    %751 = vmatprep.subr.mxu0 0.0
    %752 = vmatpush1.msra.mxu0 %v111
    %753 = vmatprep.subr.mxu0 0.0
    %754 = vmatpush1.msra.mxu0 %v112
    %755 = vmatprep.subr.mxu0 0.0
    %756 = vmatpush1.msra.mxu0 %v113
    %757 = vmatprep.subr.mxu0 0.0
    %758 = vmatpush1.msra.mxu0 %v114
    %759 = vmatprep.subr.mxu0 0.0
    %760 = vmatpush1.msra.mxu0 %v115
    %761 = vmatprep.subr.mxu0 0.0
    %762 = vmatpush1.msra.mxu0 %v116
    %763 = vmatprep.subr.mxu0 0.0
    %764 = vmatpush1.msra.mxu0 %v117
    %765 = vmatprep.subr.mxu0 0.0
    %766 = vmatpush1.msra.mxu0 %v118
    %767 = vmatprep.subr.mxu0 0.0
    %768 = vmatpush1.msra.mxu0 %v119
    %769 = vmatprep.subr.mxu0 0.0
    %770 = vmatpush1.msra.mxu0 %v120
    %771 = vmatprep.subr.mxu0 0.0
    %772 = vmatpush1.msra.mxu0 %v121
    %773 = vmatprep.subr.mxu0 0.0
    %774 = vmatpush1.msra.mxu0 %v122
    %775 = vmatprep.subr.mxu0 0.0
    %776 = vmatpush1.msra.mxu0 %v123
    %777 = vmatprep.subr.mxu0 0.0
    %778 = vmatpush1.msra.mxu0 %v124
    %779 = vmatprep.subr.mxu0 0.0
    %780 = vmatpush1.msra.mxu0 %v125
    %781 = vmatprep.subr.mxu0 0.0
    %782 = vmatpush1.msra.mxu0 %v126
    %783 = vmatprep.mubr.f32.mxu0 %v692
    %784 = vmatmul.mubr.f32.gmra.mrb[0].mxu0 %v684
    %v785 = vpop.f32.mrb[0].mxu0
    %v786 = vadd.f32 %v672, %v785
    %v787 = vpop.f32.mrb[0].mxu0
    %788 = vdwg.mxu0
    %789 = vmatprep.subr.mxu0 0.0
    %790 = vmatpush1.msra.mxu0 %v127
    %791 = vmatprep.subr.mxu0 0.0
    %792 = vmatpush1.msra.mxu0 %v128
    %793 = vmatprep.subr.mxu0 0.0
    %794 = vmatpush1.msra.mxu0 %v129
    %795 = vmatprep.subr.mxu0 0.0
    %796 = vmatpush1.msra.mxu0 %v130
    %797 = vmatprep.subr.mxu0 0.0
    %798 = vmatpush1.msra.mxu0 %v131
    %799 = vmatprep.subr.mxu0 0.0
    %800 = vmatpush1.msra.mxu0 %v132
    %801 = vmatprep.subr.mxu0 0.0
    %802 = vmatpush1.msra.mxu0 %v133
    %803 = vmatprep.subr.mxu0 0.0
    %804 = vmatpush1.msra.mxu0 %v134
    %805 = vmatprep.subr.mxu0 0.0
    %806 = vmatpush1.msra.mxu0 %v135
    %807 = vmatprep.subr.mxu0 0.0
    %808 = vmatpush1.msra.mxu0 %v136
    %809 = vmatprep.subr.mxu0 0.0
    %810 = vmatpush1.msra.mxu0 %v137
    %811 = vmatprep.subr.mxu0 0.0
    %812 = vmatpush1.msra.mxu0 %v138
    %813 = vmatprep.subr.mxu0 0.0
    %814 = vmatpush1.msra.mxu0 %v139
    %815 = vmatprep.subr.mxu0 0.0
    %816 = vmatpush1.msra.mxu0 %v140
    %817 = vmatprep.subr.mxu0 0.0
    %818 = vmatpush1.msra.mxu0 %v141
    %819 = vmatprep.subr.mxu0 0.0
    %820 = vmatpush1.msra.mxu0 %v142
    %821 = vmatprep.subr.mxu0 0.0
    %822 = vmatpush1.msra.mxu0 %v143
    %823 = vmatprep.subr.mxu0 0.0
    %824 = vmatpush1.msra.mxu0 %v144
    %825 = vmatprep.subr.mxu0 0.0
    %826 = vmatpush1.msra.mxu0 %v145
    %827 = vmatprep.subr.mxu0 0.0
    %828 = vmatpush1.msra.mxu0 %v146
    %829 = vmatprep.subr.mxu0 0.0
    %830 = vmatpush1.msra.mxu0 %v147
    %831 = vmatprep.subr.mxu0 0.0
    %832 = vmatpush1.msra.mxu0 %v148
    %833 = vmatprep.subr.mxu0 0.0
    %834 = vmatpush1.msra.mxu0 %v149
    %835 = vmatprep.subr.mxu0 0.0
    %836 = vmatpush1.msra.mxu0 %v150
    %837 = vmatprep.subr.mxu0 0.0
    %838 = vmatpush1.msra.mxu0 %v151
    %839 = vmatprep.subr.mxu0 0.0
    %840 = vmatpush1.msra.mxu0 %v152
    %841 = vmatprep.subr.mxu0 0.0
    %842 = vmatpush1.msra.mxu0 %v153
    %843 = vmatprep.subr.mxu0 0.0
    %844 = vmatpush1.msra.mxu0 %v154
    %845 = vmatprep.subr.mxu0 0.0
    %846 = vmatpush1.msra.mxu0 %v155
    %847 = vmatprep.subr.mxu0 0.0
    %848 = vmatpush1.msra.mxu0 %v156
    %849 = vmatprep.subr.mxu0 0.0
    %850 = vmatpush1.msra.mxu0 %v157
    %851 = vmatprep.subr.mxu0 0.0
    %852 = vmatpush1.msra.mxu0 %v158
    %853 = vmatprep.mubr.f32.mxu0 %v693
    %854 = vmatmul.mubr.f32.gmra.mrb[0].mxu0 %v691
    %v855 = vpop.f32.mrb[0].mxu0
    %v856 = vadd.f32 %v786, %v855
    %v857 = vpop.f32.mrb[0].mxu0
    %858 = vdwg.mxu0
    %859 = vmatprep.subr.mxu0 0.0
    %860 = vmatpush1.msra.mxu0 %v159
    %861 = vmatprep.subr.mxu0 0.0
    %862 = vmatpush1.msra.mxu0 %v160
    %863 = vmatprep.subr.mxu0 0.0
    %864 = vmatpush1.msra.mxu0 %v161
    %865 = vmatprep.subr.mxu0 0.0
    %866 = vmatpush1.msra.mxu0 %v162
    %867 = vmatprep.subr.mxu0 0.0
    %868 = vmatpush1.msra.mxu0 %v163
    %869 = vmatprep.subr.mxu0 0.0
    %870 = vmatpush1.msra.mxu0 %v164
    %871 = vmatprep.subr.mxu0 0.0
    %872 = vmatpush1.msra.mxu0 %v165
    %873 = vmatprep.subr.mxu0 0.0
    %874 = vmatpush1.msra.mxu0 %v166
    %875 = vmatprep.subr.mxu0 0.0
    %876 = vmatpush1.msra.mxu0 %v167
    %877 = vmatprep.subr.mxu0 0.0
    %878 = vmatpush1.msra.mxu0 %v168
    %879 = vmatprep.subr.mxu0 0.0
    %880 = vmatpush1.msra.mxu0 %v169
    %881 = vmatprep.subr.mxu0 0.0
    %882 = vmatpush1.msra.mxu0 %v170
    %883 = vmatprep.subr.mxu0 0.0
    %884 = vmatpush1.msra.mxu0 %v171
    %885 = vmatprep.subr.mxu0 0.0
    %886 = vmatpush1.msra.mxu0 %v172
    %887 = vmatprep.subr.mxu0 0.0
    %888 = vmatpush1.msra.mxu0 %v173
    %889 = vmatprep.subr.mxu0 0.0
    %890 = vmatpush1.msra.mxu0 %v174
    %891 = vmatprep.subr.mxu0 0.0
    %892 = vmatpush1.msra.mxu0 %v175
    %893 = vmatprep.subr.mxu0 0.0
    %894 = vmatpush1.msra.mxu0 %v176
    %895 = vmatprep.subr.mxu0 0.0
    %896 = vmatpush1.msra.mxu0 %v177
    %897 = vmatprep.subr.mxu0 0.0
    %898 = vmatpush1.msra.mxu0 %v178
    %899 = vmatprep.subr.mxu0 0.0
    %900 = vmatpush1.msra.mxu0 %v179
    %901 = vmatprep.subr.mxu0 0.0
    %902 = vmatpush1.msra.mxu0 %v180
    %903 = vmatprep.subr.mxu0 0.0
    %904 = vmatpush1.msra.mxu0 %v181
    %905 = vmatprep.subr.mxu0 0.0
    %906 = vmatpush1.msra.mxu0 %v182
    %907 = vmatprep.subr.mxu0 0.0
    %908 = vmatpush1.msra.mxu0 %v183
    %909 = vmatprep.subr.mxu0 0.0
    %910 = vmatpush1.msra.mxu0 %v184
    %911 = vmatprep.subr.mxu0 0.0
    %912 = vmatpush1.msra.mxu0 %v185
    %913 = vmatprep.subr.mxu0 0.0
    %914 = vmatpush1.msra.mxu0 %v186
    %915 = vmatprep.subr.mxu0 0.0
    %916 = vmatpush1.msra.mxu0 %v187
    %917 = vmatprep.subr.mxu0 0.0
    %918 = vmatpush1.msra.mxu0 %v188
    %919 = vmatprep.subr.mxu0 0.0
    %920 = vmatpush1.msra.mxu0 %v189
    %921 = vmatprep.subr.mxu0 0.0
    %922 = vmatpush1.msra.mxu0 %v190
    %923 = vmatprep.mubr.f32.mxu0 %v709
    %924 = vmatmul.mubr.f32.gmra.mrb[0].mxu0 %v701
    %v925 = vpop.f32.mrb[0].mxu0
    %v926 = vadd.f32 %v856, %v925
    %v927 = vpop.f32.mrb[0].mxu0
    %928 = vdwg.mxu0
    %929 = vmatprep.subr.mxu0 0.0
    %930 = vmatpush1.msra.mxu0 %v191
    %931 = vmatprep.subr.mxu0 0.0
    %932 = vmatpush1.msra.mxu0 %v192
    %933 = vmatprep.subr.mxu0 0.0
    %934 = vmatpush1.msra.mxu0 %v193
    %935 = vmatprep.subr.mxu0 0.0
    %936 = vmatpush1.msra.mxu0 %v194
    %937 = vmatprep.subr.mxu0 0.0
    %938 = vmatpush1.msra.mxu0 %v195
    %939 = vmatprep.subr.mxu0 0.0
    %940 = vmatpush1.msra.mxu0 %v196
    %941 = vmatprep.subr.mxu0 0.0
    %942 = vmatpush1.msra.mxu0 %v197
    %943 = vmatprep.subr.mxu0 0.0
    %944 = vmatpush1.msra.mxu0 %v198
    %945 = vmatprep.subr.mxu0 0.0
    %946 = vmatpush1.msra.mxu0 %v199
    %947 = vmatprep.subr.mxu0 0.0
    %948 = vmatpush1.msra.mxu0 %v200
    %949 = vmatprep.subr.mxu0 0.0
    %950 = vmatpush1.msra.mxu0 %v201
    %951 = vmatprep.subr.mxu0 0.0
    %952 = vmatpush1.msra.mxu0 %v202
    %953 = vmatprep.subr.mxu0 0.0
    %954 = vmatpush1.msra.mxu0 %v203
    %955 = vmatprep.subr.mxu0 0.0
    %956 = vmatpush1.msra.mxu0 %v204
    %957 = vmatprep.subr.mxu0 0.0
    %958 = vmatpush1.msra.mxu0 %v205
    %959 = vmatprep.subr.mxu0 0.0
    %960 = vmatpush1.msra.mxu0 %v206
    %961 = vmatprep.subr.mxu0 0.0
    %962 = vmatpush1.msra.mxu0 %v207
    %963 = vmatprep.subr.mxu0 0.0
    %964 = vmatpush1.msra.mxu0 %v208
    %965 = vmatprep.subr.mxu0 0.0
    %966 = vmatpush1.msra.mxu0 %v209
    %967 = vmatprep.subr.mxu0 0.0
    %968 = vmatpush1.msra.mxu0 %v210
    %969 = vmatprep.subr.mxu0 0.0
    %970 = vmatpush1.msra.mxu0 %v211
    %971 = vmatprep.subr.mxu0 0.0
    %972 = vmatpush1.msra.mxu0 %v212
    %973 = vmatprep.subr.mxu0 0.0
    %974 = vmatpush1.msra.mxu0 %v213
    %975 = vmatprep.subr.mxu0 0.0
    %976 = vmatpush1.msra.mxu0 %v214
    %977 = vmatprep.subr.mxu0 0.0
    %978 = vmatpush1.msra.mxu0 %v215
    %979 = vmatprep.subr.mxu0 0.0
    %980 = vmatpush1.msra.mxu0 %v216
    %981 = vmatprep.subr.mxu0 0.0
    %982 = vmatpush1.msra.mxu0 %v217
    %983 = vmatprep.subr.mxu0 0.0
    %984 = vmatpush1.msra.mxu0 %v218
    %985 = vmatprep.subr.mxu0 0.0
    %986 = vmatpush1.msra.mxu0 %v219
    %987 = vmatprep.subr.mxu0 0.0
    %988 = vmatpush1.msra.mxu0 %v220
    %989 = vmatprep.subr.mxu0 0.0
    %990 = vmatpush1.msra.mxu0 %v221
    %991 = vmatprep.subr.mxu0 0.0
    %992 = vmatpush1.msra.mxu0 %v222
    %993 = vmatprep.mubr.f32.mxu0 %v710
    %994 = vmatmul.mubr.f32.gmra.mrb[0].mxu0 %v708
    %v995 = vpop.f32.mrb[0].mxu0
    %v996 = vadd.f32 %v926, %v995
    %v997 = vpop.f32.mrb[0].mxu0
    %998 = vdwg.mxu0
    %v999 = vld [vmem:[%s4] sm:$0x1]
    %v1001 = vlaneseq
    %v1002 = vshrl.u32 %v1001, 7
    %v1003 = vsub.s32 0, %v1002
    %v1004 = vrot.slane %v999, %v1003
    %v1006 = vadd.f32 %v996, %v1004
    %v1007 = vld [vmem:[#allocation10] sm:$0xff]
    %v1008 = vld [vmem:[#allocation10 + $0x8] sm:$0xff]
    %v1009 = vld [vmem:[#allocation10 + $0x10] sm:$0xff]
    %v1010 = vld [vmem:[#allocation10 + $0x18] sm:$0xff]
    %v1011 = vld [vmem:[#allocation10 + $0x20] sm:$0xff]
    %v1012 = vld [vmem:[#allocation10 + $0x28] sm:$0xff]
    %v1013 = vld [vmem:[#allocation10 + $0x30] sm:$0xff]
    %v1014 = vld [vmem:[#allocation10 + $0x38] sm:$0xff]
    %v1015 = vld [vmem:[#allocation10 + $0x40] sm:$0xff]
    %v1016 = vld [vmem:[#allocation10 + $0x48] sm:$0xff]
    %v1017 = vld [vmem:[#allocation10 + $0x50] sm:$0xff]
    %v1018 = vld [vmem:[#allocation10 + $0x58] sm:$0xff]
    %v1019 = vld [vmem:[#allocation10 + $0x60] sm:$0xff]
    %v1020 = vld [vmem:[#allocation10 + $0x68] sm:$0xff]
    %v1021 = vld [vmem:[#allocation10 + $0x70] sm:$0xff]
    %v1022 = vld [vmem:[#allocation10 + $0x78] sm:$0xff]
    %v1023 = vld [vmem:[#allocation10 + $0x80] sm:$0xff]
    %v1024 = vld [vmem:[#allocation10 + $0x88] sm:$0xff]
    %v1025 = vld [vmem:[#allocation10 + $0x90] sm:$0xff]
    %v1026 = vld [vmem:[#allocation10 + $0x98] sm:$0xff]
    %v1027 = vld [vmem:[#allocation10 + $0xa0] sm:$0xff]
    %v1028 = vld [vmem:[#allocation10 + $0xa8] sm:$0xff]
    %v1029 = vld [vmem:[#allocation10 + $0xb0] sm:$0xff]
    %v1030 = vld [vmem:[#allocation10 + $0xb8] sm:$0xff]
    %v1031 = vld [vmem:[#allocation10 + $0xc0] sm:$0xff]
    %v1032 = vld [vmem:[#allocation10 + $0xc8] sm:$0xff]
    %v1033 = vld [vmem:[#allocation10 + $0xd0] sm:$0xff]
    %v1034 = vld [vmem:[#allocation10 + $0xd8] sm:$0xff]
    %v1035 = vld [vmem:[#allocation10 + $0xe0] sm:$0xff]
    %v1036 = vld [vmem:[#allocation10 + $0xe8] sm:$0xff]
    %v1037 = vld [vmem:[#allocation10 + $0xf0] sm:$0xff]
    %v1038 = vld [vmem:[#allocation10 + $0xf8] sm:$0xff]
    %v1039 = vld [vmem:[#allocation10 + $0x100] sm:$0xff]
    %v1040 = vld [vmem:[#allocation10 + $0x108] sm:$0xff]
    %v1041 = vld [vmem:[#allocation10 + $0x110] sm:$0xff]
    %v1042 = vld [vmem:[#allocation10 + $0x118] sm:$0xff]
    %v1043 = vld [vmem:[#allocation10 + $0x120] sm:$0xff]
    %v1044 = vld [vmem:[#allocation10 + $0x128] sm:$0xff]
    %v1045 = vld [vmem:[#allocation10 + $0x130] sm:$0xff]
    %v1046 = vld [vmem:[#allocation10 + $0x138] sm:$0xff]
    %v1047 = vld [vmem:[#allocation10 + $0x140] sm:$0xff]
    %v1048 = vld [vmem:[#allocation10 + $0x148] sm:$0xff]
    %v1049 = vld [vmem:[#allocation10 + $0x150] sm:$0xff]
    %v1050 = vld [vmem:[#allocation10 + $0x158] sm:$0xff]
    %v1051 = vld [vmem:[#allocation10 + $0x160] sm:$0xff]
    %v1052 = vld [vmem:[#allocation10 + $0x168] sm:$0xff]
    %v1053 = vld [vmem:[#allocation10 + $0x170] sm:$0xff]
    %v1054 = vld [vmem:[#allocation10 + $0x178] sm:$0xff]
    %v1055 = vld [vmem:[#allocation10 + $0x180] sm:$0xff]
    %v1056 = vld [vmem:[#allocation10 + $0x188] sm:$0xff]
    %v1057 = vld [vmem:[#allocation10 + $0x190] sm:$0xff]
    %v1058 = vld [vmem:[#allocation10 + $0x198] sm:$0xff]
    %v1059 = vld [vmem:[#allocation10 + $0x1a0] sm:$0xff]
    %v1060 = vld [vmem:[#allocation10 + $0x1a8] sm:$0xff]
    %v1061 = vld [vmem:[#allocation10 + $0x1b0] sm:$0xff]
    %v1062 = vld [vmem:[#allocation10 + $0x1b8] sm:$0xff]
    %v1063 = vld [vmem:[#allocation10 + $0x1c0] sm:$0xff]
    %v1064 = vld [vmem:[#allocation10 + $0x1c8] sm:$0xff]
    %v1065 = vld [vmem:[#allocation10 + $0x1d0] sm:$0xff]
    %v1066 = vld [vmem:[#allocation10 + $0x1d8] sm:$0xff]
    %v1067 = vld [vmem:[#allocation10 + $0x1e0] sm:$0xff]
    %v1068 = vld [vmem:[#allocation10 + $0x1e8] sm:$0xff]
    %v1069 = vld [vmem:[#allocation10 + $0x1f0] sm:$0xff]
    %v1070 = vld [vmem:[#allocation10 + $0x1f8] sm:$0xff]
    %v1071 = vld [vmem:[#allocation10 + $0x200] sm:$0xff]
    %v1072 = vld [vmem:[#allocation10 + $0x208] sm:$0xff]
    %v1073 = vld [vmem:[#allocation10 + $0x210] sm:$0xff]
    %v1074 = vld [vmem:[#allocation10 + $0x218] sm:$0xff]
    %v1075 = vld [vmem:[#allocation10 + $0x220] sm:$0xff]
    %v1076 = vld [vmem:[#allocation10 + $0x228] sm:$0xff]
    %v1077 = vld [vmem:[#allocation10 + $0x230] sm:$0xff]
    %v1078 = vld [vmem:[#allocation10 + $0x238] sm:$0xff]
    %v1079 = vld [vmem:[#allocation10 + $0x240] sm:$0xff]
    %v1080 = vld [vmem:[#allocation10 + $0x248] sm:$0xff]
    %v1081 = vld [vmem:[#allocation10 + $0x250] sm:$0xff]
    %v1082 = vld [vmem:[#allocation10 + $0x258] sm:$0xff]
    %v1083 = vld [vmem:[#allocation10 + $0x260] sm:$0xff]
    %v1084 = vld [vmem:[#allocation10 + $0x268] sm:$0xff]
    %v1085 = vld [vmem:[#allocation10 + $0x270] sm:$0xff]
    %v1086 = vld [vmem:[#allocation10 + $0x278] sm:$0xff]
    %v1087 = vld [vmem:[#allocation10 + $0x280] sm:$0xff]
    %v1088 = vld [vmem:[#allocation10 + $0x288] sm:$0xff]
    %v1089 = vld [vmem:[#allocation10 + $0x290] sm:$0xff]
    %v1090 = vld [vmem:[#allocation10 + $0x298] sm:$0xff]
    %v1091 = vld [vmem:[#allocation10 + $0x2a0] sm:$0xff]
    %v1092 = vld [vmem:[#allocation10 + $0x2a8] sm:$0xff]
    %v1093 = vld [vmem:[#allocation10 + $0x2b0] sm:$0xff]
    %v1094 = vld [vmem:[#allocation10 + $0x2b8] sm:$0xff]
    %v1095 = vld [vmem:[#allocation10 + $0x2c0] sm:$0xff]
    %v1096 = vld [vmem:[#allocation10 + $0x2c8] sm:$0xff]
    %v1097 = vld [vmem:[#allocation10 + $0x2d0] sm:$0xff]
    %v1098 = vld [vmem:[#allocation10 + $0x2d8] sm:$0xff]
    %v1099 = vld [vmem:[#allocation10 + $0x2e0] sm:$0xff]
    %v1100 = vld [vmem:[#allocation10 + $0x2e8] sm:$0xff]
    %v1101 = vld [vmem:[#allocation10 + $0x2f0] sm:$0xff]
    %v1102 = vld [vmem:[#allocation10 + $0x2f8] sm:$0xff]
    %v1103 = vld [vmem:[#allocation10 + $0x300] sm:$0xff]
    %v1104 = vld [vmem:[#allocation10 + $0x308] sm:$0xff]
    %v1105 = vld [vmem:[#allocation10 + $0x310] sm:$0xff]
    %v1106 = vld [vmem:[#allocation10 + $0x318] sm:$0xff]
    %v1107 = vld [vmem:[#allocation10 + $0x320] sm:$0xff]
    %v1108 = vld [vmem:[#allocation10 + $0x328] sm:$0xff]
    %v1109 = vld [vmem:[#allocation10 + $0x330] sm:$0xff]
    %v1110 = vld [vmem:[#allocation10 + $0x338] sm:$0xff]
    %v1111 = vld [vmem:[#allocation10 + $0x340] sm:$0xff]
    %v1112 = vld [vmem:[#allocation10 + $0x348] sm:$0xff]
    %v1113 = vld [vmem:[#allocation10 + $0x350] sm:$0xff]
    %v1114 = vld [vmem:[#allocation10 + $0x358] sm:$0xff]
    %v1115 = vld [vmem:[#allocation10 + $0x360] sm:$0xff]
    %v1116 = vld [vmem:[#allocation10 + $0x368] sm:$0xff]
    %v1117 = vld [vmem:[#allocation10 + $0x370] sm:$0xff]
    %v1118 = vld [vmem:[#allocation10 + $0x378] sm:$0xff]
    %v1119 = vld [vmem:[#allocation10 + $0x380] sm:$0xff]
    %v1120 = vld [vmem:[#allocation10 + $0x388] sm:$0xff]
    %v1121 = vld [vmem:[#allocation10 + $0x390] sm:$0xff]
    %v1122 = vld [vmem:[#allocation10 + $0x398] sm:$0xff]
    %v1123 = vld [vmem:[#allocation10 + $0x3a0] sm:$0xff]
    %v1124 = vld [vmem:[#allocation10 + $0x3a8] sm:$0xff]
    %v1125 = vld [vmem:[#allocation10 + $0x3b0] sm:$0xff]
    %v1126 = vld [vmem:[#allocation10 + $0x3b8] sm:$0xff]
    %v1127 = vld [vmem:[#allocation10 + $0x3c0] sm:$0xff]
    %v1128 = vld [vmem:[#allocation10 + $0x3c8] sm:$0xff]
    %v1129 = vld [vmem:[#allocation10 + $0x3d0] sm:$0xff]
    %v1130 = vld [vmem:[#allocation10 + $0x3d8] sm:$0xff]
    %v1131 = vld [vmem:[#allocation10 + $0x3e0] sm:$0xff]
    %v1132 = vld [vmem:[#allocation10 + $0x3e8] sm:$0xff]
    %v1133 = vld [vmem:[#allocation10 + $0x3f0] sm:$0xff]
    %v1134 = vld [vmem:[#allocation10 + $0x3f8] sm:$0xff]
    %v1135 = vld [vmem:[%s6] sm:$0xff]
    %v1137 = vlaneseq
    %v1138 = vshrl.u32 %v1137, 7
    %v1139 = vsub.s32 0, %v1138
    %v1140 = vrot.slane %v1135, %v1139
    %v1141 = vlaneseq
    %v1142 = vshrl.u32 %v1141, 7
    %v1143 = vsub.s32 1, %v1142
    %v1144 = vrot.slane %v1135, %v1143
    %v1145 = vlaneseq
    %v1146 = vshrl.u32 %v1145, 7
    %v1147 = vsub.s32 2, %v1146
    %v1148 = vrot.slane %v1135, %v1147
    %v1149 = vlaneseq
    %v1150 = vshrl.u32 %v1149, 7
    %v1151 = vsub.s32 3, %v1150
    %v1152 = vrot.slane %v1135, %v1151
    %v1153 = vlaneseq
    %v1154 = vshrl.u32 %v1153, 7
    %v1155 = vsub.s32 4, %v1154
    %v1156 = vrot.slane %v1135, %v1155
    %v1157 = vlaneseq
    %v1158 = vshrl.u32 %v1157, 7
    %v1159 = vsub.s32 5, %v1158
    %v1160 = vrot.slane %v1135, %v1159
    %v1161 = vlaneseq
    %v1162 = vshrl.u32 %v1161, 7
    %v1163 = vsub.s32 6, %v1162
    %v1164 = vrot.slane %v1135, %v1163
    %v1165 = vlaneseq
    %v1166 = vshrl.u32 %v1165, 7
    %v1167 = vsub.s32 7, %v1166
    %v1168 = vrot.slane %v1135, %v1167
    %1177 = vmatprep.subr.mxu0 %v1008
    %1178 = vmatpush1.msra.mxu0 %v1007
    %1179 = vmatprep.subr.mxu0 %v1016
    %1180 = vmatpush1.msra.mxu0 %v1015
    %1181 = vmatprep.subr.mxu0 %v1024
    %1182 = vmatpush1.msra.mxu0 %v1023
    %1183 = vmatprep.subr.mxu0 %v1032
    %1184 = vmatpush1.msra.mxu0 %v1031
    %1185 = vmatprep.subr.mxu0 %v1040
    %1186 = vmatpush1.msra.mxu0 %v1039
    %1187 = vmatprep.subr.mxu0 %v1048
    %1188 = vmatpush1.msra.mxu0 %v1047
    %1189 = vmatprep.subr.mxu0 %v1056
    %1190 = vmatpush1.msra.mxu0 %v1055
    %1191 = vmatprep.subr.mxu0 %v1064
    %1192 = vmatpush1.msra.mxu0 %v1063
    %1193 = vmatprep.subr.mxu0 %v1072
    %1194 = vmatpush1.msra.mxu0 %v1071
    %1195 = vmatprep.subr.mxu0 %v1080
    %1196 = vmatpush1.msra.mxu0 %v1079
    %1197 = vmatprep.subr.mxu0 %v1088
    %1198 = vmatpush1.msra.mxu0 %v1087
    %1199 = vmatprep.subr.mxu0 %v1096
    %1200 = vmatpush1.msra.mxu0 %v1095
    %1201 = vmatprep.subr.mxu0 %v1104
    %1202 = vmatpush1.msra.mxu0 %v1103
    %1203 = vmatprep.subr.mxu0 %v1112
    %1204 = vmatpush1.msra.mxu0 %v1111
    %1205 = vmatprep.subr.mxu0 %v1120
    %1206 = vmatpush1.msra.mxu0 %v1119
    %1207 = vmatprep.subr.mxu0 %v1128
    %1208 = vmatpush1.msra.mxu0 %v1127
    %1209 = vmatprep.subr.mxu0 0.0
    %1210 = vmatpush1.msra.mxu0 0.0
    %1211 = vmatprep.subr.mxu0 0.0
    %1212 = vmatpush1.msra.mxu0 0.0
    %1213 = vmatprep.subr.mxu0 0.0
    %1214 = vmatpush1.msra.mxu0 0.0
    %1215 = vmatprep.subr.mxu0 0.0
    %1216 = vmatpush1.msra.mxu0 0.0
    %1217 = vmatprep.subr.mxu0 0.0
    %1218 = vmatpush1.msra.mxu0 0.0
    %1219 = vmatprep.subr.mxu0 0.0
    %1220 = vmatpush1.msra.mxu0 0.0
    %1221 = vmatprep.subr.mxu0 0.0
    %1222 = vmatpush1.msra.mxu0 0.0
    %1223 = vmatprep.subr.mxu0 0.0
    %1224 = vmatpush1.msra.mxu0 0.0
    %1225 = vmatprep.subr.mxu0 0.0
    %1226 = vmatpush1.msra.mxu0 0.0
    %1227 = vmatprep.subr.mxu0 0.0
    %1228 = vmatpush1.msra.mxu0 0.0
    %1229 = vmatprep.subr.mxu0 0.0
    %1230 = vmatpush1.msra.mxu0 0.0
    %1231 = vmatprep.subr.mxu0 0.0
    %1232 = vmatpush1.msra.mxu0 0.0
    %1233 = vmatprep.subr.mxu0 0.0
    %1234 = vmatpush1.msra.mxu0 0.0
    %1235 = vmatprep.subr.mxu0 0.0
    %1236 = vmatpush1.msra.mxu0 0.0
    %1237 = vmatprep.subr.mxu0 0.0
    %1238 = vmatpush1.msra.mxu0 0.0
    %1239 = vmatprep.subr.mxu0 0.0
    %1240 = vmatpush1.msra.mxu0 0.0
    %1241 = vmatprep.mubr.f32.mxu0 0.0
    %1242 = vmatmul.mubr.f32.gmra.mrb[0].mxu0 %v1006
    %v1243 = vpop.f32.mrb[0].mxu0
    %v1244 = vadd.f32 %v1140, %v1243
    %v1245 = vpop.f32.mrb[0].mxu0
    %v1246 = vadd.f32 %v1144, %v1245
    %1247 = vdwg.mxu0
    %1248 = vmatprep.subr.mxu0 %v1010
    %1249 = vmatpush1.msra.mxu0 %v1009
    %1250 = vmatprep.subr.mxu0 %v1018
    %1251 = vmatpush1.msra.mxu0 %v1017
    %1252 = vmatprep.subr.mxu0 %v1026
    %1253 = vmatpush1.msra.mxu0 %v1025
    %1254 = vmatprep.subr.mxu0 %v1034
    %1255 = vmatpush1.msra.mxu0 %v1033
    %1256 = vmatprep.subr.mxu0 %v1042
    %1257 = vmatpush1.msra.mxu0 %v1041
    %1258 = vmatprep.subr.mxu0 %v1050
    %1259 = vmatpush1.msra.mxu0 %v1049
    %1260 = vmatprep.subr.mxu0 %v1058
    %1261 = vmatpush1.msra.mxu0 %v1057
    %1262 = vmatprep.subr.mxu0 %v1066
    %1263 = vmatpush1.msra.mxu0 %v1065
    %1264 = vmatprep.subr.mxu0 %v1074
    %1265 = vmatpush1.msra.mxu0 %v1073
    %1266 = vmatprep.subr.mxu0 %v1082
    %1267 = vmatpush1.msra.mxu0 %v1081
    %1268 = vmatprep.subr.mxu0 %v1090
    %1269 = vmatpush1.msra.mxu0 %v1089
    %1270 = vmatprep.subr.mxu0 %v1098
    %1271 = vmatpush1.msra.mxu0 %v1097
    %1272 = vmatprep.subr.mxu0 %v1106
    %1273 = vmatpush1.msra.mxu0 %v1105
    %1274 = vmatprep.subr.mxu0 %v1114
    %1275 = vmatpush1.msra.mxu0 %v1113
    %1276 = vmatprep.subr.mxu0 %v1122
    %1277 = vmatpush1.msra.mxu0 %v1121
    %1278 = vmatprep.subr.mxu0 %v1130
    %1279 = vmatpush1.msra.mxu0 %v1129
    %1280 = vmatprep.subr.mxu0 0.0
    %1281 = vmatpush1.msra.mxu0 0.0
    %1282 = vmatprep.subr.mxu0 0.0
    %1283 = vmatpush1.msra.mxu0 0.0
    %1284 = vmatprep.subr.mxu0 0.0
    %1285 = vmatpush1.msra.mxu0 0.0
    %1286 = vmatprep.subr.mxu0 0.0
    %1287 = vmatpush1.msra.mxu0 0.0
    %1288 = vmatprep.subr.mxu0 0.0
    %1289 = vmatpush1.msra.mxu0 0.0
    %1290 = vmatprep.subr.mxu0 0.0
    %1291 = vmatpush1.msra.mxu0 0.0
    %1292 = vmatprep.subr.mxu0 0.0
    %1293 = vmatpush1.msra.mxu0 0.0
    %1294 = vmatprep.subr.mxu0 0.0
    %1295 = vmatpush1.msra.mxu0 0.0
    %1296 = vmatprep.subr.mxu0 0.0
    %1297 = vmatpush1.msra.mxu0 0.0
    %1298 = vmatprep.subr.mxu0 0.0
    %1299 = vmatpush1.msra.mxu0 0.0
    %1300 = vmatprep.subr.mxu0 0.0
    %1301 = vmatpush1.msra.mxu0 0.0
    %1302 = vmatprep.subr.mxu0 0.0
    %1303 = vmatpush1.msra.mxu0 0.0
    %1304 = vmatprep.subr.mxu0 0.0
    %1305 = vmatpush1.msra.mxu0 0.0
    %1306 = vmatprep.subr.mxu0 0.0
    %1307 = vmatpush1.msra.mxu0 0.0
    %1308 = vmatprep.subr.mxu0 0.0
    %1309 = vmatpush1.msra.mxu0 0.0
    %1310 = vmatprep.subr.mxu0 0.0
    %1311 = vmatpush1.msra.mxu0 0.0
    %1312 = vmatprep.mubr.f32.mxu0 0.0
    %1313 = vmatmul.mubr.f32.gmra.mrb[0].mxu0 %v1006
    %v1314 = vpop.f32.mrb[0].mxu0
    %v1315 = vadd.f32 %v1148, %v1314
    %v1316 = vpop.f32.mrb[0].mxu0
    %v1317 = vadd.f32 %v1152, %v1316
    %1318 = vdwg.mxu0
    %1319 = vmatprep.subr.mxu0 %v1012
    %1320 = vmatpush1.msra.mxu0 %v1011
    %1321 = vmatprep.subr.mxu0 %v1020
    %1322 = vmatpush1.msra.mxu0 %v1019
    %1323 = vmatprep.subr.mxu0 %v1028
    %1324 = vmatpush1.msra.mxu0 %v1027
    %1325 = vmatprep.subr.mxu0 %v1036
    %1326 = vmatpush1.msra.mxu0 %v1035
    %1327 = vmatprep.subr.mxu0 %v1044
    %1328 = vmatpush1.msra.mxu0 %v1043
    %1329 = vmatprep.subr.mxu0 %v1052
    %1330 = vmatpush1.msra.mxu0 %v1051
    %1331 = vmatprep.subr.mxu0 %v1060
    %1332 = vmatpush1.msra.mxu0 %v1059
    %1333 = vmatprep.subr.mxu0 %v1068
    %1334 = vmatpush1.msra.mxu0 %v1067
    %1335 = vmatprep.subr.mxu0 %v1076
    %1336 = vmatpush1.msra.mxu0 %v1075
    %1337 = vmatprep.subr.mxu0 %v1084
    %1338 = vmatpush1.msra.mxu0 %v1083
    %1339 = vmatprep.subr.mxu0 %v1092
    %1340 = vmatpush1.msra.mxu0 %v1091
    %1341 = vmatprep.subr.mxu0 %v1100
    %1342 = vmatpush1.msra.mxu0 %v1099
    %1343 = vmatprep.subr.mxu0 %v1108
    %1344 = vmatpush1.msra.mxu0 %v1107
    %1345 = vmatprep.subr.mxu0 %v1116
    %1346 = vmatpush1.msra.mxu0 %v1115
    %1347 = vmatprep.subr.mxu0 %v1124
    %1348 = vmatpush1.msra.mxu0 %v1123
    %1349 = vmatprep.subr.mxu0 %v1132
    %1350 = vmatpush1.msra.mxu0 %v1131
    %1351 = vmatprep.subr.mxu0 0.0
    %1352 = vmatpush1.msra.mxu0 0.0
    %1353 = vmatprep.subr.mxu0 0.0
    %1354 = vmatpush1.msra.mxu0 0.0
    %1355 = vmatprep.subr.mxu0 0.0
    %1356 = vmatpush1.msra.mxu0 0.0
    %1357 = vmatprep.subr.mxu0 0.0
    %1358 = vmatpush1.msra.mxu0 0.0
    %1359 = vmatprep.subr.mxu0 0.0
    %1360 = vmatpush1.msra.mxu0 0.0
    %1361 = vmatprep.subr.mxu0 0.0
    %1362 = vmatpush1.msra.mxu0 0.0
    %1363 = vmatprep.subr.mxu0 0.0
    %1364 = vmatpush1.msra.mxu0 0.0
    %1365 = vmatprep.subr.mxu0 0.0
    %1366 = vmatpush1.msra.mxu0 0.0
    %1367 = vmatprep.subr.mxu0 0.0
    %1368 = vmatpush1.msra.mxu0 0.0
    %1369 = vmatprep.subr.mxu0 0.0
    %1370 = vmatpush1.msra.mxu0 0.0
    %1371 = vmatprep.subr.mxu0 0.0
    %1372 = vmatpush1.msra.mxu0 0.0
    %1373 = vmatprep.subr.mxu0 0.0
    %1374 = vmatpush1.msra.mxu0 0.0
    %1375 = vmatprep.subr.mxu0 0.0
    %1376 = vmatpush1.msra.mxu0 0.0
    %1377 = vmatprep.subr.mxu0 0.0
    %1378 = vmatpush1.msra.mxu0 0.0
    %1379 = vmatprep.subr.mxu0 0.0
    %1380 = vmatpush1.msra.mxu0 0.0
    %1381 = vmatprep.subr.mxu0 0.0
    %1382 = vmatpush1.msra.mxu0 0.0
    %1383 = vmatprep.mubr.f32.mxu0 0.0
    %1384 = vmatmul.mubr.f32.gmra.mrb[0].mxu0 %v1006
    %v1385 = vpop.f32.mrb[0].mxu0
    %v1386 = vadd.f32 %v1156, %v1385
    %v1387 = vpop.f32.mrb[0].mxu0
    %v1388 = vadd.f32 %v1160, %v1387
    %1389 = vdwg.mxu0
    %1390 = vmatprep.subr.mxu0 %v1014
    %1391 = vmatpush1.msra.mxu0 %v1013
    %1392 = vmatprep.subr.mxu0 %v1022
    %1393 = vmatpush1.msra.mxu0 %v1021
    %1394 = vmatprep.subr.mxu0 %v1030
    %1395 = vmatpush1.msra.mxu0 %v1029
    %1396 = vmatprep.subr.mxu0 %v1038
    %1397 = vmatpush1.msra.mxu0 %v1037
    %1398 = vmatprep.subr.mxu0 %v1046
    %1399 = vmatpush1.msra.mxu0 %v1045
    %1400 = vmatprep.subr.mxu0 %v1054
    %1401 = vmatpush1.msra.mxu0 %v1053
    %1402 = vmatprep.subr.mxu0 %v1062
    %1403 = vmatpush1.msra.mxu0 %v1061
    %1404 = vmatprep.subr.mxu0 %v1070
    %1405 = vmatpush1.msra.mxu0 %v1069
    %1406 = vmatprep.subr.mxu0 %v1078
    %1407 = vmatpush1.msra.mxu0 %v1077
    %1408 = vmatprep.subr.mxu0 %v1086
    %1409 = vmatpush1.msra.mxu0 %v1085
    %1410 = vmatprep.subr.mxu0 %v1094
    %1411 = vmatpush1.msra.mxu0 %v1093
    %1412 = vmatprep.subr.mxu0 %v1102
    %1413 = vmatpush1.msra.mxu0 %v1101
    %1414 = vmatprep.subr.mxu0 %v1110
    %1415 = vmatpush1.msra.mxu0 %v1109
    %1416 = vmatprep.subr.mxu0 %v1118
    %1417 = vmatpush1.msra.mxu0 %v1117
    %1418 = vmatprep.subr.mxu0 %v1126
    %1419 = vmatpush1.msra.mxu0 %v1125
    %1420 = vmatprep.subr.mxu0 %v1134
    %1421 = vmatpush1.msra.mxu0 %v1133
    %1422 = vmatprep.subr.mxu0 0.0
    %1423 = vmatpush1.msra.mxu0 0.0
    %1424 = vmatprep.subr.mxu0 0.0
    %1425 = vmatpush1.msra.mxu0 0.0
    %1426 = vmatprep.subr.mxu0 0.0
    %1427 = vmatpush1.msra.mxu0 0.0
    %1428 = vmatprep.subr.mxu0 0.0
    %1429 = vmatpush1.msra.mxu0 0.0
    %1430 = vmatprep.subr.mxu0 0.0
    %1431 = vmatpush1.msra.mxu0 0.0
    %1432 = vmatprep.subr.mxu0 0.0
    %1433 = vmatpush1.msra.mxu0 0.0
    %1434 = vmatprep.subr.mxu0 0.0
    %1435 = vmatpush1.msra.mxu0 0.0
    %1436 = vmatprep.subr.mxu0 0.0
    %1437 = vmatpush1.msra.mxu0 0.0
    %1438 = vmatprep.subr.mxu0 0.0
    %1439 = vmatpush1.msra.mxu0 0.0
    %1440 = vmatprep.subr.mxu0 0.0
    %1441 = vmatpush1.msra.mxu0 0.0
    %1442 = vmatprep.subr.mxu0 0.0
    %1443 = vmatpush1.msra.mxu0 0.0
    %1444 = vmatprep.subr.mxu0 0.0
    %1445 = vmatpush1.msra.mxu0 0.0
    %1446 = vmatprep.subr.mxu0 0.0
    %1447 = vmatpush1.msra.mxu0 0.0
    %1448 = vmatprep.subr.mxu0 0.0
    %1449 = vmatpush1.msra.mxu0 0.0
    %1450 = vmatprep.subr.mxu0 0.0
    %1451 = vmatpush1.msra.mxu0 0.0
    %1452 = vmatprep.subr.mxu0 0.0
    %1453 = vmatpush1.msra.mxu0 0.0
    %1454 = vmatprep.mubr.f32.mxu0 0.0
    %1455 = vmatmul.mubr.f32.gmra.mrb[0].mxu0 %v1006
    %v1456 = vpop.f32.mrb[0].mxu0
    %v1457 = vadd.f32 %v1164, %v1456
    %v1458 = vpop.f32.mrb[0].mxu0
    %v1459 = vadd.f32 %v1168, %v1458
    %1460 = vdwg.mxu0
    %v1469 = vcombine.low %v1244, %v1246
    %v1470 = vcombine.low %v1315, %v1317
    %v1472 = vunpack.c.l.s4 1983009808
    %v1473 = vunpack.c.0.s8 %v1472
    %v1474 = vlaneseq
    %v1475 = vshrl.u32 %v1474, 7
    %v1476 = vsub.s32 %v1473, %v1475
    %v1477 = vrot.slane %v1469, %v1476
    %v1479 = vunpack.c.l.s4 1983009808
    %v1480 = vunpack.c.0.s8 %v1479
    %v1481 = vlaneseq
    %v1482 = vshrl.u32 %v1481, 7
    %v1483 = vsub.s32 %v1480, %v1482
    %v1484 = vrot.slane %v1470, %v1483
    %v1485 = vcombine.low %v1477, %v1484
    %v1486 = vcombine.low %v1386, %v1388
    %v1487 = vcombine.low %v1457, %v1459
    %v1489 = vunpack.c.l.s4 1983009808
    %v1490 = vunpack.c.0.s8 %v1489
    %v1491 = vlaneseq
    %v1492 = vshrl.u32 %v1491, 7
    %v1493 = vsub.s32 %v1490, %v1492
    %v1494 = vrot.slane %v1486, %v1493
    %v1496 = vunpack.c.l.s4 1983009808
    %v1497 = vunpack.c.0.s8 %v1496
    %v1498 = vlaneseq
    %v1499 = vshrl.u32 %v1498, 7
    %v1500 = vsub.s32 %v1497, %v1499
    %v1501 = vrot.slane %v1487, %v1500
    %v1502 = vcombine.low %v1494, %v1501
    %1505 = vst [vmem:[#allocation11] sm:$0xff] %v1485
    %1506 = vst [vmem:[#allocation11 + $0x8] sm:$0xff] %v1502
    // Predicated region
    $region50: #{tpu_custom_call.1} parent=1 // pred_check
      _
    $region51: #{tpu_custom_call.1} parent=1 // pred_check_branch
      %1508 = sbr.rel (0) target = $region53
    $region52: #{tpu_custom_call.1} parent=1 // pred_region
      %s1510 = ssub.s32 256, 256
      %1511 = vsyncadd [#allocation4], %s1510
      %s1513 = sshll.u32 [#allocation11], 4
      %s1514 = int_to_ptr.vmem [resolvable:$true] %s1513
      %1516 = dma.vmem_to_hbm [thread:$0]  %s1514, 256, %s7, [#allocation4]
    $region53: #{tpu_custom_call.1} parent=1 // pred_fallthru
      _
    // Predicated region
    $region54: #{tpu_custom_call.1} parent=1 // pred_check
      _
    $region55: #{tpu_custom_call.1} parent=1 // pred_check_branch
      %1518 = sbr.rel (0) target = $region57
    $region56: #{tpu_custom_call.1} parent=1 // pred_region
      %1519 = dma.done [#allocation4], 256
    $region57: #{tpu_custom_call.1} parent=1 // pred_fallthru
      _
    %1520 = vsyncpa [#allocation3], 1
    %1521 = vsyncpa [#allocation6], 1
    %1522 = vsyncpa [#allocation9], 1
    %1523 = vsyncpa [#allocation4], 1

// kernel: tpu_custom_call.1
$region0: #{tpu_custom_call.1}
  #allocation0 [shape = 'u32[]', space=smem, size = 0x4, offset = 0x4, fixed_abs, tag = 'smem constant byte address 0x4 - core index']
  #allocation1 [shape = 'u32[144,128]{1,0:T(1,128)}', space=vmem, size = 0x12000, scoped, tag = 'internal scratch']
  %s0 = inlined_call_operand.hbm [shape: f32[2,1024], index: 0, kind: input, shape index: {}]
  %s1 = inlined_call_operand.hbm [shape: f32[2,1024], index: 1, kind: input, shape index: {}]
  %s2 = inlined_call_operand.hbm [shape: f32[1024,128], index: 2, kind: input, shape index: {}]
  %s3 = inlined_call_operand.hbm [shape: f32[1024,128], index: 3, kind: input, shape index: {}]
  %s4 = inlined_call_operand.vmem [shape: f32[1,128], index: 4, kind: input, shape index: {}]
  %s5 = inlined_call_operand.hbm [shape: f32[128,1024], index: 5, kind: input, shape index: {}]
  %s6 = inlined_call_operand.vmem [shape: f32[1,1024], index: 6, kind: input, shape index: {}]
  %s7 = inlined_call_operand.hbm [shape: f32[2,1024], index: 7, kind: output, shape index: {}]
  %s8 = sld [smem:[#allocation0]]
  $region58: #{tpu_custom_call.1} parent=0
    _
  %s10 = ssub.s32 1, %s8
  %s11 = scalar_select 0, %s10, %s8
  $region1: #{tpu_custom_call.1} parent=0
    #allocation2 [shape = 'u8[8192]{0}', space=vmem, size = 0x2000, scoped, tag = 'input window, operand 0, single buffered']
    #allocation3 [shape = 's32[1]{0}', space=sflag, size = 0x4, scoped, tag = 'scoped memory for tpu_custom_call.1']
    #allocation4 [shape = 's32[1]{0}', space=sflag, size = 0x4, scoped, tag = 'scoped memory for tpu_custom_call.1']
    #allocation5 [shape = 'u8[8192]{0}', space=vmem, size = 0x2000, scoped, tag = 'input window, operand 1, single buffered']
    #allocation6 [shape = 's32[1]{0}', space=sflag, size = 0x4, scoped, tag = 'scoped memory for tpu_custom_call.1']
    #allocation7 [shape = 'u8[524288]{0}', space=vmem, size = 0x80000, scoped, tag = 'input window, operand 2, single buffered']
    #allocation8 [shape = 'u8[524288]{0}', space=vmem, size = 0x80000, scoped, tag = 'input window, operand 3, single buffered']
    #allocation9 [shape = 's32[1]{0}', space=sflag, size = 0x4, scoped, tag = 'scoped memory for tpu_custom_call.1']
    #allocation10 [shape = 'u8[524288]{0}', space=vmem, size = 0x80000, scoped, tag = 'input window, operand 5, single buffered']
    #allocation11 [shape = 'u8[8192]{0}', space=vmem, size = 0x2000, scoped, tag = 'output window, operand 0, single buffered']
    %12 = vsyncpa [#allocation3], 0
    %13 = vsyncpa [#allocation6], 0
    %14 = vsyncpa [#allocation9], 0
    %15 = vsyncpa [#allocation4], 0
    // Predicated region
    $region2: #{tpu_custom_call.1} parent=1 // pred_check
      _
    $region3: #{tpu_custom_call.1} parent=1 // pred_check_branch
      %17 = sbr.rel (0) target = $region5
    $region4: #{tpu_custom_call.1} parent=1 // pred_region
      %s19 = ssub.s32 256, 256
      %20 = vsyncadd [#allocation3], %s19
      %s22 = sshll.u32 [#allocation2], 4
      %s23 = int_to_ptr.vmem [resolvable:$true] %s22
      %25 = dma.hbm_to_vmem [thread:$0]  %s0, 256, %s23, [#allocation3]
    $region5: #{tpu_custom_call.1} parent=1 // pred_fallthru
      _
    // Predicated region
    $region6: #{tpu_custom_call.1} parent=1 // pred_check
      _
    $region7: #{tpu_custom_call.1} parent=1 // pred_check_branch
      %27 = sbr.rel (0) target = $region9
    $region8: #{tpu_custom_call.1} parent=1 // pred_region
      %s29 = ssub.s32 256, 256
      %30 = vsyncadd [#allocation6], %s29
      %s32 = sshll.u32 [#allocation5], 4
      %s33 = int_to_ptr.vmem [resolvable:$true] %s32
      %35 = dma.hbm_to_vmem [thread:$0]  %s1, 256, %s33, [#allocation6]
    $region9: #{tpu_custom_call.1} parent=1 // pred_fallthru
      _
    // Predicated region
    $region10: #{tpu_custom_call.1} parent=1 // pred_check
      _
    $region11: #{tpu_custom_call.1} parent=1 // pred_check_branch
      %37 = sbr.rel (0) target = $region13
    $region12: #{tpu_custom_call.1} parent=1 // pred_region
      %s39 = ssub.s32 16384, 16384
      %40 = vsyncadd [#allocation6], %s39
      %s41 = sshll.u32 [#allocation7], 4
      %s42 = int_to_ptr.vmem [resolvable:$true] %s41
      %47 = dma.hbm_to_vmem [thread:$0]  %s2, 16384, %s42, [#allocation6], 128, 128, 8
    $region13: #{tpu_custom_call.1} parent=1 // pred_fallthru
      _
    // Predicated region
    $region14: #{tpu_custom_call.1} parent=1 // pred_check
      _
    $region15: #{tpu_custom_call.1} parent=1 // pred_check_branch
      %49 = sbr.rel (0) target = $region17
    $region16: #{tpu_custom_call.1} parent=1 // pred_region
      %s51 = ssub.s32 16384, 16384
      %52 = vsyncadd [#allocation9], %s51
      %s53 = sshll.u32 [#allocation8], 4
      %s54 = int_to_ptr.vmem [resolvable:$true] %s53
      %59 = dma.hbm_to_vmem [thread:$0]  %s3, 16384, %s54, [#allocation9], 128, 128, 8
    $region17: #{tpu_custom_call.1} parent=1 // pred_fallthru
      _
    // Predicated region
    $region18: #{tpu_custom_call.1} parent=1 // pred_check
      _
    $region19: #{tpu_custom_call.1} parent=1 // pred_check_branch
      %61 = sbr.rel (0) target = $region21
    $region20: #{tpu_custom_call.1} parent=1 // pred_region
      _
    $region21: #{tpu_custom_call.1} parent=1 // pred_fallthru
      _
    // Predicated region
    $region22: #{tpu_custom_call.1} parent=1 // pred_check
      _
    $region23: #{tpu_custom_call.1} parent=1 // pred_check_branch
      %63 = sbr.rel (0) target = $region25
    $region24: #{tpu_custom_call.1} parent=1 // pred_region
      %s65 = ssub.s32 16384, 16384
      %66 = vsyncadd [#allocation9], %s65
      %s67 = sshll.u32 [#allocation10], 4
      %s68 = int_to_ptr.vmem [resolvable:$true] %s67
      %73 = dma.hbm_to_vmem [thread:$0]  %s5, 16384, %s68, [#allocation9], 1024, 1024, 64
    $region25: #{tpu_custom_call.1} parent=1 // pred_fallthru
      _
    // Predicated region
    $region26: #{tpu_custom_call.1} parent=1 // pred_check
      _
    $region27: #{tpu_custom_call.1} parent=1 // pred_check_branch
      %75 = sbr.rel (0) target = $region29
    $region28: #{tpu_custom_call.1} parent=1 // pred_region
      _
    $region29: #{tpu_custom_call.1} parent=1 // pred_fallthru
      _
    // Predicated region
    $region30: #{tpu_custom_call.1} parent=1 // pred_check
      _
    $region31: #{tpu_custom_call.1} parent=1 // pred_check_branch
      %77 = sbr.rel (0) target = $region33
    $region32: #{tpu_custom_call.1} parent=1 // pred_region
      %78 = dma.done [#allocation3], 256
    $region33: #{tpu_custom_call.1} parent=1 // pred_fallthru
      _
    // Predicated region
    $region34: #{tpu_custom_call.1} parent=1 // pred_check
      _
    $region35: #{tpu_custom_call.1} parent=1 // pred_check_branch
      %80 = sbr.rel (0) target = $region37
    $region36: #{tpu_custom_call.1} parent=1 // pred_region
      %81 = dma.done [#allocation6], 256
    $region37: #{tpu_custom_call.1} parent=1 // pred_fallthru
      _
    // Predicated region
    $region38: #{tpu_custom_call.1} parent=1 // pred_check
      _
    $region39: #{tpu_custom_call.1} parent=1 // pred_check_branch
      %83 = sbr.rel (0) target = $region41
    $region40: #{tpu_custom_call.1} parent=1 // pred_region
      %84 = dma.done [#allocation6], 16384
    $region41: #{tpu_custom_call.1} parent=1 // pred_fallthru
      _
    // Predicated region
    $region42: #{tpu_custom_call.1} parent=1 // pred_check
      _
    $region43: #{tpu_custom_call.1} parent=1 // pred_check_branch
      %86 = sbr.rel (0) target = $region45
    $region44: #{tpu_custom_call.1} parent=1 // pred_region
      %87 = dma.done [#allocation9], 16384
    $region45: #{tpu_custom_call.1} parent=1 // pred_fallthru
      _
    // Predicated region
    $region46: #{tpu_custom_call.1} parent=1 // pred_check
      _
    $region47: #{tpu_custom_call.1} parent=1 // pred_check_branch
      %89 = sbr.rel (0) target = $region49
    $region48: #{tpu_custom_call.1} parent=1 // pred_region
      %90 = dma.done [#allocation9], 16384
    $region49: #{tpu_custom_call.1} parent=1 // pred_fallthru
      _
    %v91 = vld [vmem:[#allocation2] sm:$0xff]
    %v92 = vld [vmem:[#allocation2 + $0x8] sm:$0xff]
    %v93 = vld [vmem:[#allocation5] sm:$0xff]
    %v94 = vld [vmem:[#allocation5 + $0x8] sm:$0xff]
    %v95 = vld [vmem:[#allocation7] sm:$0xff]
    %v96 = vld [vmem:[#allocation7 + $0x8] sm:$0xff]
    %v97 = vld [vmem:[#allocation7 + $0x10] sm:$0xff]
    %v98 = vld [vmem:[#allocation7 + $0x18] sm:$0xff]
    %v99 = vld [vmem:[#allocation7 + $0x20] sm:$0xff]
    %v100 = vld [vmem:[#allocation7 + $0x28] sm:$0xff]
    %v101 = vld [vmem:[#allocation7 + $0x30] sm:$0xff]
    %v102 = vld [vmem:[#allocation7 + $0x38] sm:$0xff]
    %v103 = vld [vmem:[#allocation7 + $0x40] sm:$0xff]
    %v104 = vld [vmem:[#allocation7 + $0x48] sm:$0xff]
    %v105 = vld [vmem:[#allocation7 + $0x50] sm:$0xff]
    %v106 = vld [vmem:[#allocation7 + $0x58] sm:$0xff]
    %v107 = vld [vmem:[#allocation7 + $0x60] sm:$0xff]
    %v108 = vld [vmem:[#allocation7 + $0x68] sm:$0xff]
    %v109 = vld [vmem:[#allocation7 + $0x70] sm:$0xff]
    %v110 = vld [vmem:[#allocation7 + $0x78] sm:$0xff]
    %v111 = vld [vmem:[#allocation7 + $0x80] sm:$0xff]
    %v112 = vld [vmem:[#allocation7 + $0x88] sm:$0xff]
    %v113 = vld [vmem:[#allocation7 + $0x90] sm:$0xff]
    %v114 = vld [vmem:[#allocation7 + $0x98] sm:$0xff]
    %v115 = vld [vmem:[#allocation7 + $0xa0] sm:$0xff]
    %v116 = vld [vmem:[#allocation7 + $0xa8] sm:$0xff]
    %v117 = vld [vmem:[#allocation7 + $0xb0] sm:$0xff]
    %v118 = vld [vmem:[#allocation7 + $0xb8] sm:$0xff]
    %v119 = vld [vmem:[#allocation7 + $0xc0] sm:$0xff]
    %v120 = vld [vmem:[#allocation7 + $0xc8] sm:$0xff]
    %v121 = vld [vmem:[#allocation7 + $0xd0] sm:$0xff]
    %v122 = vld [vmem:[#allocation7 + $0xd8] sm:$0xff]
    %v123 = vld [vmem:[#allocation7 + $0xe0] sm:$0xff]
    %v124 = vld [vmem:[#allocation7 + $0xe8] sm:$0xff]
    %v125 = vld [vmem:[#allocation7 + $0xf0] sm:$0xff]
    %v126 = vld [vmem:[#allocation7 + $0xf8] sm:$0xff]
    %v127 = vld [vmem:[#allocation7 + $0x100] sm:$0xff]
    %v128 = vld [vmem:[#allocation7 + $0x108] sm:$0xff]
    %v129 = vld [vmem:[#allocation7 + $0x110] sm:$0xff]
    %v130 = vld [vmem:[#allocation7 + $0x118] sm:$0xff]
    %v131 = vld [vmem:[#allocation7 + $0x120] sm:$0xff]
    %v132 = vld [vmem:[#allocation7 + $0x128] sm:$0xff]
    %v133 = vld [vmem:[#allocation7 + $0x130] sm:$0xff]
    %v134 = vld [vmem:[#allocation7 + $0x138] sm:$0xff]
    %v135 = vld [vmem:[#allocation7 + $0x140] sm:$0xff]
    %v136 = vld [vmem:[#allocation7 + $0x148] sm:$0xff]
    %v137 = vld [vmem:[#allocation7 + $0x150] sm:$0xff]
    %v138 = vld [vmem:[#allocation7 + $0x158] sm:$0xff]
    %v139 = vld [vmem:[#allocation7 + $0x160] sm:$0xff]
    %v140 = vld [vmem:[#allocation7 + $0x168] sm:$0xff]
    %v141 = vld [vmem:[#allocation7 + $0x170] sm:$0xff]
    %v142 = vld [vmem:[#allocation7 + $0x178] sm:$0xff]
    %v143 = vld [vmem:[#allocation7 + $0x180] sm:$0xff]
    %v144 = vld [vmem:[#allocation7 + $0x188] sm:$0xff]
    %v145 = vld [vmem:[#allocation7 + $0x190] sm:$0xff]
    %v146 = vld [vmem:[#allocation7 + $0x198] sm:$0xff]
    %v147 = vld [vmem:[#allocation7 + $0x1a0] sm:$0xff]
    %v148 = vld [vmem:[#allocation7 + $0x1a8] sm:$0xff]
    %v149 = vld [vmem:[#allocation7 + $0x1b0] sm:$0xff]
    %v150 = vld [vmem:[#allocation7 + $0x1b8] sm:$0xff]
    %v151 = vld [vmem:[#allocation7 + $0x1c0] sm:$0xff]
    %v152 = vld [vmem:[#allocation7 + $0x1c8] sm:$0xff]
    %v153 = vld [vmem:[#allocation7 + $0x1d0] sm:$0xff]
    %v154 = vld [vmem:[#allocation7 + $0x1d8] sm:$0xff]
    %v155 = vld [vmem:[#allocation7 + $0x1e0] sm:$0xff]
    %v156 = vld [vmem:[#allocation7 + $0x1e8] sm:$0xff]
    %v157 = vld [vmem:[#allocation7 + $0x1f0] sm:$0xff]
    %v158 = vld [vmem:[#allocation7 + $0x1f8] sm:$0xff]
    %v159 = vld [vmem:[#allocation7 + $0x200] sm:$0xff]
    %v160 = vld [vmem:[#allocation7 + $0x208] sm:$0xff]
    %v161 = vld [vmem:[#allocation7 + $0x210] sm:$0xff]
    %v162 = vld [vmem:[#allocation7 + $0x218] sm:$0xff]
    %v163 = vld [vmem:[#allocation7 + $0x220] sm:$0xff]
    %v164 = vld [vmem:[#allocation7 + $0x228] sm:$0xff]
    %v165 = vld [vmem:[#allocation7 + $0x230] sm:$0xff]
    %v166 = vld [vmem:[#allocation7 + $0x238] sm:$0xff]
    %v167 = vld [vmem:[#allocation7 + $0x240] sm:$0xff]
    %v168 = vld [vmem:[#allocation7 + $0x248] sm:$0xff]
    %v169 = vld [vmem:[#allocation7 + $0x250] sm:$0xff]
    %v170 = vld [vmem:[#allocation7 + $0x258] sm:$0xff]
    %v171 = vld [vmem:[#allocation7 + $0x260] sm:$0xff]
    %v172 = vld [vmem:[#allocation7 + $0x268] sm:$0xff]
    %v173 = vld [vmem:[#allocation7 + $0x270] sm:$0xff]
    %v174 = vld [vmem:[#allocation7 + $0x278] sm:$0xff]
    %v175 = vld [vmem:[#allocation7 + $0x280] sm:$0xff]
    %v176 = vld [vmem:[#allocation7 + $0x288] sm:$0xff]
    %v177 = vld [vmem:[#allocation7 + $0x290] sm:$0xff]
    %v178 = vld [vmem:[#allocation7 + $0x298] sm:$0xff]
    %v179 = vld [vmem:[#allocation7 + $0x2a0] sm:$0xff]
    %v180 = vld [vmem:[#allocation7 + $0x2a8] sm:$0xff]
    %v181 = vld [vmem:[#allocation7 + $0x2b0] sm:$0xff]
    %v182 = vld [vmem:[#allocation7 + $0x2b8] sm:$0xff]
    %v183 = vld [vmem:[#allocation7 + $0x2c0] sm:$0xff]
    %v184 = vld [vmem:[#allocation7 + $0x2c8] sm:$0xff]
    %v185 = vld [vmem:[#allocation7 + $0x2d0] sm:$0xff]
    %v186 = vld [vmem:[#allocation7 + $0x2d8] sm:$0xff]
    %v187 = vld [vmem:[#allocation7 + $0x2e0] sm:$0xff]
    %v188 = vld [vmem:[#allocation7 + $0x2e8] sm:$0xff]
    %v189 = vld [vmem:[#allocation7 + $0x2f0] sm:$0xff]
    %v190 = vld [vmem:[#allocation7 + $0x2f8] sm:$0xff]
    %v191 = vld [vmem:[#allocation7 + $0x300] sm:$0xff]
    %v192 = vld [vmem:[#allocation7 + $0x308] sm:$0xff]
    %v193 = vld [vmem:[#allocation7 + $0x310] sm:$0xff]
    %v194 = vld [vmem:[#allocation7 + $0x318] sm:$0xff]
    %v195 = vld [vmem:[#allocation7 + $0x320] sm:$0xff]
    %v196 = vld [vmem:[#allocation7 + $0x328] sm:$0xff]
    %v197 = vld [vmem:[#allocation7 + $0x330] sm:$0xff]
    %v198 = vld [vmem:[#allocation7 + $0x338] sm:$0xff]
    %v199 = vld [vmem:[#allocation7 + $0x340] sm:$0xff]
    %v200 = vld [vmem:[#allocation7 + $0x348] sm:$0xff]
    %v201 = vld [vmem:[#allocation7 + $0x350] sm:$0xff]
    %v202 = vld [vmem:[#allocation7 + $0x358] sm:$0xff]
    %v203 = vld [vmem:[#allocation7 + $0x360] sm:$0xff]
    %v204 = vld [vmem:[#allocation7 + $0x368] sm:$0xff]
    %v205 = vld [vmem:[#allocation7 + $0x370] sm:$0xff]
    %v206 = vld [vmem:[#allocation7 + $0x378] sm:$0xff]
    %v207 = vld [vmem:[#allocation7 + $0x380] sm:$0xff]
    %v208 = vld [vmem:[#allocation7 + $0x388] sm:$0xff]
    %v209 = vld [vmem:[#allocation7 + $0x390] sm:$0xff]
    %v210 = vld [vmem:[#allocation7 + $0x398] sm:$0xff]
    %v211 = vld [vmem:[#allocation7 + $0x3a0] sm:$0xff]
    %v212 = vld [vmem:[#allocation7 + $0x3a8] sm:$0xff]
    %v213 = vld [vmem:[#allocation7 + $0x3b0] sm:$0xff]
    %v214 = vld [vmem:[#allocation7 + $0x3b8] sm:$0xff]
    %v215 = vld [vmem:[#allocation7 + $0x3c0] sm:$0xff]
    %v216 = vld [vmem:[#allocation7 + $0x3c8] sm:$0xff]
    %v217 = vld [vmem:[#allocation7 + $0x3d0] sm:$0xff]
    %v218 = vld [vmem:[#allocation7 + $0x3d8] sm:$0xff]
    %v219 = vld [vmem:[#allocation7 + $0x3e0] sm:$0xff]
    %v220 = vld [vmem:[#allocation7 + $0x3e8] sm:$0xff]
    %v221 = vld [vmem:[#allocation7 + $0x3f0] sm:$0xff]
    %v222 = vld [vmem:[#allocation7 + $0x3f8] sm:$0xff]
    %v223 = vld [vmem:[#allocation8] sm:$0xff]
    %v224 = vld [vmem:[#allocation8 + $0x8] sm:$0xff]
    %v225 = vld [vmem:[#allocation8 + $0x10] sm:$0xff]
    %v226 = vld [vmem:[#allocation8 + $0x18] sm:$0xff]
    %v227 = vld [vmem:[#allocation8 + $0x20] sm:$0xff]
    %v228 = vld [vmem:[#allocation8 + $0x28] sm:$0xff]
    %v229 = vld [vmem:[#allocation8 + $0x30] sm:$0xff]
    %v230 = vld [vmem:[#allocation8 + $0x38] sm:$0xff]
    %v231 = vld [vmem:[#allocation8 + $0x40] sm:$0xff]
    %v232 = vld [vmem:[#allocation8 + $0x48] sm:$0xff]
    %v233 = vld [vmem:[#allocation8 + $0x50] sm:$0xff]
    %v234 = vld [vmem:[#allocation8 + $0x58] sm:$0xff]
    %v235 = vld [vmem:[#allocation8 + $0x60] sm:$0xff]
    %v236 = vld [vmem:[#allocation8 + $0x68] sm:$0xff]
    %v237 = vld [vmem:[#allocation8 + $0x70] sm:$0xff]
    %v238 = vld [vmem:[#allocation8 + $0x78] sm:$0xff]
    %v239 = vld [vmem:[#allocation8 + $0x80] sm:$0xff]
    %v240 = vld [vmem:[#allocation8 + $0x88] sm:$0xff]
    %v241 = vld [vmem:[#allocation8 + $0x90] sm:$0xff]
    %v242 = vld [vmem:[#allocation8 + $0x98] sm:$0xff]
    %v243 = vld [vmem:[#allocation8 + $0xa0] sm:$0xff]
    %v244 = vld [vmem:[#allocation8 + $0xa8] sm:$0xff]
    %v245 = vld [vmem:[#allocation8 + $0xb0] sm:$0xff]
    %v246 = vld [vmem:[#allocation8 + $0xb8] sm:$0xff]
    %v247 = vld [vmem:[#allocation8 + $0xc0] sm:$0xff]
    %v248 = vld [vmem:[#allocation8 + $0xc8] sm:$0xff]
    %v249 = vld [vmem:[#allocation8 + $0xd0] sm:$0xff]
    %v250 = vld [vmem:[#allocation8 + $0xd8] sm:$0xff]
    %v251 = vld [vmem:[#allocation8 + $0xe0] sm:$0xff]
    %v252 = vld [vmem:[#allocation8 + $0xe8] sm:$0xff]
    %v253 = vld [vmem:[#allocation8 + $0xf0] sm:$0xff]
    %v254 = vld [vmem:[#allocation8 + $0xf8] sm:$0xff]
    %v255 = vld [vmem:[#allocation8 + $0x100] sm:$0xff]
    %v256 = vld [vmem:[#allocation8 + $0x108] sm:$0xff]
    %v257 = vld [vmem:[#allocation8 + $0x110] sm:$0xff]
    %v258 = vld [vmem:[#allocation8 + $0x118] sm:$0xff]
    %v259 = vld [vmem:[#allocation8 + $0x120] sm:$0xff]
    %v260 = vld [vmem:[#allocation8 + $0x128] sm:$0xff]
    %v261 = vld [vmem:[#allocation8 + $0x130] sm:$0xff]
    %v262 = vld [vmem:[#allocation8 + $0x138] sm:$0xff]
    %v263 = vld [vmem:[#allocation8 + $0x140] sm:$0xff]
    %v264 = vld [vmem:[#allocation8 + $0x148] sm:$0xff]
    %v265 = vld [vmem:[#allocation8 + $0x150] sm:$0xff]
    %v266 = vld [vmem:[#allocation8 + $0x158] sm:$0xff]
    %v267 = vld [vmem:[#allocation8 + $0x160] sm:$0xff]
    %v268 = vld [vmem:[#allocation8 + $0x168] sm:$0xff]
    %v269 = vld [vmem:[#allocation8 + $0x170] sm:$0xff]
    %v270 = vld [vmem:[#allocation8 + $0x178] sm:$0xff]
    %v271 = vld [vmem:[#allocation8 + $0x180] sm:$0xff]
    %v272 = vld [vmem:[#allocation8 + $0x188] sm:$0xff]
    %v273 = vld [vmem:[#allocation8 + $0x190] sm:$0xff]
    %v274 = vld [vmem:[#allocation8 + $0x198] sm:$0xff]
    %v275 = vld [vmem:[#allocation8 + $0x1a0] sm:$0xff]
    %v276 = vld [vmem:[#allocation8 + $0x1a8] sm:$0xff]
    %v277 = vld [vmem:[#allocation8 + $0x1b0] sm:$0xff]
    %v278 = vld [vmem:[#allocation8 + $0x1b8] sm:$0xff]
    %v279 = vld [vmem:[#allocation8 + $0x1c0] sm:$0xff]
    %v280 = vld [vmem:[#allocation8 + $0x1c8] sm:$0xff]
    %v281 = vld [vmem:[#allocation8 + $0x1d0] sm:$0xff]
    %v282 = vld [vmem:[#allocation8 + $0x1d8] sm:$0xff]
    %v283 = vld [vmem:[#allocation8 + $0x1e0] sm:$0xff]
    %v284 = vld [vmem:[#allocation8 + $0x1e8] sm:$0xff]
    %v285 = vld [vmem:[#allocation8 + $0x1f0] sm:$0xff]
    %v286 = vld [vmem:[#allocation8 + $0x1f8] sm:$0xff]
    %v287 = vld [vmem:[#allocation8 + $0x200] sm:$0xff]
    %v288 = vld [vmem:[#allocation8 + $0x208] sm:$0xff]
    %v289 = vld [vmem:[#allocation8 + $0x210] sm:$0xff]
    %v290 = vld [vmem:[#allocation8 + $0x218] sm:$0xff]
    %v291 = vld [vmem:[#allocation8 + $0x220] sm:$0xff]
    %v292 = vld [vmem:[#allocation8 + $0x228] sm:$0xff]
    %v293 = vld [vmem:[#allocation8 + $0x230] sm:$0xff]
    %v294 = vld [vmem:[#allocation8 + $0x238] sm:$0xff]
    %v295 = vld [vmem:[#allocation8 + $0x240] sm:$0xff]
    %v296 = vld [vmem:[#allocation8 + $0x248] sm:$0xff]
    %v297 = vld [vmem:[#allocation8 + $0x250] sm:$0xff]
    %v298 = vld [vmem:[#allocation8 + $0x258] sm:$0xff]
    %v299 = vld [vmem:[#allocation8 + $0x260] sm:$0xff]
    %v300 = vld [vmem:[#allocation8 + $0x268] sm:$0xff]
    %v301 = vld [vmem:[#allocation8 + $0x270] sm:$0xff]
    %v302 = vld [vmem:[#allocation8 + $0x278] sm:$0xff]
    %v303 = vld [vmem:[#allocation8 + $0x280] sm:$0xff]
    %v304 = vld [vmem:[#allocation8 + $0x288] sm:$0xff]
    %v305 = vld [vmem:[#allocation8 + $0x290] sm:$0xff]
    %v306 = vld [vmem:[#allocation8 + $0x298] sm:$0xff]
    %v307 = vld [vmem:[#allocation8 + $0x2a0] sm:$0xff]
    %v308 = vld [vmem:[#allocation8 + $0x2a8] sm:$0xff]
    %v309 = vld [vmem:[#allocation8 + $0x2b0] sm:$0xff]
    %v310 = vld [vmem:[#allocation8 + $0x2b8] sm:$0xff]
    %v311 = vld [vmem:[#allocation8 + $0x2c0] sm:$0xff]
    %v312 = vld [vmem:[#allocation8 + $0x2c8] sm:$0xff]
    %v313 = vld [vmem:[#allocation8 + $0x2d0] sm:$0xff]
    %v314 = vld [vmem:[#allocation8 + $0x2d8] sm:$0xff]
    %v315 = vld [vmem:[#allocation8 + $0x2e0] sm:$0xff]
    %v316 = vld [vmem:[#allocation8 + $0x2e8] sm:$0xff]
    %v317 = vld [vmem:[#allocation8 + $0x2f0] sm:$0xff]
    %v318 = vld [vmem:[#allocation8 + $0x2f8] sm:$0xff]
    %v319 = vld [vmem:[#allocation8 + $0x300] sm:$0xff]
    %v320 = vld [vmem:[#allocation8 + $0x308] sm:$0xff]
    %v321 = vld [vmem:[#allocation8 + $0x310] sm:$0xff]
    %v322 = vld [vmem:[#allocation8 + $0x318] sm:$0xff]
    %v323 = vld [vmem:[#allocation8 + $0x320] sm:$0xff]
    %v324 = vld [vmem:[#allocation8 + $0x328] sm:$0xff]
    %v325 = vld [vmem:[#allocation8 + $0x330] sm:$0xff]
    %v326 = vld [vmem:[#allocation8 + $0x338] sm:$0xff]
    %v327 = vld [vmem:[#allocation8 + $0x340] sm:$0xff]
    %v328 = vld [vmem:[#allocation8 + $0x348] sm:$0xff]
    %v329 = vld [vmem:[#allocation8 + $0x350] sm:$0xff]
    %v330 = vld [vmem:[#allocation8 + $0x358] sm:$0xff]
    %v331 = vld [vmem:[#allocation8 + $0x360] sm:$0xff]
    %v332 = vld [vmem:[#allocation8 + $0x368] sm:$0xff]
    %v333 = vld [vmem:[#allocation8 + $0x370] sm:$0xff]
    %v334 = vld [vmem:[#allocation8 + $0x378] sm:$0xff]
    %v335 = vld [vmem:[#allocation8 + $0x380] sm:$0xff]
    %v336 = vld [vmem:[#allocation8 + $0x388] sm:$0xff]
    %v337 = vld [vmem:[#allocation8 + $0x390] sm:$0xff]
    %v338 = vld [vmem:[#allocation8 + $0x398] sm:$0xff]
    %v339 = vld [vmem:[#allocation8 + $0x3a0] sm:$0xff]
    %v340 = vld [vmem:[#allocation8 + $0x3a8] sm:$0xff]
    %v341 = vld [vmem:[#allocation8 + $0x3b0] sm:$0xff]
    %v342 = vld [vmem:[#allocation8 + $0x3b8] sm:$0xff]
    %v343 = vld [vmem:[#allocation8 + $0x3c0] sm:$0xff]
    %v344 = vld [vmem:[#allocation8 + $0x3c8] sm:$0xff]
    %v345 = vld [vmem:[#allocation8 + $0x3d0] sm:$0xff]
    %v346 = vld [vmem:[#allocation8 + $0x3d8] sm:$0xff]
    %v347 = vld [vmem:[#allocation8 + $0x3e0] sm:$0xff]
    %v348 = vld [vmem:[#allocation8 + $0x3e8] sm:$0xff]
    %v349 = vld [vmem:[#allocation8 + $0x3f0] sm:$0xff]
    %v350 = vld [vmem:[#allocation8 + $0x3f8] sm:$0xff]
    %v353 = vcombine.high %v93, %v93
    %v355 = vunpack.c.l.s4 1983009808
    %v356 = vunpack.c.0.s8 %v355
    %v357 = vlaneseq
    %v358 = vshrl.u32 %v357, 7
    %v359 = vsub.s32 %v356, %v358
    %v360 = vrot.slane %v93, %v359
    %v362 = vunpack.c.l.s4 1983009808
    %v363 = vunpack.c.0.s8 %v362
    %v364 = vlaneseq
    %v365 = vshrl.u32 %v364, 7
    %v366 = vsub.s32 %v363, %v365
    %v367 = vrot.slane %v353, %v366
    %v368 = vcombine.high %v360, %v360
    %v369 = vcombine.high %v367, %v367
    %v370 = vcombine.high %v94, %v94
    %v372 = vunpack.c.l.s4 1983009808
    %v373 = vunpack.c.0.s8 %v372
    %v374 = vlaneseq
    %v375 = vshrl.u32 %v374, 7
    %v376 = vsub.s32 %v373, %v375
    %v377 = vrot.slane %v94, %v376
    %v379 = vunpack.c.l.s4 1983009808
    %v380 = vunpack.c.0.s8 %v379
    %v381 = vlaneseq
    %v382 = vshrl.u32 %v381, 7
    %v383 = vsub.s32 %v380, %v382
    %v384 = vrot.slane %v370, %v383
    %v385 = vcombine.high %v377, %v377
    %v386 = vcombine.high %v384, %v384
    %395 = vmatprep.subr.mxu0 0.0
    %396 = vmatpush1.msra.mxu0 %v223
    %397 = vmatprep.subr.mxu0 0.0
    %398 = vmatpush1.msra.mxu0 %v224
    %399 = vmatprep.subr.mxu0 0.0
    %400 = vmatpush1.msra.mxu0 %v225
    %401 = vmatprep.subr.mxu0 0.0
    %402 = vmatpush1.msra.mxu0 %v226
    %403 = vmatprep.subr.mxu0 0.0
    %404 = vmatpush1.msra.mxu0 %v227
    %405 = vmatprep.subr.mxu0 0.0
    %406 = vmatpush1.msra.mxu0 %v228
    %407 = vmatprep.subr.mxu0 0.0
    %408 = vmatpush1.msra.mxu0 %v229
    %409 = vmatprep.subr.mxu0 0.0
    %410 = vmatpush1.msra.mxu0 %v230
    %411 = vmatprep.subr.mxu0 0.0
    %412 = vmatpush1.msra.mxu0 %v231
    %413 = vmatprep.subr.mxu0 0.0
    %414 = vmatpush1.msra.mxu0 %v232
    %415 = vmatprep.subr.mxu0 0.0
    %416 = vmatpush1.msra.mxu0 %v233
    %417 = vmatprep.subr.mxu0 0.0
    %418 = vmatpush1.msra.mxu0 %v234
    %419 = vmatprep.subr.mxu0 0.0
    %420 = vmatpush1.msra.mxu0 %v235
    %421 = vmatprep.subr.mxu0 0.0
    %422 = vmatpush1.msra.mxu0 %v236
    %423 = vmatprep.subr.mxu0 0.0
    %424 = vmatpush1.msra.mxu0 %v237
    %425 = vmatprep.subr.mxu0 0.0
    %426 = vmatpush1.msra.mxu0 %v238
    %427 = vmatprep.subr.mxu0 0.0
    %428 = vmatpush1.msra.mxu0 %v239
    %429 = vmatprep.subr.mxu0 0.0
    %430 = vmatpush1.msra.mxu0 %v240
    %431 = vmatprep.subr.mxu0 0.0
    %432 = vmatpush1.msra.mxu0 %v241
    %433 = vmatprep.subr.mxu0 0.0
    %434 = vmatpush1.msra.mxu0 %v242
    %435 = vmatprep.subr.mxu0 0.0
    %436 = vmatpush1.msra.mxu0 %v243
    %437 = vmatprep.subr.mxu0 0.0
    %438 = vmatpush1.msra.mxu0 %v244
    %439 = vmatprep.subr.mxu0 0.0
    %440 = vmatpush1.msra.mxu0 %v245
    %441 = vmatprep.subr.mxu0 0.0
    %442 = vmatpush1.msra.mxu0 %v246
    %443 = vmatprep.subr.mxu0 0.0
    %444 = vmatpush1.msra.mxu0 %v247
    %445 = vmatprep.subr.mxu0 0.0
    %446 = vmatpush1.msra.mxu0 %v248
    %447 = vmatprep.subr.mxu0 0.0
    %448 = vmatpush1.msra.mxu0 %v249
    %449 = vmatprep.subr.mxu0 0.0
    %450 = vmatpush1.msra.mxu0 %v250
    %451 = vmatprep.subr.mxu0 0.0
    %452 = vmatpush1.msra.mxu0 %v251
    %453 = vmatprep.subr.mxu0 0.0
    %454 = vmatpush1.msra.mxu0 %v252
    %455 = vmatprep.subr.mxu0 0.0
    %456 = vmatpush1.msra.mxu0 %v253
    %457 = vmatprep.subr.mxu0 0.0
    %458 = vmatpush1.msra.mxu0 %v254
    %459 = vmatprep.mubr.f32.mxu0 %v368
    %460 = vmatmul.mubr.f32.gmra.mrb[0].mxu0 %v360
    %v461 = vpop.f32.mrb[0].mxu0
    %v462 = vadd.f32 0.0, %v461
    %v463 = vpop.f32.mrb[0].mxu0
    %464 = vdwg.mxu0
    %465 = vmatprep.subr.mxu0 0.0
    %466 = vmatpush1.msra.mxu0 %v255
    %467 = vmatprep.subr.mxu0 0.0
    %468 = vmatpush1.msra.mxu0 %v256
    %469 = vmatprep.subr.mxu0 0.0
    %470 = vmatpush1.msra.mxu0 %v257
    %471 = vmatprep.subr.mxu0 0.0
    %472 = vmatpush1.msra.mxu0 %v258
    %473 = vmatprep.subr.mxu0 0.0
    %474 = vmatpush1.msra.mxu0 %v259
    %475 = vmatprep.subr.mxu0 0.0
    %476 = vmatpush1.msra.mxu0 %v260
    %477 = vmatprep.subr.mxu0 0.0
    %478 = vmatpush1.msra.mxu0 %v261
    %479 = vmatprep.subr.mxu0 0.0
    %480 = vmatpush1.msra.mxu0 %v262
    %481 = vmatprep.subr.mxu0 0.0
    %482 = vmatpush1.msra.mxu0 %v263
    %483 = vmatprep.subr.mxu0 0.0
    %484 = vmatpush1.msra.mxu0 %v264
    %485 = vmatprep.subr.mxu0 0.0
    %486 = vmatpush1.msra.mxu0 %v265
    %487 = vmatprep.subr.mxu0 0.0
    %488 = vmatpush1.msra.mxu0 %v266
    %489 = vmatprep.subr.mxu0 0.0
    %490 = vmatpush1.msra.mxu0 %v267
    %491 = vmatprep.subr.mxu0 0.0
    %492 = vmatpush1.msra.mxu0 %v268
    %493 = vmatprep.subr.mxu0 0.0
    %494 = vmatpush1.msra.mxu0 %v269
    %495 = vmatprep.subr.mxu0 0.0
    %496 = vmatpush1.msra.mxu0 %v270
    %497 = vmatprep.subr.mxu0 0.0
    %498 = vmatpush1.msra.mxu0 %v271
    %499 = vmatprep.subr.mxu0 0.0
    %500 = vmatpush1.msra.mxu0 %v272
    %501 = vmatprep.subr.mxu0 0.0
    %502 = vmatpush1.msra.mxu0 %v273
    %503 = vmatprep.subr.mxu0 0.0
    %504 = vmatpush1.msra.mxu0 %v274
    %505 = vmatprep.subr.mxu0 0.0
    %506 = vmatpush1.msra.mxu0 %v275
    %507 = vmatprep.subr.mxu0 0.0
    %508 = vmatpush1.msra.mxu0 %v276
    %509 = vmatprep.subr.mxu0 0.0
    %510 = vmatpush1.msra.mxu0 %v277
    %511 = vmatprep.subr.mxu0 0.0
    %512 = vmatpush1.msra.mxu0 %v278
    %513 = vmatprep.subr.mxu0 0.0
    %514 = vmatpush1.msra.mxu0 %v279
    %515 = vmatprep.subr.mxu0 0.0
    %516 = vmatpush1.msra.mxu0 %v280
    %517 = vmatprep.subr.mxu0 0.0
    %518 = vmatpush1.msra.mxu0 %v281
    %519 = vmatprep.subr.mxu0 0.0
    %520 = vmatpush1.msra.mxu0 %v282
    %521 = vmatprep.subr.mxu0 0.0
    %522 = vmatpush1.msra.mxu0 %v283
    %523 = vmatprep.subr.mxu0 0.0
    %524 = vmatpush1.msra.mxu0 %v284
    %525 = vmatprep.subr.mxu0 0.0
    %526 = vmatpush1.msra.mxu0 %v285
    %527 = vmatprep.subr.mxu0 0.0
    %528 = vmatpush1.msra.mxu0 %v286
    %529 = vmatprep.mubr.f32.mxu0 %v369
    %530 = vmatmul.mubr.f32.gmra.mrb[0].mxu0 %v367
    %v531 = vpop.f32.mrb[0].mxu0
    %v532 = vadd.f32 %v462, %v531
    %v533 = vpop.f32.mrb[0].mxu0
    %534 = vdwg.mxu0
    %535 = vmatprep.subr.mxu0 0.0
    %536 = vmatpush1.msra.mxu0 %v287
    %537 = vmatprep.subr.mxu0 0.0
    %538 = vmatpush1.msra.mxu0 %v288
    %539 = vmatprep.subr.mxu0 0.0
    %540 = vmatpush1.msra.mxu0 %v289
    %541 = vmatprep.subr.mxu0 0.0
    %542 = vmatpush1.msra.mxu0 %v290
    %543 = vmatprep.subr.mxu0 0.0
    %544 = vmatpush1.msra.mxu0 %v291
    %545 = vmatprep.subr.mxu0 0.0
    %546 = vmatpush1.msra.mxu0 %v292
    %547 = vmatprep.subr.mxu0 0.0
    %548 = vmatpush1.msra.mxu0 %v293
    %549 = vmatprep.subr.mxu0 0.0
    %550 = vmatpush1.msra.mxu0 %v294
    %551 = vmatprep.subr.mxu0 0.0
    %552 = vmatpush1.msra.mxu0 %v295
    %553 = vmatprep.subr.mxu0 0.0
    %554 = vmatpush1.msra.mxu0 %v296
    %555 = vmatprep.subr.mxu0 0.0
    %556 = vmatpush1.msra.mxu0 %v297
    %557 = vmatprep.subr.mxu0 0.0
    %558 = vmatpush1.msra.mxu0 %v298
    %559 = vmatprep.subr.mxu0 0.0
    %560 = vmatpush1.msra.mxu0 %v299
    %561 = vmatprep.subr.mxu0 0.0
    %562 = vmatpush1.msra.mxu0 %v300
    %563 = vmatprep.subr.mxu0 0.0
    %564 = vmatpush1.msra.mxu0 %v301
    %565 = vmatprep.subr.mxu0 0.0
    %566 = vmatpush1.msra.mxu0 %v302
    %567 = vmatprep.subr.mxu0 0.0
    %568 = vmatpush1.msra.mxu0 %v303
    %569 = vmatprep.subr.mxu0 0.0
    %570 = vmatpush1.msra.mxu0 %v304
    %571 = vmatprep.subr.mxu0 0.0
    %572 = vmatpush1.msra.mxu0 %v305
    %573 = vmatprep.subr.mxu0 0.0
    %574 = vmatpush1.msra.mxu0 %v306
    %575 = vmatprep.subr.mxu0 0.0
    %576 = vmatpush1.msra.mxu0 %v307
    %577 = vmatprep.subr.mxu0 0.0
    %578 = vmatpush1.msra.mxu0 %v308
    %579 = vmatprep.subr.mxu0 0.0
    %580 = vmatpush1.msra.mxu0 %v309
    %581 = vmatprep.subr.mxu0 0.0
    %582 = vmatpush1.msra.mxu0 %v310
    %583 = vmatprep.subr.mxu0 0.0
    %584 = vmatpush1.msra.mxu0 %v311
    %585 = vmatprep.subr.mxu0 0.0
    %586 = vmatpush1.msra.mxu0 %v312
    %587 = vmatprep.subr.mxu0 0.0
    %588 = vmatpush1.msra.mxu0 %v313
    %589 = vmatprep.subr.mxu0 0.0
    %590 = vmatpush1.msra.mxu0 %v314
    %591 = vmatprep.subr.mxu0 0.0
    %592 = vmatpush1.msra.mxu0 %v315
    %593 = vmatprep.subr.mxu0 0.0
    %594 = vmatpush1.msra.mxu0 %v316
    %595 = vmatprep.subr.mxu0 0.0
    %596 = vmatpush1.msra.mxu0 %v317
    %597 = vmatprep.subr.mxu0 0.0
    %598 = vmatpush1.msra.mxu0 %v318
    %599 = vmatprep.mubr.f32.mxu0 %v385
    %600 = vmatmul.mubr.f32.gmra.mrb[0].mxu0 %v377
    %v601 = vpop.f32.mrb[0].mxu0
    %v602 = vadd.f32 %v532, %v601
    %v603 = vpop.f32.mrb[0].mxu0
    %604 = vdwg.mxu0
    %605 = vmatprep.subr.mxu0 0.0
    %606 = vmatpush1.msra.mxu0 %v319
    %607 = vmatprep.subr.mxu0 0.0
    %608 = vmatpush1.msra.mxu0 %v320
    %609 = vmatprep.subr.mxu0 0.0
    %610 = vmatpush1.msra.mxu0 %v321
    %611 = vmatprep.subr.mxu0 0.0
    %612 = vmatpush1.msra.mxu0 %v322
    %613 = vmatprep.subr.mxu0 0.0
    %614 = vmatpush1.msra.mxu0 %v323
    %615 = vmatprep.subr.mxu0 0.0
    %616 = vmatpush1.msra.mxu0 %v324
    %617 = vmatprep.subr.mxu0 0.0
    %618 = vmatpush1.msra.mxu0 %v325
    %619 = vmatprep.subr.mxu0 0.0
    %620 = vmatpush1.msra.mxu0 %v326
    %621 = vmatprep.subr.mxu0 0.0
    %622 = vmatpush1.msra.mxu0 %v327
    %623 = vmatprep.subr.mxu0 0.0
    %624 = vmatpush1.msra.mxu0 %v328
    %625 = vmatprep.subr.mxu0 0.0
    %626 = vmatpush1.msra.mxu0 %v329
    %627 = vmatprep.subr.mxu0 0.0
    %628 = vmatpush1.msra.mxu0 %v330
    %629 = vmatprep.subr.mxu0 0.0
    %630 = vmatpush1.msra.mxu0 %v331
    %631 = vmatprep.subr.mxu0 0.0
    %632 = vmatpush1.msra.mxu0 %v332
    %633 = vmatprep.subr.mxu0 0.0
    %634 = vmatpush1.msra.mxu0 %v333
    %635 = vmatprep.subr.mxu0 0.0
    %636 = vmatpush1.msra.mxu0 %v334
    %637 = vmatprep.subr.mxu0 0.0
    %638 = vmatpush1.msra.mxu0 %v335
    %639 = vmatprep.subr.mxu0 0.0
    %640 = vmatpush1.msra.mxu0 %v336
    %641 = vmatprep.subr.mxu0 0.0
    %642 = vmatpush1.msra.mxu0 %v337
    %643 = vmatprep.subr.mxu0 0.0
    %644 = vmatpush1.msra.mxu0 %v338
    %645 = vmatprep.subr.mxu0 0.0
    %646 = vmatpush1.msra.mxu0 %v339
    %647 = vmatprep.subr.mxu0 0.0
    %648 = vmatpush1.msra.mxu0 %v340
    %649 = vmatprep.subr.mxu0 0.0
    %650 = vmatpush1.msra.mxu0 %v341
    %651 = vmatprep.subr.mxu0 0.0
    %652 = vmatpush1.msra.mxu0 %v342
    %653 = vmatprep.subr.mxu0 0.0
    %654 = vmatpush1.msra.mxu0 %v343
    %655 = vmatprep.subr.mxu0 0.0
    %656 = vmatpush1.msra.mxu0 %v344
    %657 = vmatprep.subr.mxu0 0.0
    %658 = vmatpush1.msra.mxu0 %v345
    %659 = vmatprep.subr.mxu0 0.0
    %660 = vmatpush1.msra.mxu0 %v346
    %661 = vmatprep.subr.mxu0 0.0
    %662 = vmatpush1.msra.mxu0 %v347
    %663 = vmatprep.subr.mxu0 0.0
    %664 = vmatpush1.msra.mxu0 %v348
    %665 = vmatprep.subr.mxu0 0.0
    %666 = vmatpush1.msra.mxu0 %v349
    %667 = vmatprep.subr.mxu0 0.0
    %668 = vmatpush1.msra.mxu0 %v350
    %669 = vmatprep.mubr.f32.mxu0 %v386
    %670 = vmatmul.mubr.f32.gmra.mrb[0].mxu0 %v384
    %v671 = vpop.f32.mrb[0].mxu0
    %v672 = vadd.f32 %v602, %v671
    %v673 = vpop.f32.mrb[0].mxu0
    %674 = vdwg.mxu0
    %v677 = vcombine.high %v91, %v91
    %v679 = vunpack.c.l.s4 1983009808
    %v680 = vunpack.c.0.s8 %v679
    %v681 = vlaneseq
    %v682 = vshrl.u32 %v681, 7
    %v683 = vsub.s32 %v680, %v682
    %v684 = vrot.slane %v91, %v683
    %v686 = vunpack.c.l.s4 1983009808
    %v687 = vunpack.c.0.s8 %v686
    %v688 = vlaneseq
    %v689 = vshrl.u32 %v688, 7
    %v690 = vsub.s32 %v687, %v689
    %v691 = vrot.slane %v677, %v690
    %v692 = vcombine.high %v684, %v684
    %v693 = vcombine.high %v691, %v691
    %v694 = vcombine.high %v92, %v92
    %v696 = vunpack.c.l.s4 1983009808
    %v697 = vunpack.c.0.s8 %v696
    %v698 = vlaneseq
    %v699 = vshrl.u32 %v698, 7
    %v700 = vsub.s32 %v697, %v699
    %v701 = vrot.slane %v92, %v700
    %v703 = vunpack.c.l.s4 1983009808
    %v704 = vunpack.c.0.s8 %v703
    %v705 = vlaneseq
    %v706 = vshrl.u32 %v705, 7
    %v707 = vsub.s32 %v704, %v706
    %v708 = vrot.slane %v694, %v707
    %v709 = vcombine.high %v701, %v701
    %v710 = vcombine.high %v708, %v708
    %719 = vmatprep.subr.mxu0 0.0
    %720 = vmatpush1.msra.mxu0 %v95
    %721 = vmatprep.subr.mxu0 0.0
    %722 = vmatpush1.msra.mxu0 %v96
    %723 = vmatprep.subr.mxu0 0.0
    %724 = vmatpush1.msra.mxu0 %v97
    %725 = vmatprep.subr.mxu0 0.0
    %726 = vmatpush1.msra.mxu0 %v98
    %727 = vmatprep.subr.mxu0 0.0
    %728 = vmatpush1.msra.mxu0 %v99
    %729 = vmatprep.subr.mxu0 0.0
    %730 = vmatpush1.msra.mxu0 %v100
    %731 = vmatprep.subr.mxu0 0.0
    %732 = vmatpush1.msra.mxu0 %v101
    %733 = vmatprep.subr.mxu0 0.0
    %734 = vmatpush1.msra.mxu0 %v102
    %735 = vmatprep.subr.mxu0 0.0
    %736 = vmatpush1.msra.mxu0 %v103
    %737 = vmatprep.subr.mxu0 0.0
    %738 = vmatpush1.msra.mxu0 %v104
    %739 = vmatprep.subr.mxu0 0.0
    %740 = vmatpush1.msra.mxu0 %v105
    %741 = vmatprep.subr.mxu0 0.0
    %742 = vmatpush1.msra.mxu0 %v106
    %743 = vmatprep.subr.mxu0 0.0
    %744 = vmatpush1.msra.mxu0 %v107
    %745 = vmatprep.subr.mxu0 0.0
    %746 = vmatpush1.msra.mxu0 %v108
    %747 = vmatprep.subr.mxu0 0.0
    %748 = vmatpush1.msra.mxu0 %v109
    %749 = vmatprep.subr.mxu0 0.0
    %750 = vmatpush1.msra.mxu0 %v110
    %751 = vmatprep.subr.mxu0 0.0
    %752 = vmatpush1.msra.mxu0 %v111
    %753 = vmatprep.subr.mxu0 0.0
    %754 = vmatpush1.msra.mxu0 %v112
    %755 = vmatprep.subr.mxu0 0.0
    %756 = vmatpush1.msra.mxu0 %v113
    %757 = vmatprep.subr.mxu0 0.0
    %758 = vmatpush1.msra.mxu0 %v114
    %759 = vmatprep.subr.mxu0 0.0
    %760 = vmatpush1.msra.mxu0 %v115
    %761 = vmatprep.subr.mxu0 0.0
    %762 = vmatpush1.msra.mxu0 %v116
    %763 = vmatprep.subr.mxu0 0.0
    %764 = vmatpush1.msra.mxu0 %v117
    %765 = vmatprep.subr.mxu0 0.0
    %766 = vmatpush1.msra.mxu0 %v118
    %767 = vmatprep.subr.mxu0 0.0
    %768 = vmatpush1.msra.mxu0 %v119
    %769 = vmatprep.subr.mxu0 0.0
    %770 = vmatpush1.msra.mxu0 %v120
    %771 = vmatprep.subr.mxu0 0.0
    %772 = vmatpush1.msra.mxu0 %v121
    %773 = vmatprep.subr.mxu0 0.0
    %774 = vmatpush1.msra.mxu0 %v122
    %775 = vmatprep.subr.mxu0 0.0
    %776 = vmatpush1.msra.mxu0 %v123
    %777 = vmatprep.subr.mxu0 0.0
    %778 = vmatpush1.msra.mxu0 %v124
    %779 = vmatprep.subr.mxu0 0.0
    %780 = vmatpush1.msra.mxu0 %v125
    %781 = vmatprep.subr.mxu0 0.0
    %782 = vmatpush1.msra.mxu0 %v126
    %783 = vmatprep.mubr.f32.mxu0 %v692
    %784 = vmatmul.mubr.f32.gmra.mrb[0].mxu0 %v684
    %v785 = vpop.f32.mrb[0].mxu0
    %v786 = vadd.f32 %v672, %v785
    %v787 = vpop.f32.mrb[0].mxu0
    %788 = vdwg.mxu0
    %789 = vmatprep.subr.mxu0 0.0
    %790 = vmatpush1.msra.mxu0 %v127
    %791 = vmatprep.subr.mxu0 0.0
    %792 = vmatpush1.msra.mxu0 %v128
    %793 = vmatprep.subr.mxu0 0.0
    %794 = vmatpush1.msra.mxu0 %v129
    %795 = vmatprep.subr.mxu0 0.0
    %796 = vmatpush1.msra.mxu0 %v130
    %797 = vmatprep.subr.mxu0 0.0
    %798 = vmatpush1.msra.mxu0 %v131
    %799 = vmatprep.subr.mxu0 0.0
    %800 = vmatpush1.msra.mxu0 %v132
    %801 = vmatprep.subr.mxu0 0.0
    %802 = vmatpush1.msra.mxu0 %v133
    %803 = vmatprep.subr.mxu0 0.0
    %804 = vmatpush1.msra.mxu0 %v134
    %805 = vmatprep.subr.mxu0 0.0
    %806 = vmatpush1.msra.mxu0 %v135
    %807 = vmatprep.subr.mxu0 0.0
    %808 = vmatpush1.msra.mxu0 %v136
    %809 = vmatprep.subr.mxu0 0.0
    %810 = vmatpush1.msra.mxu0 %v137
    %811 = vmatprep.subr.mxu0 0.0
    %812 = vmatpush1.msra.mxu0 %v138
    %813 = vmatprep.subr.mxu0 0.0
    %814 = vmatpush1.msra.mxu0 %v139
    %815 = vmatprep.subr.mxu0 0.0
    %816 = vmatpush1.msra.mxu0 %v140
    %817 = vmatprep.subr.mxu0 0.0
    %818 = vmatpush1.msra.mxu0 %v141
    %819 = vmatprep.subr.mxu0 0.0
    %820 = vmatpush1.msra.mxu0 %v142
    %821 = vmatprep.subr.mxu0 0.0
    %822 = vmatpush1.msra.mxu0 %v143
    %823 = vmatprep.subr.mxu0 0.0
    %824 = vmatpush1.msra.mxu0 %v144
    %825 = vmatprep.subr.mxu0 0.0
    %826 = vmatpush1.msra.mxu0 %v145
    %827 = vmatprep.subr.mxu0 0.0
    %828 = vmatpush1.msra.mxu0 %v146
    %829 = vmatprep.subr.mxu0 0.0
    %830 = vmatpush1.msra.mxu0 %v147
    %831 = vmatprep.subr.mxu0 0.0
    %832 = vmatpush1.msra.mxu0 %v148
    %833 = vmatprep.subr.mxu0 0.0
    %834 = vmatpush1.msra.mxu0 %v149
    %835 = vmatprep.subr.mxu0 0.0
    %836 = vmatpush1.msra.mxu0 %v150
    %837 = vmatprep.subr.mxu0 0.0
    %838 = vmatpush1.msra.mxu0 %v151
    %839 = vmatprep.subr.mxu0 0.0
    %840 = vmatpush1.msra.mxu0 %v152
    %841 = vmatprep.subr.mxu0 0.0
    %842 = vmatpush1.msra.mxu0 %v153
    %843 = vmatprep.subr.mxu0 0.0
    %844 = vmatpush1.msra.mxu0 %v154
    %845 = vmatprep.subr.mxu0 0.0
    %846 = vmatpush1.msra.mxu0 %v155
    %847 = vmatprep.subr.mxu0 0.0
    %848 = vmatpush1.msra.mxu0 %v156
    %849 = vmatprep.subr.mxu0 0.0
    %850 = vmatpush1.msra.mxu0 %v157
    %851 = vmatprep.subr.mxu0 0.0
    %852 = vmatpush1.msra.mxu0 %v158
    %853 = vmatprep.mubr.f32.mxu0 %v693
    %854 = vmatmul.mubr.f32.gmra.mrb[0].mxu0 %v691
    %v855 = vpop.f32.mrb[0].mxu0
    %v856 = vadd.f32 %v786, %v855
    %v857 = vpop.f32.mrb[0].mxu0
    %858 = vdwg.mxu0
    %859 = vmatprep.subr.mxu0 0.0
    %860 = vmatpush1.msra.mxu0 %v159
    %861 = vmatprep.subr.mxu0 0.0
    %862 = vmatpush1.msra.mxu0 %v160
    %863 = vmatprep.subr.mxu0 0.0
    %864 = vmatpush1.msra.mxu0 %v161
    %865 = vmatprep.subr.mxu0 0.0
    %866 = vmatpush1.msra.mxu0 %v162
    %867 = vmatprep.subr.mxu0 0.0
    %868 = vmatpush1.msra.mxu0 %v163
    %869 = vmatprep.subr.mxu0 0.0
    %870 = vmatpush1.msra.mxu0 %v164
    %871 = vmatprep.subr.mxu0 0.0
    %872 = vmatpush1.msra.mxu0 %v165
    %873 = vmatprep.subr.mxu0 0.0
    %874 = vmatpush1.msra.mxu0 %v166
    %875 = vmatprep.subr.mxu0 0.0
    %876 = vmatpush1.msra.mxu0 %v167
    %877 = vmatprep.subr.mxu0 0.0
    %878 = vmatpush1.msra.mxu0 %v168
    %879 = vmatprep.subr.mxu0 0.0
    %880 = vmatpush1.msra.mxu0 %v169
    %881 = vmatprep.subr.mxu0 0.0
    %882 = vmatpush1.msra.mxu0 %v170
    %883 = vmatprep.subr.mxu0 0.0
    %884 = vmatpush1.msra.mxu0 %v171
    %885 = vmatprep.subr.mxu0 0.0
    %886 = vmatpush1.msra.mxu0 %v172
    %887 = vmatprep.subr.mxu0 0.0
    %888 = vmatpush1.msra.mxu0 %v173
    %889 = vmatprep.subr.mxu0 0.0
    %890 = vmatpush1.msra.mxu0 %v174
    %891 = vmatprep.subr.mxu0 0.0
    %892 = vmatpush1.msra.mxu0 %v175
    %893 = vmatprep.subr.mxu0 0.0
    %894 = vmatpush1.msra.mxu0 %v176
    %895 = vmatprep.subr.mxu0 0.0
    %896 = vmatpush1.msra.mxu0 %v177
    %897 = vmatprep.subr.mxu0 0.0
    %898 = vmatpush1.msra.mxu0 %v178
    %899 = vmatprep.subr.mxu0 0.0
    %900 = vmatpush1.msra.mxu0 %v179
    %901 = vmatprep.subr.mxu0 0.0
    %902 = vmatpush1.msra.mxu0 %v180
    %903 = vmatprep.subr.mxu0 0.0
    %904 = vmatpush1.msra.mxu0 %v181
    %905 = vmatprep.subr.mxu0 0.0
    %906 = vmatpush1.msra.mxu0 %v182
    %907 = vmatprep.subr.mxu0 0.0
    %908 = vmatpush1.msra.mxu0 %v183
    %909 = vmatprep.subr.mxu0 0.0
    %910 = vmatpush1.msra.mxu0 %v184
    %911 = vmatprep.subr.mxu0 0.0
    %912 = vmatpush1.msra.mxu0 %v185
    %913 = vmatprep.subr.mxu0 0.0
    %914 = vmatpush1.msra.mxu0 %v186
    %915 = vmatprep.subr.mxu0 0.0
    %916 = vmatpush1.msra.mxu0 %v187
    %917 = vmatprep.subr.mxu0 0.0
    %918 = vmatpush1.msra.mxu0 %v188
    %919 = vmatprep.subr.mxu0 0.0
    %920 = vmatpush1.msra.mxu0 %v189
    %921 = vmatprep.subr.mxu0 0.0
    %922 = vmatpush1.msra.mxu0 %v190
    %923 = vmatprep.mubr.f32.mxu0 %v709
    %924 = vmatmul.mubr.f32.gmra.mrb[0].mxu0 %v701
    %v925 = vpop.f32.mrb[0].mxu0
    %v926 = vadd.f32 %v856, %v925
    %v927 = vpop.f32.mrb[0].mxu0
    %928 = vdwg.mxu0
    %929 = vmatprep.subr.mxu0 0.0
    %930 = vmatpush1.msra.mxu0 %v191
    %931 = vmatprep.subr.mxu0 0.0
    %932 = vmatpush1.msra.mxu0 %v192
    %933 = vmatprep.subr.mxu0 0.0
    %934 = vmatpush1.msra.mxu0 %v193
    %935 = vmatprep.subr.mxu0 0.0
    %936 = vmatpush1.msra.mxu0 %v194
    %937 = vmatprep.subr.mxu0 0.0
    %938 = vmatpush1.msra.mxu0 %v195
    %939 = vmatprep.subr.mxu0 0.0
    %940 = vmatpush1.msra.mxu0 %v196
    %941 = vmatprep.subr.mxu0 0.0
    %942 = vmatpush1.msra.mxu0 %v197
    %943 = vmatprep.subr.mxu0 0.0
    %944 = vmatpush1.msra.mxu0 %v198
    %945 = vmatprep.subr.mxu0 0.0
    %946 = vmatpush1.msra.mxu0 %v199
    %947 = vmatprep.subr.mxu0 0.0
    %948 = vmatpush1.msra.mxu0 %v200
    %949 = vmatprep.subr.mxu0 0.0
    %950 = vmatpush1.msra.mxu0 %v201
    %951 = vmatprep.subr.mxu0 0.0
    %952 = vmatpush1.msra.mxu0 %v202
    %953 = vmatprep.subr.mxu0 0.0
    %954 = vmatpush1.msra.mxu0 %v203
    %955 = vmatprep.subr.mxu0 0.0
    %956 = vmatpush1.msra.mxu0 %v204
    %957 = vmatprep.subr.mxu0 0.0
    %958 = vmatpush1.msra.mxu0 %v205
    %959 = vmatprep.subr.mxu0 0.0
    %960 = vmatpush1.msra.mxu0 %v206
    %961 = vmatprep.subr.mxu0 0.0
    %962 = vmatpush1.msra.mxu0 %v207
    %963 = vmatprep.subr.mxu0 0.0
    %964 = vmatpush1.msra.mxu0 %v208
    %965 = vmatprep.subr.mxu0 0.0
    %966 = vmatpush1.msra.mxu0 %v209
    %967 = vmatprep.subr.mxu0 0.0
    %968 = vmatpush1.msra.mxu0 %v210
    %969 = vmatprep.subr.mxu0 0.0
    %970 = vmatpush1.msra.mxu0 %v211
    %971 = vmatprep.subr.mxu0 0.0
    %972 = vmatpush1.msra.mxu0 %v212
    %973 = vmatprep.subr.mxu0 0.0
    %974 = vmatpush1.msra.mxu0 %v213
    %975 = vmatprep.subr.mxu0 0.0
    %976 = vmatpush1.msra.mxu0 %v214
    %977 = vmatprep.subr.mxu0 0.0
    %978 = vmatpush1.msra.mxu0 %v215
    %979 = vmatprep.subr.mxu0 0.0
    %980 = vmatpush1.msra.mxu0 %v216
    %981 = vmatprep.subr.mxu0 0.0
    %982 = vmatpush1.msra.mxu0 %v217
    %983 = vmatprep.subr.mxu0 0.0
    %984 = vmatpush1.msra.mxu0 %v218
    %985 = vmatprep.subr.mxu0 0.0
    %986 = vmatpush1.msra.mxu0 %v219
    %987 = vmatprep.subr.mxu0 0.0
    %988 = vmatpush1.msra.mxu0 %v220
    %989 = vmatprep.subr.mxu0 0.0
    %990 = vmatpush1.msra.mxu0 %v221
    %991 = vmatprep.subr.mxu0 0.0
    %992 = vmatpush1.msra.mxu0 %v222
    %993 = vmatprep.mubr.f32.mxu0 %v710
    %994 = vmatmul.mubr.f32.gmra.mrb[0].mxu0 %v708
    %v995 = vpop.f32.mrb[0].mxu0
    %v996 = vadd.f32 %v926, %v995
    %v997 = vpop.f32.mrb[0].mxu0
    %998 = vdwg.mxu0
    %v999 = vld [vmem:[%s4] sm:$0x1]
    %v1001 = vlaneseq
    %v1002 = vshrl.u32 %v1001, 7
    %v1003 = vsub.s32 0, %v1002
    %v1004 = vrot.slane %v999, %v1003
    %v1006 = vadd.f32 %v996, %v1004
    %v1007 = vld [vmem:[#allocation10] sm:$0xff]
    %v1008 = vld [vmem:[#allocation10 + $0x8] sm:$0xff]
    %v1009 = vld [vmem:[#allocation10 + $0x10] sm:$0xff]
    %v1010 = vld [vmem:[#allocation10 + $0x18] sm:$0xff]
    %v1011 = vld [vmem:[#allocation10 + $0x20] sm:$0xff]
    %v1012 = vld [vmem:[#allocation10 + $0x28] sm:$0xff]
    %v1013 = vld [vmem:[#allocation10 + $0x30] sm:$0xff]
    %v1014 = vld [vmem:[#allocation10 + $0x38] sm:$0xff]
    %v1015 = vld [vmem:[#allocation10 + $0x40] sm:$0xff]
    %v1016 = vld [vmem:[#allocation10 + $0x48] sm:$0xff]
    %v1017 = vld [vmem:[#allocation10 + $0x50] sm:$0xff]
    %v1018 = vld [vmem:[#allocation10 + $0x58] sm:$0xff]
    %v1019 = vld [vmem:[#allocation10 + $0x60] sm:$0xff]
    %v1020 = vld [vmem:[#allocation10 + $0x68] sm:$0xff]
    %v1021 = vld [vmem:[#allocation10 + $0x70] sm:$0xff]
    %v1022 = vld [vmem:[#allocation10 + $0x78] sm:$0xff]
    %v1023 = vld [vmem:[#allocation10 + $0x80] sm:$0xff]
    %v1024 = vld [vmem:[#allocation10 + $0x88] sm:$0xff]
    %v1025 = vld [vmem:[#allocation10 + $0x90] sm:$0xff]
    %v1026 = vld [vmem:[#allocation10 + $0x98] sm:$0xff]
    %v1027 = vld [vmem:[#allocation10 + $0xa0] sm:$0xff]
    %v1028 = vld [vmem:[#allocation10 + $0xa8] sm:$0xff]
    %v1029 = vld [vmem:[#allocation10 + $0xb0] sm:$0xff]
    %v1030 = vld [vmem:[#allocation10 + $0xb8] sm:$0xff]
    %v1031 = vld [vmem:[#allocation10 + $0xc0] sm:$0xff]
    %v1032 = vld [vmem:[#allocation10 + $0xc8] sm:$0xff]
    %v1033 = vld [vmem:[#allocation10 + $0xd0] sm:$0xff]
    %v1034 = vld [vmem:[#allocation10 + $0xd8] sm:$0xff]
    %v1035 = vld [vmem:[#allocation10 + $0xe0] sm:$0xff]
    %v1036 = vld [vmem:[#allocation10 + $0xe8] sm:$0xff]
    %v1037 = vld [vmem:[#allocation10 + $0xf0] sm:$0xff]
    %v1038 = vld [vmem:[#allocation10 + $0xf8] sm:$0xff]
    %v1039 = vld [vmem:[#allocation10 + $0x100] sm:$0xff]
    %v1040 = vld [vmem:[#allocation10 + $0x108] sm:$0xff]
    %v1041 = vld [vmem:[#allocation10 + $0x110] sm:$0xff]
    %v1042 = vld [vmem:[#allocation10 + $0x118] sm:$0xff]
    %v1043 = vld [vmem:[#allocation10 + $0x120] sm:$0xff]
    %v1044 = vld [vmem:[#allocation10 + $0x128] sm:$0xff]
    %v1045 = vld [vmem:[#allocation10 + $0x130] sm:$0xff]
    %v1046 = vld [vmem:[#allocation10 + $0x138] sm:$0xff]
    %v1047 = vld [vmem:[#allocation10 + $0x140] sm:$0xff]
    %v1048 = vld [vmem:[#allocation10 + $0x148] sm:$0xff]
    %v1049 = vld [vmem:[#allocation10 + $0x150] sm:$0xff]
    %v1050 = vld [vmem:[#allocation10 + $0x158] sm:$0xff]
    %v1051 = vld [vmem:[#allocation10 + $0x160] sm:$0xff]
    %v1052 = vld [vmem:[#allocation10 + $0x168] sm:$0xff]
    %v1053 = vld [vmem:[#allocation10 + $0x170] sm:$0xff]
    %v1054 = vld [vmem:[#allocation10 + $0x178] sm:$0xff]
    %v1055 = vld [vmem:[#allocation10 + $0x180] sm:$0xff]
    %v1056 = vld [vmem:[#allocation10 + $0x188] sm:$0xff]
    %v1057 = vld [vmem:[#allocation10 + $0x190] sm:$0xff]
    %v1058 = vld [vmem:[#allocation10 + $0x198] sm:$0xff]
    %v1059 = vld [vmem:[#allocation10 + $0x1a0] sm:$0xff]
    %v1060 = vld [vmem:[#allocation10 + $0x1a8] sm:$0xff]
    %v1061 = vld [vmem:[#allocation10 + $0x1b0] sm:$0xff]
    %v1062 = vld [vmem:[#allocation10 + $0x1b8] sm:$0xff]
    %v1063 = vld [vmem:[#allocation10 + $0x1c0] sm:$0xff]
    %v1064 = vld [vmem:[#allocation10 + $0x1c8] sm:$0xff]
    %v1065 = vld [vmem:[#allocation10 + $0x1d0] sm:$0xff]
    %v1066 = vld [vmem:[#allocation10 + $0x1d8] sm:$0xff]
    %v1067 = vld [vmem:[#allocation10 + $0x1e0] sm:$0xff]
    %v1068 = vld [vmem:[#allocation10 + $0x1e8] sm:$0xff]
    %v1069 = vld [vmem:[#allocation10 + $0x1f0] sm:$0xff]
    %v1070 = vld [vmem:[#allocation10 + $0x1f8] sm:$0xff]
    %v1071 = vld [vmem:[#allocation10 + $0x200] sm:$0xff]
    %v1072 = vld [vmem:[#allocation10 + $0x208] sm:$0xff]
    %v1073 = vld [vmem:[#allocation10 + $0x210] sm:$0xff]
    %v1074 = vld [vmem:[#allocation10 + $0x218] sm:$0xff]
    %v1075 = vld [vmem:[#allocation10 + $0x220] sm:$0xff]
    %v1076 = vld [vmem:[#allocation10 + $0x228] sm:$0xff]
    %v1077 = vld [vmem:[#allocation10 + $0x230] sm:$0xff]
    %v1078 = vld [vmem:[#allocation10 + $0x238] sm:$0xff]
    %v1079 = vld [vmem:[#allocation10 + $0x240] sm:$0xff]
    %v1080 = vld [vmem:[#allocation10 + $0x248] sm:$0xff]
    %v1081 = vld [vmem:[#allocation10 + $0x250] sm:$0xff]
    %v1082 = vld [vmem:[#allocation10 + $0x258] sm:$0xff]
    %v1083 = vld [vmem:[#allocation10 + $0x260] sm:$0xff]
    %v1084 = vld [vmem:[#allocation10 + $0x268] sm:$0xff]
    %v1085 = vld [vmem:[#allocation10 + $0x270] sm:$0xff]
    %v1086 = vld [vmem:[#allocation10 + $0x278] sm:$0xff]
    %v1087 = vld [vmem:[#allocation10 + $0x280] sm:$0xff]
    %v1088 = vld [vmem:[#allocation10 + $0x288] sm:$0xff]
    %v1089 = vld [vmem:[#allocation10 + $0x290] sm:$0xff]
    %v1090 = vld [vmem:[#allocation10 + $0x298] sm:$0xff]
    %v1091 = vld [vmem:[#allocation10 + $0x2a0] sm:$0xff]
    %v1092 = vld [vmem:[#allocation10 + $0x2a8] sm:$0xff]
    %v1093 = vld [vmem:[#allocation10 + $0x2b0] sm:$0xff]
    %v1094 = vld [vmem:[#allocation10 + $0x2b8] sm:$0xff]
    %v1095 = vld [vmem:[#allocation10 + $0x2c0] sm:$0xff]
    %v1096 = vld [vmem:[#allocation10 + $0x2c8] sm:$0xff]
    %v1097 = vld [vmem:[#allocation10 + $0x2d0] sm:$0xff]
    %v1098 = vld [vmem:[#allocation10 + $0x2d8] sm:$0xff]
    %v1099 = vld [vmem:[#allocation10 + $0x2e0] sm:$0xff]
    %v1100 = vld [vmem:[#allocation10 + $0x2e8] sm:$0xff]
    %v1101 = vld [vmem:[#allocation10 + $0x2f0] sm:$0xff]
    %v1102 = vld [vmem:[#allocation10 + $0x2f8] sm:$0xff]
    %v1103 = vld [vmem:[#allocation10 + $0x300] sm:$0xff]
    %v1104 = vld [vmem:[#allocation10 + $0x308] sm:$0xff]
    %v1105 = vld [vmem:[#allocation10 + $0x310] sm:$0xff]
    %v1106 = vld [vmem:[#allocation10 + $0x318] sm:$0xff]
    %v1107 = vld [vmem:[#allocation10 + $0x320] sm:$0xff]
    %v1108 = vld [vmem:[#allocation10 + $0x328] sm:$0xff]
    %v1109 = vld [vmem:[#allocation10 + $0x330] sm:$0xff]
    %v1110 = vld [vmem:[#allocation10 + $0x338] sm:$0xff]
    %v1111 = vld [vmem:[#allocation10 + $0x340] sm:$0xff]
    %v1112 = vld [vmem:[#allocation10 + $0x348] sm:$0xff]
    %v1113 = vld [vmem:[#allocation10 + $0x350] sm:$0xff]
    %v1114 = vld [vmem:[#allocation10 + $0x358] sm:$0xff]
    %v1115 = vld [vmem:[#allocation10 + $0x360] sm:$0xff]
    %v1116 = vld [vmem:[#allocation10 + $0x368] sm:$0xff]
    %v1117 = vld [vmem:[#allocation10 + $0x370] sm:$0xff]
    %v1118 = vld [vmem:[#allocation10 + $0x378] sm:$0xff]
    %v1119 = vld [vmem:[#allocation10 + $0x380] sm:$0xff]
    %v1120 = vld [vmem:[#allocation10 + $0x388] sm:$0xff]
    %v1121 = vld [vmem:[#allocation10 + $0x390] sm:$0xff]
    %v1122 = vld [vmem:[#allocation10 + $0x398] sm:$0xff]
    %v1123 = vld [vmem:[#allocation10 + $0x3a0] sm:$0xff]
    %v1124 = vld [vmem:[#allocation10 + $0x3a8] sm:$0xff]
    %v1125 = vld [vmem:[#allocation10 + $0x3b0] sm:$0xff]
    %v1126 = vld [vmem:[#allocation10 + $0x3b8] sm:$0xff]
    %v1127 = vld [vmem:[#allocation10 + $0x3c0] sm:$0xff]
    %v1128 = vld [vmem:[#allocation10 + $0x3c8] sm:$0xff]
    %v1129 = vld [vmem:[#allocation10 + $0x3d0] sm:$0xff]
    %v1130 = vld [vmem:[#allocation10 + $0x3d8] sm:$0xff]
    %v1131 = vld [vmem:[#allocation10 + $0x3e0] sm:$0xff]
    %v1132 = vld [vmem:[#allocation10 + $0x3e8] sm:$0xff]
    %v1133 = vld [vmem:[#allocation10 + $0x3f0] sm:$0xff]
    %v1134 = vld [vmem:[#allocation10 + $0x3f8] sm:$0xff]
    %v1135 = vld [vmem:[%s6] sm:$0xff]
    %v1137 = vlaneseq
    %v1138 = vshrl.u32 %v1137, 7
    %v1139 = vsub.s32 0, %v1138
    %v1140 = vrot.slane %v1135, %v1139
    %v1141 = vlaneseq
    %v1142 = vshrl.u32 %v1141, 7
    %v1143 = vsub.s32 1, %v1142
    %v1144 = vrot.slane %v1135, %v1143
    %v1145 = vlaneseq
    %v1146 = vshrl.u32 %v1145, 7
    %v1147 = vsub.s32 2, %v1146
    %v1148 = vrot.slane %v1135, %v1147
    %v1149 = vlaneseq
    %v1150 = vshrl.u32 %v1149, 7
    %v1151 = vsub.s32 3, %v1150
    %v1152 = vrot.slane %v1135, %v1151
    %v1153 = vlaneseq
    %v1154 = vshrl.u32 %v1153, 7
    %v1155 = vsub.s32 4, %v1154
    %v1156 = vrot.slane %v1135, %v1155
    %v1157 = vlaneseq
    %v1158 = vshrl.u32 %v1157, 7
    %v1159 = vsub.s32 5, %v1158
    %v1160 = vrot.slane %v1135, %v1159
    %v1161 = vlaneseq
    %v1162 = vshrl.u32 %v1161, 7
    %v1163 = vsub.s32 6, %v1162
    %v1164 = vrot.slane %v1135, %v1163
    %v1165 = vlaneseq
    %v1166 = vshrl.u32 %v1165, 7
    %v1167 = vsub.s32 7, %v1166
    %v1168 = vrot.slane %v1135, %v1167
    %1177 = vmatprep.subr.mxu0 %v1008
    %1178 = vmatpush1.msra.mxu0 %v1007
    %1179 = vmatprep.subr.mxu0 %v1016
    %1180 = vmatpush1.msra.mxu0 %v1015
    %1181 = vmatprep.subr.mxu0 %v1024
    %1182 = vmatpush1.msra.mxu0 %v1023
    %1183 = vmatprep.subr.mxu0 %v1032
    %1184 = vmatpush1.msra.mxu0 %v1031
    %1185 = vmatprep.subr.mxu0 %v1040
    %1186 = vmatpush1.msra.mxu0 %v1039
    %1187 = vmatprep.subr.mxu0 %v1048
    %1188 = vmatpush1.msra.mxu0 %v1047
    %1189 = vmatprep.subr.mxu0 %v1056
    %1190 = vmatpush1.msra.mxu0 %v1055
    %1191 = vmatprep.subr.mxu0 %v1064
    %1192 = vmatpush1.msra.mxu0 %v1063
    %1193 = vmatprep.subr.mxu0 %v1072
    %1194 = vmatpush1.msra.mxu0 %v1071
    %1195 = vmatprep.subr.mxu0 %v1080
    %1196 = vmatpush1.msra.mxu0 %v1079
    %1197 = vmatprep.subr.mxu0 %v1088
    %1198 = vmatpush1.msra.mxu0 %v1087
    %1199 = vmatprep.subr.mxu0 %v1096
    %1200 = vmatpush1.msra.mxu0 %v1095
    %1201 = vmatprep.subr.mxu0 %v1104
    %1202 = vmatpush1.msra.mxu0 %v1103
    %1203 = vmatprep.subr.mxu0 %v1112
    %1204 = vmatpush1.msra.mxu0 %v1111
    %1205 = vmatprep.subr.mxu0 %v1120
    %1206 = vmatpush1.msra.mxu0 %v1119
    %1207 = vmatprep.subr.mxu0 %v1128
    %1208 = vmatpush1.msra.mxu0 %v1127
    %1209 = vmatprep.subr.mxu0 0.0
    %1210 = vmatpush1.msra.mxu0 0.0
    %1211 = vmatprep.subr.mxu0 0.0
    %1212 = vmatpush1.msra.mxu0 0.0
    %1213 = vmatprep.subr.mxu0 0.0
    %1214 = vmatpush1.msra.mxu0 0.0
    %1215 = vmatprep.subr.mxu0 0.0
    %1216 = vmatpush1.msra.mxu0 0.0
    %1217 = vmatprep.subr.mxu0 0.0
    %1218 = vmatpush1.msra.mxu0 0.0
    %1219 = vmatprep.subr.mxu0 0.0
    %1220 = vmatpush1.msra.mxu0 0.0
    %1221 = vmatprep.subr.mxu0 0.0
    %1222 = vmatpush1.msra.mxu0 0.0
    %1223 = vmatprep.subr.mxu0 0.0
    %1224 = vmatpush1.msra.mxu0 0.0
    %1225 = vmatprep.subr.mxu0 0.0
    %1226 = vmatpush1.msra.mxu0 0.0
    %1227 = vmatprep.subr.mxu0 0.0
    %1228 = vmatpush1.msra.mxu0 0.0
    %1229 = vmatprep.subr.mxu0 0.0
    %1230 = vmatpush1.msra.mxu0 0.0
    %1231 = vmatprep.subr.mxu0 0.0
    %1232 = vmatpush1.msra.mxu0 0.0
    %1233 = vmatprep.subr.mxu0 0.0
    %1234 = vmatpush1.msra.mxu0 0.0
    %1235 = vmatprep.subr.mxu0 0.0
    %1236 = vmatpush1.msra.mxu0 0.0
    %1237 = vmatprep.subr.mxu0 0.0
    %1238 = vmatpush1.msra.mxu0 0.0
    %1239 = vmatprep.subr.mxu0 0.0
    %1240 = vmatpush1.msra.mxu0 0.0
    %1241 = vmatprep.mubr.f32.mxu0 0.0
    %1242 = vmatmul.mubr.f32.gmra.mrb[0].mxu0 %v1006
    %v1243 = vpop.f32.mrb[0].mxu0
    %v1244 = vadd.f32 %v1140, %v1243
    %v1245 = vpop.f32.mrb[0].mxu0
    %v1246 = vadd.f32 %v1144, %v1245
    %1247 = vdwg.mxu0
    %1248 = vmatprep.subr.mxu0 %v1010
    %1249 = vmatpush1.msra.mxu0 %v1009
    %1250 = vmatprep.subr.mxu0 %v1018
    %1251 = vmatpush1.msra.mxu0 %v1017
    %1252 = vmatprep.subr.mxu0 %v1026
    %1253 = vmatpush1.msra.mxu0 %v1025
    %1254 = vmatprep.subr.mxu0 %v1034
    %1255 = vmatpush1.msra.mxu0 %v1033
    %1256 = vmatprep.subr.mxu0 %v1042
    %1257 = vmatpush1.msra.mxu0 %v1041
    %1258 = vmatprep.subr.mxu0 %v1050
    %1259 = vmatpush1.msra.mxu0 %v1049
    %1260 = vmatprep.subr.mxu0 %v1058
    %1261 = vmatpush1.msra.mxu0 %v1057
    %1262 = vmatprep.subr.mxu0 %v1066
    %1263 = vmatpush1.msra.mxu0 %v1065
    %1264 = vmatprep.subr.mxu0 %v1074
    %1265 = vmatpush1.msra.mxu0 %v1073
    %1266 = vmatprep.subr.mxu0 %v1082
    %1267 = vmatpush1.msra.mxu0 %v1081
    %1268 = vmatprep.subr.mxu0 %v1090
    %1269 = vmatpush1.msra.mxu0 %v1089
    %1270 = vmatprep.subr.mxu0 %v1098
    %1271 = vmatpush1.msra.mxu0 %v1097
    %1272 = vmatprep.subr.mxu0 %v1106
    %1273 = vmatpush1.msra.mxu0 %v1105
    %1274 = vmatprep.subr.mxu0 %v1114
    %1275 = vmatpush1.msra.mxu0 %v1113
    %1276 = vmatprep.subr.mxu0 %v1122
    %1277 = vmatpush1.msra.mxu0 %v1121
    %1278 = vmatprep.subr.mxu0 %v1130
    %1279 = vmatpush1.msra.mxu0 %v1129
    %1280 = vmatprep.subr.mxu0 0.0
    %1281 = vmatpush1.msra.mxu0 0.0
    %1282 = vmatprep.subr.mxu0 0.0
    %1283 = vmatpush1.msra.mxu0 0.0
    %1284 = vmatprep.subr.mxu0 0.0
    %1285 = vmatpush1.msra.mxu0 0.0
    %1286 = vmatprep.subr.mxu0 0.0
    %1287 = vmatpush1.msra.mxu0 0.0
    %1288 = vmatprep.subr.mxu0 0.0
    %1289 = vmatpush1.msra.mxu0 0.0
    %1290 = vmatprep.subr.mxu0 0.0
    %1291 = vmatpush1.msra.mxu0 0.0
    %1292 = vmatprep.subr.mxu0 0.0
    %1293 = vmatpush1.msra.mxu0 0.0
    %1294 = vmatprep.subr.mxu0 0.0
    %1295 = vmatpush1.msra.mxu0 0.0
    %1296 = vmatprep.subr.mxu0 0.0
    %1297 = vmatpush1.msra.mxu0 0.0
    %1298 = vmatprep.subr.mxu0 0.0
    %1299 = vmatpush1.msra.mxu0 0.0
    %1300 = vmatprep.subr.mxu0 0.0
    %1301 = vmatpush1.msra.mxu0 0.0
    %1302 = vmatprep.subr.mxu0 0.0
    %1303 = vmatpush1.msra.mxu0 0.0
    %1304 = vmatprep.subr.mxu0 0.0
    %1305 = vmatpush1.msra.mxu0 0.0
    %1306 = vmatprep.subr.mxu0 0.0
    %1307 = vmatpush1.msra.mxu0 0.0
    %1308 = vmatprep.subr.mxu0 0.0
    %1309 = vmatpush1.msra.mxu0 0.0
    %1310 = vmatprep.subr.mxu0 0.0
    %1311 = vmatpush1.msra.mxu0 0.0
    %1312 = vmatprep.mubr.f32.mxu0 0.0
    %1313 = vmatmul.mubr.f32.gmra.mrb[0].mxu0 %v1006
    %v1314 = vpop.f32.mrb[0].mxu0
    %v1315 = vadd.f32 %v1148, %v1314
    %v1316 = vpop.f32.mrb[0].mxu0
    %v1317 = vadd.f32 %v1152, %v1316
    %1318 = vdwg.mxu0
    %1319 = vmatprep.subr.mxu0 %v1012
    %1320 = vmatpush1.msra.mxu0 %v1011
    %1321 = vmatprep.subr.mxu0 %v1020
    %1322 = vmatpush1.msra.mxu0 %v1019
    %1323 = vmatprep.subr.mxu0 %v1028
    %1324 = vmatpush1.msra.mxu0 %v1027
    %1325 = vmatprep.subr.mxu0 %v1036
    %1326 = vmatpush1.msra.mxu0 %v1035
    %1327 = vmatprep.subr.mxu0 %v1044
    %1328 = vmatpush1.msra.mxu0 %v1043
    %1329 = vmatprep.subr.mxu0 %v1052
    %1330 = vmatpush1.msra.mxu0 %v1051
    %1331 = vmatprep.subr.mxu0 %v1060
    %1332 = vmatpush1.msra.mxu0 %v1059
    %1333 = vmatprep.subr.mxu0 %v1068
    %1334 = vmatpush1.msra.mxu0 %v1067
    %1335 = vmatprep.subr.mxu0 %v1076
    %1336 = vmatpush1.msra.mxu0 %v1075
    %1337 = vmatprep.subr.mxu0 %v1084
    %1338 = vmatpush1.msra.mxu0 %v1083
    %1339 = vmatprep.subr.mxu0 %v1092
    %1340 = vmatpush1.msra.mxu0 %v1091
    %1341 = vmatprep.subr.mxu0 %v1100
    %1342 = vmatpush1.msra.mxu0 %v1099
    %1343 = vmatprep.subr.mxu0 %v1108
    %1344 = vmatpush1.msra.mxu0 %v1107
    %1345 = vmatprep.subr.mxu0 %v1116
    %1346 = vmatpush1.msra.mxu0 %v1115
    %1347 = vmatprep.subr.mxu0 %v1124
    %1348 = vmatpush1.msra.mxu0 %v1123
    %1349 = vmatprep.subr.mxu0 %v1132
    %1350 = vmatpush1.msra.mxu0 %v1131
    %1351 = vmatprep.subr.mxu0 0.0
    %1352 = vmatpush1.msra.mxu0 0.0
    %1353 = vmatprep.subr.mxu0 0.0
    %1354 = vmatpush1.msra.mxu0 0.0
    %1355 = vmatprep.subr.mxu0 0.0
    %1356 = vmatpush1.msra.mxu0 0.0
    %1357 = vmatprep.subr.mxu0 0.0
    %1358 = vmatpush1.msra.mxu0 0.0
    %1359 = vmatprep.subr.mxu0 0.0
    %1360 = vmatpush1.msra.mxu0 0.0
    %1361 = vmatprep.subr.mxu0 0.0
    %1362 = vmatpush1.msra.mxu0 0.0
    %1363 = vmatprep.subr.mxu0 0.0
    %1364 = vmatpush1.msra.mxu0 0.0
    %1365 = vmatprep.subr.mxu0 0.0
    %1366 = vmatpush1.msra.mxu0 0.0
    %1367 = vmatprep.subr.mxu0 0.0
    %1368 = vmatpush1.msra.mxu0 0.0
    %1369 = vmatprep.subr.mxu0 0.0
    %1370 = vmatpush1.msra.mxu0 0.0
    %1371 = vmatprep.subr.mxu0 0.0
    %1372 = vmatpush1.msra.mxu0 0.0
    %1373 = vmatprep.subr.mxu0 0.0
    %1374 = vmatpush1.msra.mxu0 0.0
    %1375 = vmatprep.subr.mxu0 0.0
    %1376 = vmatpush1.msra.mxu0 0.0
    %1377 = vmatprep.subr.mxu0 0.0
    %1378 = vmatpush1.msra.mxu0 0.0
    %1379 = vmatprep.subr.mxu0 0.0
    %1380 = vmatpush1.msra.mxu0 0.0
    %1381 = vmatprep.subr.mxu0 0.0
    %1382 = vmatpush1.msra.mxu0 0.0
    %1383 = vmatprep.mubr.f32.mxu0 0.0
    %1384 = vmatmul.mubr.f32.gmra.mrb[0].mxu0 %v1006
    %v1385 = vpop.f32.mrb[0].mxu0
    %v1386 = vadd.f32 %v1156, %v1385
    %v1387 = vpop.f32.mrb[0].mxu0
    %v1388 = vadd.f32 %v1160, %v1387
    %1389 = vdwg.mxu0
    %1390 = vmatprep.subr.mxu0 %v1014
    %1391 = vmatpush1.msra.mxu0 %v1013
    %1392 = vmatprep.subr.mxu0 %v1022
    %1393 = vmatpush1.msra.mxu0 %v1021
    %1394 = vmatprep.subr.mxu0 %v1030
    %1395 = vmatpush1.msra.mxu0 %v1029
    %1396 = vmatprep.subr.mxu0 %v1038
    %1397 = vmatpush1.msra.mxu0 %v1037
    %1398 = vmatprep.subr.mxu0 %v1046
    %1399 = vmatpush1.msra.mxu0 %v1045
    %1400 = vmatprep.subr.mxu0 %v1054
    %1401 = vmatpush1.msra.mxu0 %v1053
    %1402 = vmatprep.subr.mxu0 %v1062
    %1403 = vmatpush1.msra.mxu0 %v1061
    %1404 = vmatprep.subr.mxu0 %v1070
    %1405 = vmatpush1.msra.mxu0 %v1069
    %1406 = vmatprep.subr.mxu0 %v1078
    %1407 = vmatpush1.msra.mxu0 %v1077
    %1408 = vmatprep.subr.mxu0 %v1086
    %1409 = vmatpush1.msra.mxu0 %v1085
    %1410 = vmatprep.subr.mxu0 %v1094
    %1411 = vmatpush1.msra.mxu0 %v1093
    %1412 = vmatprep.subr.mxu0 %v1102
    %1413 = vmatpush1.msra.mxu0 %v1101
    %1414 = vmatprep.subr.mxu0 %v1110
    %1415 = vmatpush1.msra.mxu0 %v1109
    %1416 = vmatprep.subr.mxu0 %v1118
    %1417 = vmatpush1.msra.mxu0 %v1117
    %1418 = vmatprep.subr.mxu0 %v1126
    %1419 = vmatpush1.msra.mxu0 %v1125
    %1420 = vmatprep.subr.mxu0 %v1134
    %1421 = vmatpush1.msra.mxu0 %v1133
    %1422 = vmatprep.subr.mxu0 0.0
    %1423 = vmatpush1.msra.mxu0 0.0
    %1424 = vmatprep.subr.mxu0 0.0
    %1425 = vmatpush1.msra.mxu0 0.0
    %1426 = vmatprep.subr.mxu0 0.0
    %1427 = vmatpush1.msra.mxu0 0.0
    %1428 = vmatprep.subr.mxu0 0.0
    %1429 = vmatpush1.msra.mxu0 0.0
    %1430 = vmatprep.subr.mxu0 0.0
    %1431 = vmatpush1.msra.mxu0 0.0
    %1432 = vmatprep.subr.mxu0 0.0
    %1433 = vmatpush1.msra.mxu0 0.0
    %1434 = vmatprep.subr.mxu0 0.0
    %1435 = vmatpush1.msra.mxu0 0.0
    %1436 = vmatprep.subr.mxu0 0.0
    %1437 = vmatpush1.msra.mxu0 0.0
    %1438 = vmatprep.subr.mxu0 0.0
    %1439 = vmatpush1.msra.mxu0 0.0
    %1440 = vmatprep.subr.mxu0 0.0
    %1441 = vmatpush1.msra.mxu0 0.0
    %1442 = vmatprep.subr.mxu0 0.0
    %1443 = vmatpush1.msra.mxu0 0.0
    %1444 = vmatprep.subr.mxu0 0.0
    %1445 = vmatpush1.msra.mxu0 0.0
    %1446 = vmatprep.subr.mxu0 0.0
    %1447 = vmatpush1.msra.mxu0 0.0
    %1448 = vmatprep.subr.mxu0 0.0
    %1449 = vmatpush1.msra.mxu0 0.0
    %1450 = vmatprep.subr.mxu0 0.0
    %1451 = vmatpush1.msra.mxu0 0.0
    %1452 = vmatprep.subr.mxu0 0.0
    %1453 = vmatpush1.msra.mxu0 0.0
    %1454 = vmatprep.mubr.f32.mxu0 0.0
    %1455 = vmatmul.mubr.f32.gmra.mrb[0].mxu0 %v1006
    %v1456 = vpop.f32.mrb[0].mxu0
    %v1457 = vadd.f32 %v1164, %v1456
    %v1458 = vpop.f32.mrb[0].mxu0
    %v1459 = vadd.f32 %v1168, %v1458
    %1460 = vdwg.mxu0
    %v1469 = vcombine.low %v1244, %v1246
    %v1470 = vcombine.low %v1315, %v1317
    %v1472 = vunpack.c.l.s4 1983009808
    %v1473 = vunpack.c.0.s8 %v1472
    %v1474 = vlaneseq
    %v1475 = vshrl.u32 %v1474, 7
    %v1476 = vsub.s32 %v1473, %v1475
    %v1477 = vrot.slane %v1469, %v1476
    %v1479 = vunpack.c.l.s4 1983009808
    %v1480 = vunpack.c.0.s8 %v1479
    %v1481 = vlaneseq
    %v1482 = vshrl.u32 %v1481, 7
    %v1483 = vsub.s32 %v1480, %v1482
    %v1484 = vrot.slane %v1470, %v1483
    %v1485 = vcombine.low %v1477, %v1484
    %v1486 = vcombine.low %v1386, %v1388
    %v1487 = vcombine.low %v1457, %v1459
    %v1489 = vunpack.c.l.s4 1983009808
    %v1490 = vunpack.c.0.s8 %v1489
    %v1491 = vlaneseq
    %v1492 = vshrl.u32 %v1491, 7
    %v1493 = vsub.s32 %v1490, %v1492
    %v1494 = vrot.slane %v1486, %v1493
    %v1496 = vunpack.c.l.s4 1983009808
    %v1497 = vunpack.c.0.s8 %v1496
    %v1498 = vlaneseq
    %v1499 = vshrl.u32 %v1498, 7
    %v1500 = vsub.s32 %v1497, %v1499
    %v1501 = vrot.slane %v1487, %v1500
    %v1502 = vcombine.low %v1494, %v1501
    %1505 = vst [vmem:[#allocation11] sm:$0xff] %v1485
    %1506 = vst [vmem:[#allocation11 + $0x8] sm:$0xff] %v1502
    // Predicated region
    $region50: #{tpu_custom_call.1} parent=1 // pred_check
      _
    $region51: #{tpu_custom_call.1} parent=1 // pred_check_branch
      %1508 = sbr.rel (0) target = $region53
    $region52: #{tpu_custom_call.1} parent=1 // pred_region
      %s1510 = ssub.s32 256, 256
      %1511 = vsyncadd [#allocation4], %s1510
      %s1513 = sshll.u32 [#allocation11], 4
      %s1514 = int_to_ptr.vmem [resolvable:$true] %s1513
      %1516 = dma.vmem_to_hbm [thread:$0]  %s1514, 256, %s7, [#allocation4]
    $region53: #{tpu_custom_call.1} parent=1 // pred_fallthru
      _
    // Predicated region
    $region54: #{tpu_custom_call.1} parent=1 // pred_check
      _
    $region55: #{tpu_custom_call.1} parent=1 // pred_check_branch
      %1518 = sbr.rel (0) target = $region57
    $region56: #{tpu_custom_call.1} parent=1 // pred_region
      %1519 = dma.done [#allocation4], 256
    $region57: #{tpu_custom_call.1} parent=1 // pred_fallthru
      _
    %1520 = vsyncpa [#allocation3], 1
    %1521 = vsyncpa [#allocation6], 1
    %1522 = vsyncpa [#allocation9], 1
    %1523 = vsyncpa [#allocation4], 1

</llo_original>
